<compile_context>
chip_gen: v6e
topology: v6e:2x2x1
jax: 0.10.0
libtpu: 0.0.40
codegen_flags: <defaults>
</compile_context>

<pallas_src>
import math
from functools import partial

import jax
import jax.numpy as jnp
from jax.experimental import pallas as pl
from jax.experimental.pallas import tpu as pltpu

# ----- model hyper-parameters (small but shape-consistent with the module) -----
K_JOINTS = 65
K_AXES = 3
IN_DIM = K_JOINTS * K_AXES                   # 195  (nn.Linear(65*3, planes))
IN_PAD = ((IN_DIM + 127) // 128) * 128       # 256  (lane-aligned, zero padded)
PLANES = 128                                 # d_model (divisible by nhead=8)
NHEAD = 8
HEAD_DIM = PLANES // NHEAD                   # 16
DFF = PLANES                                 # dim_feedforward = planes
N_CLASSES = 16
OUT_PAD = 128                                # lane-dense logits slab
N_LAYERS = 2
LN_EPS = 1e-5
NEG_INF = -1e30

assert DFF == PLANES, "vector packing assumes dim_feedforward == planes"


def _layer_norm(x, g, b):
    mu = jnp.mean(x, axis=-1, keepdims=True)
    var = jnp.mean((x - mu) ** 2, axis=-1, keepdims=True)
    return (x - mu) * jax.lax.rsqrt(var + LN_EPS) * g + b


# --------------------------- fully fused forward kernel ---------------------------
def _fused_kernel(s_valid, s_pad,
                  x_ref, ew_ref, add_ref, wqkv_ref, wo_ref, w1_ref, w2_ref,
                  vecs_ref, hw_ref, hv_ref, o_ref):
    # embed + (cls token | PE + embed bias | zero pad) in a single matmul + add
    h = jnp.dot(x_ref[0], ew_ref[...], preferred_element_type=jnp.float32) + add_ref[...]

    # static mask: padded key columns get -inf before softmax
    key_pos = jax.lax.broadcasted_iota(jnp.int32, (s_pad, s_pad), 1)
    kmask = jnp.where(key_pos < s_valid, 0.0, NEG_INF).astype(jnp.float32)

    scale = 1.0 / math.sqrt(HEAD_DIM)
    for l in range(N_LAYERS):                        # unrolled (2 layers)
        wqkv = wqkv_ref[l]                           # (D, 3D)
        wo = wo_ref[l]                               # (D, D)
        w1 = w1_ref[l]                               # (D, DFF)
        w2 = w2_ref[l]                               # (DFF, D)
        vecs = vecs_ref[l]                           # (16, D) packed vectors
        bq, bk, bv = vecs[0:1], vecs[1:2], vecs[2:3]
        bout = vecs[3:4]
        ln1g, ln1b = vecs[4:5], vecs[5:6]
        b1, b2 = vecs[6:7], vecs[7:8]
        ln2g, ln2b = vecs[8:9], vecs[9:10]

        # QKV projection: one (S,D)@(D,3D) matmul, 128-lane aligned slices
        qkv = jnp.dot(h, wqkv, preferred_element_type=jnp.float32)
        q = (qkv[:, 0:PLANES] + bq) * scale
        k = qkv[:, PLANES:2 * PLANES] + bk
        v = qkv[:, 2 * PLANES:3 * PLANES] + bv

        # multi-head attention; head outputs stay in vregs and are concatenated
        # into a lane-dense (S, D) slab (no scratch, no masked partial stores)
        heads = []
        for hh in range(NHEAD):
            lo = hh * HEAD_DIM
            qh = q[:, lo:lo + HEAD_DIM]
            kh = k[:, lo:lo + HEAD_DIM]
            vh = v[:, lo:lo + HEAD_DIM]
            s = jax.lax.dot_general(qh, kh, (((1,), (1,)), ((), ())),
                                    preferred_element_type=jnp.float32)   # (S, S)
            s = s + kmask
            s = s - jnp.max(s, axis=-1, keepdims=True)
            p = jnp.exp(s)
            p = p / jnp.sum(p, axis=-1, keepdims=True)
            heads.append(jnp.dot(p, vh, preferred_element_type=jnp.float32))
        ctx = jnp.concatenate(heads, axis=-1)                             # (S, D)

        attn = jnp.dot(ctx, wo, preferred_element_type=jnp.float32) + bout
        # dropout is identity in eval mode
        h = _layer_norm(h + attn, ln1g, ln1b)

        h1 = jnp.maximum(
            jnp.dot(h, w1, preferred_element_type=jnp.float32) + b1, 0.0)
        ff = jnp.dot(h1, w2, preferred_element_type=jnp.float32) + b2
        h = _layer_norm(h + ff, ln2g, ln2b)

    # classification head on the cls token (sequence position 0)
    cls = h[0:1, :]
    cn = _layer_norm(cls, hv_ref[0:1], hv_ref[1:2])
    o_ref[0] = jnp.dot(cn, hw_ref[...], preferred_element_type=jnp.float32) + hv_ref[2:3]


# ------------------------------- host-side glue --------------------------------
def positional_encoding(seq_len, dim):
    position = jnp.arange(seq_len, dtype=jnp.float32)[:, None]
    div_term = jnp.exp(jnp.arange(0, dim, 2, dtype=jnp.float32)
                       * (-jnp.log(10000.0) / dim))
    ang = position * div_term                                       # (t, dim/2)
    pe = jnp.zeros((seq_len, dim), jnp.float32)
    pe = pe.at[:, 0::2].set(jnp.sin(ang))
    pe = pe.at[:, 1::2].set(jnp.cos(ang))
    return pe


def init_params(key):
    def nrm(k, shape, scale=0.05):
        return scale * jax.random.normal(k, shape, dtype=jnp.float32)

    keys = jax.random.split(key, 3 + 8 * N_LAYERS + 2)
    p = {}
    embed_w = nrm(keys[0], (IN_DIM, PLANES))           # Linear weight, pre-transposed
    p["embed_w_pad"] = jnp.zeros((IN_PAD, PLANES), jnp.float32).at[:IN_DIM].set(embed_w)
    p["embed_b"] = nrm(keys[1], (PLANES,), 0.02)
    p["cls_token"] = jax.random.normal(keys[2], (1, PLANES), dtype=jnp.float32)

    wqkv, wo, w1, w2, vecs = [], [], [], [], []
    ki = 3
    for _ in range(N_LAYERS):
        wqkv.append(nrm(keys[ki + 0], (PLANES, 3 * PLANES)))      # in_proj W^T
        bin_ = nrm(keys[ki + 1], (3 * PLANES,), 0.02)             # in_proj b
        wo.append(nrm(keys[ki + 2], (PLANES, PLANES)))            # out_proj W^T
        bout = nrm(keys[ki + 3], (PLANES,), 0.02)                 # out_proj b
        w1.append(nrm(keys[ki + 4], (PLANES, DFF)))               # linear1 W^T
        b1 = nrm(keys[ki + 5], (DFF,), 0.02)                      # linear1 b
        w2.append(nrm(keys[ki + 6], (DFF, PLANES)))               # linear2 W^T
        b2 = nrm(keys[ki + 7], (PLANES,), 0.02)                   # linear2 b
        v = jnp.zeros((16, PLANES), jnp.float32)
        v = v.at[0].set(bin_[0:PLANES])                           # bq
        v = v.at[1].set(bin_[PLANES:2 * PLANES])                  # bk
        v = v.at[2].set(bin_[2 * PLANES:])                        # bv
        v = v.at[3].set(bout)
        v = v.at[4].set(jnp.ones((PLANES,), jnp.float32))         # norm1 gamma
        v = v.at[5].set(jnp.zeros((PLANES,), jnp.float32))        # norm1 beta
        v = v.at[6].set(b1)
        v = v.at[7].set(b2)
        v = v.at[8].set(jnp.ones((PLANES,), jnp.float32))         # norm2 gamma
        v = v.at[9].set(jnp.zeros((PLANES,), jnp.float32))        # norm2 beta
        vecs.append(v)
        ki += 8
    p["wqkv"] = jnp.stack(wqkv)                                   # (L, D, 3D)
    p["wo"] = jnp.stack(wo)                                       # (L, D, D)
    p["w1"] = jnp.stack(w1)                                       # (L, D, DFF)
    p["w2"] = jnp.stack(w2)                                       # (L, DFF, D)
    p["vecs"] = jnp.stack(vecs)                                   # (L, 16, D)

    head_w = nrm(keys[ki], (PLANES, N_CLASSES))                   # to_out Linear W^T
    p["head_w_pad"] = jnp.zeros((PLANES, OUT_PAD), jnp.float32).at[:, :N_CLASSES].set(head_w)
    head_bias = nrm(keys[ki + 1], (N_CLASSES,), 0.02)
    hv = jnp.zeros((8, PLANES), jnp.float32)
    hv = hv.at[0].set(jnp.ones((PLANES,), jnp.float32))           # to_out LayerNorm gamma
    hv = hv.at[1].set(jnp.zeros((PLANES,), jnp.float32))          # to_out LayerNorm beta
    hv = hv.at[2, :N_CLASSES].set(head_bias)                      # to_out Linear bias (padded)
    p["head_v"] = hv
    return p


def skeleton_tr_forward(x, p):
    b, t, kk, aa = x.shape
    s = t + 1                                   # +1 for cls token
    s_pad = max(8, ((s + 7) // 8) * 8)          # sublane-aligned sequence length

    # 'b t k a -> b t (k a)', zero-padded to 256 lanes, shifted by one row so row 0
    # is the (zero) cls slot and trailing rows are the sequence padding.
    x2d = x.reshape(b, t, kk * aa).astype(jnp.float32)
    x_pad = jnp.zeros((b, s_pad, IN_PAD), jnp.float32)
    x_pad = x_pad.at[:, 1:1 + t, :kk * aa].set(x2d)

    # additive slab: row 0 = cls token, rows 1..t = PE + embed bias, rest = 0
    pe = positional_encoding(t, PLANES)
    addvec = jnp.zeros((s_pad, PLANES), jnp.float32)
    addvec = addvec.at[0, :].set(p["cls_token"][0])
    addvec = addvec.at[1:1 + t, :].set(pe + p["embed_b"])          # PE add (dropout = identity)

    kernel = partial(_fused_kernel, s, s_pad)
    full2 = lambda arr: pl.BlockSpec(arr.shape, lambda bb: (0, 0))
    full3 = lambda arr: pl.BlockSpec(arr.shape, lambda bb: (0, 0, 0))

    logits_pad = pl.pallas_call(
        kernel,
        out_shape=jax.ShapeDtypeStruct((b, 1, OUT_PAD), jnp.float32),
        grid=(b,),
        in_specs=[pl.BlockSpec((1, s_pad, IN_PAD), lambda bb: (bb, 0, 0)),
                  full2(p["embed_w_pad"]),
                  full2(addvec),
                  full3(p["wqkv"]),
                  full3(p["wo"]),
                  full3(p["w1"]),
                  full3(p["w2"]),
                  full3(p["vecs"]),
                  full2(p["head_w_pad"]),
                  full2(p["head_v"])],
        out_specs=pl.BlockSpec((1, 1, OUT_PAD), lambda bb: (bb, 0, 0)),
        compiler_params=pltpu.CompilerParams(dimension_semantics=("parallel",)),
    )(x_pad, p["embed_w_pad"], addvec, p["wqkv"], p["wo"], p["w1"], p["w2"],
      p["vecs"], p["head_w_pad"], p["head_v"])

    # TODO(synk): loss branch (CrossEntropy / CTCL) not implemented; forward returns logits only.
    return logits_pad[:, 0, :N_CLASSES]


if __name__ == "__main__":
    key = jax.random.PRNGKey(0)
    kx, kp = jax.random.split(key)
    x = jax.random.normal(kx, (2, 8, K_JOINTS, K_AXES), dtype=jnp.float32)
    params = init_params(kp)
    y = skeleton_tr_forward(x, params)
    jax.block_until_ready(y)
    assert y.shape == (2, N_CLASSES), y.shape
    print("KERNEL_OK")
</pallas_src>

<mosaic_0001>
module attributes {stable_mosaic.version = 11 : i64} {
  func.func @_fused_kernel(%arg0: i32, %arg1: memref<1x16x256xf32, #tpu.memory_space<vmem>>, %arg2: memref<256x128xf32, #tpu.memory_space<vmem>>, %arg3: memref<16x128xf32, #tpu.memory_space<vmem>>, %arg4: memref<2x128x384xf32, #tpu.memory_space<vmem>>, %arg5: memref<2x128x128xf32, #tpu.memory_space<vmem>>, %arg6: memref<2x128x128xf32, #tpu.memory_space<vmem>>, %arg7: memref<2x128x128xf32, #tpu.memory_space<vmem>>, %arg8: memref<2x16x128xf32, #tpu.memory_space<vmem>>, %arg9: memref<128x128xf32, #tpu.memory_space<vmem>>, %arg10: memref<8x128xf32, #tpu.memory_space<vmem>>, %arg11: memref<1x1x128xf32, #tpu.memory_space<vmem>>) attributes {dimension_semantics = [#tpu.dimension_semantics<parallel>], iteration_bounds = array<i64: 2>, scalar_prefetch = 0 : i64, scratch_operands = 0 : i64, tpu.core_type = #tpu.core_type<tc>, window_params = [{transform_indices = @transform_0, window_bounds = array<i64: 1, 16, 256>}, {pipeline_mode = #tpu.pipeline_mode<synchronous>, transform_indices = @transform_1, window_bounds = array<i64: 256, 128>}, {pipeline_mode = #tpu.pipeline_mode<synchronous>, transform_indices = @transform_2, window_bounds = array<i64: 16, 128>}, {pipeline_mode = #tpu.pipeline_mode<synchronous>, transform_indices = @transform_3, window_bounds = array<i64: 2, 128, 384>}, {pipeline_mode = #tpu.pipeline_mode<synchronous>, transform_indices = @transform_4, window_bounds = array<i64: 2, 128, 128>}, {pipeline_mode = #tpu.pipeline_mode<synchronous>, transform_indices = @transform_5, window_bounds = array<i64: 2, 128, 128>}, {pipeline_mode = #tpu.pipeline_mode<synchronous>, transform_indices = @transform_6, window_bounds = array<i64: 2, 128, 128>}, {pipeline_mode = #tpu.pipeline_mode<synchronous>, transform_indices = @transform_7, window_bounds = array<i64: 2, 16, 128>}, {pipeline_mode = #tpu.pipeline_mode<synchronous>, transform_indices = @transform_8, window_bounds = array<i64: 128, 128>}, {pipeline_mode = #tpu.pipeline_mode<synchronous>, transform_indices = @transform_9, window_bounds = array<i64: 8, 128>}, {transform_indices = @transform_10, window_bounds = array<i64: 1, 1, 128>}]} {
    %c0 = arith.constant 0 : index
    %c0_0 = arith.constant 0 : index
    %c0_1 = arith.constant 0 : index
    %0 = vector.load %arg1[%c0, %c0_0, %c0_1] : memref<1x16x256xf32, #tpu.memory_space<vmem>>, vector<1x16x256xf32>
    %1 = vector.shape_cast %0 : vector<1x16x256xf32> to vector<16x256xf32>
    %c0_2 = arith.constant 0 : index
    %c0_3 = arith.constant 0 : index
    %2 = vector.load %arg2[%c0_2, %c0_3] : memref<256x128xf32, #tpu.memory_space<vmem>>, vector<256x128xf32>
    %cst = arith.constant dense<0.000000e+00> : vector<16x128xf32>
    %3 = tpu.matmul %1, %2, %cst {dimension_numbers = #tpu.dot_dimension_numbers<[1], [0], [0], [1], [0, 0, 1, 1], [], []>} : vector<16x256xf32>, vector<256x128xf32>, vector<16x128xf32> -> vector<16x128xf32>
    %c0_4 = arith.constant 0 : index
    %c0_5 = arith.constant 0 : index
    %4 = vector.load %arg3[%c0_4, %c0_5] : memref<16x128xf32, #tpu.memory_space<vmem>>, vector<16x128xf32>
    %5 = arith.addf %3, %4 : vector<16x128xf32>
    %6 = tpu.iota {dimensions = array<i32: 1>} : vector<16x16xi32>
    %c9_i32 = arith.constant 9 : i32
    %7 = vector.broadcast %c9_i32 : i32 to vector<16x16xi32>
    %8 = arith.cmpi slt, %6, %7 : vector<16x16xi32>
    %cst_6 = arith.constant 0.000000e+00 : f32
    %cst_7 = arith.constant -1.000000e+30 : f32
    %9 = vector.broadcast %cst_6 : f32 to vector<16x16xf32>
    %10 = vector.broadcast %cst_7 : f32 to vector<16x16xf32>
    %11 = arith.select %8, %9, %10 : vector<16x16xi1>, vector<16x16xf32>
    %c0_8 = arith.constant 0 : index
    %c0_9 = arith.constant 0 : index
    %c0_10 = arith.constant 0 : index
    %12 = vector.load %arg4[%c0_8, %c0_9, %c0_10] : memref<2x128x384xf32, #tpu.memory_space<vmem>>, vector<1x128x384xf32>
    %13 = vector.shape_cast %12 : vector<1x128x384xf32> to vector<128x384xf32>
    %c0_11 = arith.constant 0 : index
    %c0_12 = arith.constant 0 : index
    %c0_13 = arith.constant 0 : index
    %14 = vector.load %arg5[%c0_11, %c0_12, %c0_13] : memref<2x128x128xf32, #tpu.memory_space<vmem>>, vector<1x128x128xf32>
    %15 = vector.shape_cast %14 : vector<1x128x128xf32> to vector<128x128xf32>
    %c0_14 = arith.constant 0 : index
    %c0_15 = arith.constant 0 : index
    %c0_16 = arith.constant 0 : index
    %16 = vector.load %arg6[%c0_14, %c0_15, %c0_16] : memref<2x128x128xf32, #tpu.memory_space<vmem>>, vector<1x128x128xf32>
    %17 = vector.shape_cast %16 : vector<1x128x128xf32> to vector<128x128xf32>
    %c0_17 = arith.constant 0 : index
    %c0_18 = arith.constant 0 : index
    %c0_19 = arith.constant 0 : index
    %18 = vector.load %arg7[%c0_17, %c0_18, %c0_19] : memref<2x128x128xf32, #tpu.memory_space<vmem>>, vector<1x128x128xf32>
    %19 = vector.shape_cast %18 : vector<1x128x128xf32> to vector<128x128xf32>
    %c0_20 = arith.constant 0 : index
    %c0_21 = arith.constant 0 : index
    %c0_22 = arith.constant 0 : index
    %20 = vector.load %arg8[%c0_20, %c0_21, %c0_22] : memref<2x16x128xf32, #tpu.memory_space<vmem>>, vector<1x16x128xf32>
    %21 = vector.shape_cast %20 : vector<1x16x128xf32> to vector<16x128xf32>
    %22 = vector.extract_strided_slice %21 {offsets = [0, 0], sizes = [1, 128], strides = [1, 1]} : vector<16x128xf32> to vector<1x128xf32>
    %23 = vector.extract_strided_slice %21 {offsets = [1, 0], sizes = [1, 128], strides = [1, 1]} : vector<16x128xf32> to vector<1x128xf32>
    %24 = vector.extract_strided_slice %21 {offsets = [2, 0], sizes = [1, 128], strides = [1, 1]} : vector<16x128xf32> to vector<1x128xf32>
    %25 = vector.extract_strided_slice %21 {offsets = [3, 0], sizes = [1, 128], strides = [1, 1]} : vector<16x128xf32> to vector<1x128xf32>
    %26 = vector.extract_strided_slice %21 {offsets = [4, 0], sizes = [1, 128], strides = [1, 1]} : vector<16x128xf32> to vector<1x128xf32>
    %27 = vector.extract_strided_slice %21 {offsets = [5, 0], sizes = [1, 128], strides = [1, 1]} : vector<16x128xf32> to vector<1x128xf32>
    %28 = vector.extract_strided_slice %21 {offsets = [6, 0], sizes = [1, 128], strides = [1, 1]} : vector<16x128xf32> to vector<1x128xf32>
    %29 = vector.extract_strided_slice %21 {offsets = [7, 0], sizes = [1, 128], strides = [1, 1]} : vector<16x128xf32> to vector<1x128xf32>
    %30 = vector.extract_strided_slice %21 {offsets = [8, 0], sizes = [1, 128], strides = [1, 1]} : vector<16x128xf32> to vector<1x128xf32>
    %31 = vector.extract_strided_slice %21 {offsets = [9, 0], sizes = [1, 128], strides = [1, 1]} : vector<16x128xf32> to vector<1x128xf32>
    %cst_23 = arith.constant dense<0.000000e+00> : vector<16x384xf32>
    %32 = tpu.matmul %5, %13, %cst_23 {dimension_numbers = #tpu.dot_dimension_numbers<[1], [0], [0], [1], [0, 0, 1, 1], [], []>} : vector<16x128xf32>, vector<128x384xf32>, vector<16x384xf32> -> vector<16x384xf32>
    %33 = vector.extract_strided_slice %32 {offsets = [0, 0], sizes = [16, 128], strides = [1, 1]} : vector<16x384xf32> to vector<16x128xf32>
    %34 = vector.broadcast %22 : vector<1x128xf32> to vector<16x128xf32>
    %35 = arith.addf %33, %34 : vector<16x128xf32>
    %cst_24 = arith.constant 2.500000e-01 : f32
    %36 = vector.broadcast %cst_24 : f32 to vector<16x128xf32>
    %37 = arith.mulf %35, %36 : vector<16x128xf32>
    %38 = vector.extract_strided_slice %32 {offsets = [0, 128], sizes = [16, 128], strides = [1, 1]} : vector<16x384xf32> to vector<16x128xf32>
    %39 = vector.broadcast %23 : vector<1x128xf32> to vector<16x128xf32>
    %40 = arith.addf %38, %39 : vector<16x128xf32>
    %41 = vector.extract_strided_slice %32 {offsets = [0, 256], sizes = [16, 128], strides = [1, 1]} : vector<16x384xf32> to vector<16x128xf32>
    %42 = vector.broadcast %24 : vector<1x128xf32> to vector<16x128xf32>
    %43 = arith.addf %41, %42 : vector<16x128xf32>
    %44 = vector.extract_strided_slice %37 {offsets = [0, 0], sizes = [16, 16], strides = [1, 1]} : vector<16x128xf32> to vector<16x16xf32>
    %45 = vector.extract_strided_slice %40 {offsets = [0, 0], sizes = [16, 16], strides = [1, 1]} : vector<16x128xf32> to vector<16x16xf32>
    %46 = vector.extract_strided_slice %43 {offsets = [0, 0], sizes = [16, 16], strides = [1, 1]} : vector<16x128xf32> to vector<16x16xf32>
    %cst_25 = arith.constant dense<0.000000e+00> : vector<16x16xf32>
    %47 = tpu.matmul %44, %45, %cst_25 {dimension_numbers = #tpu.dot_dimension_numbers<[1], [1], [0], [0], [0, 0, 1, 0], [], []>} : vector<16x16xf32>, vector<16x16xf32>, vector<16x16xf32> -> vector<16x16xf32>
    %48 = arith.addf %47, %11 : vector<16x16xf32>
    %cst_26 = arith.constant dense<0xFF800000> : vector<16xf32>
    %49 = vector.multi_reduction <maximumf>, %48, %cst_26 [1] : vector<16x16xf32> to vector<16xf32>
    %50 = vector.shape_cast %49 : vector<16xf32> to vector<16x1xf32>
    %51 = vector.broadcast %50 : vector<16x1xf32> to vector<16x16xf32>
    %52 = arith.subf %48, %51 : vector<16x16xf32>
    %53 = math.exp %52 : vector<16x16xf32>
    %cst_27 = arith.constant dense<0.000000e+00> : vector<16xf32>
    %54 = vector.multi_reduction <add>, %53, %cst_27 [1] : vector<16x16xf32> to vector<16xf32>
    %55 = vector.shape_cast %54 : vector<16xf32> to vector<16x1xf32>
    %56 = vector.broadcast %55 : vector<16x1xf32> to vector<16x16xf32>
    %57 = arith.divf %53, %56 : vector<16x16xf32>
    %cst_28 = arith.constant dense<0.000000e+00> : vector<16x16xf32>
    %58 = tpu.matmul %57, %46, %cst_28 {dimension_numbers = #tpu.dot_dimension_numbers<[1], [0], [0], [1], [0, 0, 1, 1], [], []>} : vector<16x16xf32>, vector<16x16xf32>, vector<16x16xf32> -> vector<16x16xf32>
    %59 = vector.extract_strided_slice %37 {offsets = [0, 16], sizes = [16, 16], strides = [1, 1]} : vector<16x128xf32> to vector<16x16xf32>
    %60 = vector.extract_strided_slice %40 {offsets = [0, 16], sizes = [16, 16], strides = [1, 1]} : vector<16x128xf32> to vector<16x16xf32>
    %61 = vector.extract_strided_slice %43 {offsets = [0, 16], sizes = [16, 16], strides = [1, 1]} : vector<16x128xf32> to vector<16x16xf32>
    %cst_29 = arith.constant dense<0.000000e+00> : vector<16x16xf32>
    %62 = tpu.matmul %59, %60, %cst_29 {dimension_numbers = #tpu.dot_dimension_numbers<[1], [1], [0], [0], [0, 0, 1, 0], [], []>} : vector<16x16xf32>, vector<16x16xf32>, vector<16x16xf32> -> vector<16x16xf32>
    %63 = arith.addf %62, %11 : vector<16x16xf32>
    %cst_30 = arith.constant dense<0xFF800000> : vector<16xf32>
    %64 = vector.multi_reduction <maximumf>, %63, %cst_30 [1] : vector<16x16xf32> to vector<16xf32>
    %65 = vector.shape_cast %64 : vector<16xf32> to vector<16x1xf32>
    %66 = vector.broadcast %65 : vector<16x1xf32> to vector<16x16xf32>
    %67 = arith.subf %63, %66 : vector<16x16xf32>
    %68 = math.exp %67 : vector<16x16xf32>
    %cst_31 = arith.constant dense<0.000000e+00> : vector<16xf32>
    %69 = vector.multi_reduction <add>, %68, %cst_31 [1] : vector<16x16xf32> to vector<16xf32>
    %70 = vector.shape_cast %69 : vector<16xf32> to vector<16x1xf32>
    %71 = vector.broadcast %70 : vector<16x1xf32> to vector<16x16xf32>
    %72 = arith.divf %68, %71 : vector<16x16xf32>
    %cst_32 = arith.constant dense<0.000000e+00> : vector<16x16xf32>
    %73 = tpu.matmul %72, %61, %cst_32 {dimension_numbers = #tpu.dot_dimension_numbers<[1], [0], [0], [1], [0, 0, 1, 1], [], []>} : vector<16x16xf32>, vector<16x16xf32>, vector<16x16xf32> -> vector<16x16xf32>
    %74 = vector.extract_strided_slice %37 {offsets = [0, 32], sizes = [16, 16], strides = [1, 1]} : vector<16x128xf32> to vector<16x16xf32>
    %75 = vector.extract_strided_slice %40 {offsets = [0, 32], sizes = [16, 16], strides = [1, 1]} : vector<16x128xf32> to vector<16x16xf32>
    %76 = vector.extract_strided_slice %43 {offsets = [0, 32], sizes = [16, 16], strides = [1, 1]} : vector<16x128xf32> to vector<16x16xf32>
    %cst_33 = arith.constant dense<0.000000e+00> : vector<16x16xf32>
    %77 = tpu.matmul %74, %75, %cst_33 {dimension_numbers = #tpu.dot_dimension_numbers<[1], [1], [0], [0], [0, 0, 1, 0], [], []>} : vector<16x16xf32>, vector<16x16xf32>, vector<16x16xf32> -> vector<16x16xf32>
    %78 = arith.addf %77, %11 : vector<16x16xf32>
    %cst_34 = arith.constant dense<0xFF800000> : vector<16xf32>
    %79 = vector.multi_reduction <maximumf>, %78, %cst_34 [1] : vector<16x16xf32> to vector<16xf32>
    %80 = vector.shape_cast %79 : vector<16xf32> to vector<16x1xf32>
    %81 = vector.broadcast %80 : vector<16x1xf32> to vector<16x16xf32>
    %82 = arith.subf %78, %81 : vector<16x16xf32>
    %83 = math.exp %82 : vector<16x16xf32>
    %cst_35 = arith.constant dense<0.000000e+00> : vector<16xf32>
    %84 = vector.multi_reduction <add>, %83, %cst_35 [1] : vector<16x16xf32> to vector<16xf32>
    %85 = vector.shape_cast %84 : vector<16xf32> to vector<16x1xf32>
    %86 = vector.broadcast %85 : vector<16x1xf32> to vector<16x16xf32>
    %87 = arith.divf %83, %86 : vector<16x16xf32>
    %cst_36 = arith.constant dense<0.000000e+00> : vector<16x16xf32>
    %88 = tpu.matmul %87, %76, %cst_36 {dimension_numbers = #tpu.dot_dimension_numbers<[1], [0], [0], [1], [0, 0, 1, 1], [], []>} : vector<16x16xf32>, vector<16x16xf32>, vector<16x16xf32> -> vector<16x16xf32>
    %89 = vector.extract_strided_slice %37 {offsets = [0, 48], sizes = [16, 16], strides = [1, 1]} : vector<16x128xf32> to vector<16x16xf32>
    %90 = vector.extract_strided_slice %40 {offsets = [0, 48], sizes = [16, 16], strides = [1, 1]} : vector<16x128xf32> to vector<16x16xf32>
    %91 = vector.extract_strided_slice %43 {offsets = [0, 48], sizes = [16, 16], strides = [1, 1]} : vector<16x128xf32> to vector<16x16xf32>
    %cst_37 = arith.constant dense<0.000000e+00> : vector<16x16xf32>
    %92 = tpu.matmul %89, %90, %cst_37 {dimension_numbers = #tpu.dot_dimension_numbers<[1], [1], [0], [0], [0, 0, 1, 0], [], []>} : vector<16x16xf32>, vector<16x16xf32>, vector<16x16xf32> -> vector<16x16xf32>
    %93 = arith.addf %92, %11 : vector<16x16xf32>
    %cst_38 = arith.constant dense<0xFF800000> : vector<16xf32>
    %94 = vector.multi_reduction <maximumf>, %93, %cst_38 [1] : vector<16x16xf32> to vector<16xf32>
    %95 = vector.shape_cast %94 : vector<16xf32> to vector<16x1xf32>
    %96 = vector.broadcast %95 : vector<16x1xf32> to vector<16x16xf32>
    %97 = arith.subf %93, %96 : vector<16x16xf32>
    %98 = math.exp %97 : vector<16x16xf32>
    %cst_39 = arith.constant dense<0.000000e+00> : vector<16xf32>
    %99 = vector.multi_reduction <add>, %98, %cst_39 [1] : vector<16x16xf32> to vector<16xf32>
    %100 = vector.shape_cast %99 : vector<16xf32> to vector<16x1xf32>
    %101 = vector.broadcast %100 : vector<16x1xf32> to vector<16x16xf32>
    %102 = arith.divf %98, %101 : vector<16x16xf32>
    %cst_40 = arith.constant dense<0.000000e+00> : vector<16x16xf32>
    %103 = tpu.matmul %102, %91, %cst_40 {dimension_numbers = #tpu.dot_dimension_numbers<[1], [0], [0], [1], [0, 0, 1, 1], [], []>} : vector<16x16xf32>, vector<16x16xf32>, vector<16x16xf32> -> vector<16x16xf32>
    %104 = vector.extract_strided_slice %37 {offsets = [0, 64], sizes = [16, 16], strides = [1, 1]} : vector<16x128xf32> to vector<16x16xf32>
    %105 = vector.extract_strided_slice %40 {offsets = [0, 64], sizes = [16, 16], strides = [1, 1]} : vector<16x128xf32> to vector<16x16xf32>
    %106 = vector.extract_strided_slice %43 {offsets = [0, 64], sizes = [16, 16], strides = [1, 1]} : vector<16x128xf32> to vector<16x16xf32>
    %cst_41 = arith.constant dense<0.000000e+00> : vector<16x16xf32>
    %107 = tpu.matmul %104, %105, %cst_41 {dimension_numbers = #tpu.dot_dimension_numbers<[1], [1], [0], [0], [0, 0, 1, 0], [], []>} : vector<16x16xf32>, vector<16x16xf32>, vector<16x16xf32> -> vector<16x16xf32>
    %108 = arith.addf %107, %11 : vector<16x16xf32>
    %cst_42 = arith.constant dense<0xFF800000> : vector<16xf32>
    %109 = vector.multi_reduction <maximumf>, %108, %cst_42 [1] : vector<16x16xf32> to vector<16xf32>
    %110 = vector.shape_cast %109 : vector<16xf32> to vector<16x1xf32>
    %111 = vector.broadcast %110 : vector<16x1xf32> to vector<16x16xf32>
    %112 = arith.subf %108, %111 : vector<16x16xf32>
    %113 = math.exp %112 : vector<16x16xf32>
    %cst_43 = arith.constant dense<0.000000e+00> : vector<16xf32>
    %114 = vector.multi_reduction <add>, %113, %cst_43 [1] : vector<16x16xf32> to vector<16xf32>
    %115 = vector.shape_cast %114 : vector<16xf32> to vector<16x1xf32>
    %116 = vector.broadcast %115 : vector<16x1xf32> to vector<16x16xf32>
    %117 = arith.divf %113, %116 : vector<16x16xf32>
    %cst_44 = arith.constant dense<0.000000e+00> : vector<16x16xf32>
    %118 = tpu.matmul %117, %106, %cst_44 {dimension_numbers = #tpu.dot_dimension_numbers<[1], [0], [0], [1], [0, 0, 1, 1], [], []>} : vector<16x16xf32>, vector<16x16xf32>, vector<16x16xf32> -> vector<16x16xf32>
    %119 = vector.extract_strided_slice %37 {offsets = [0, 80], sizes = [16, 16], strides = [1, 1]} : vector<16x128xf32> to vector<16x16xf32>
    %120 = vector.extract_strided_slice %40 {offsets = [0, 80], sizes = [16, 16], strides = [1, 1]} : vector<16x128xf32> to vector<16x16xf32>
    %121 = vector.extract_strided_slice %43 {offsets = [0, 80], sizes = [16, 16], strides = [1, 1]} : vector<16x128xf32> to vector<16x16xf32>
    %cst_45 = arith.constant dense<0.000000e+00> : vector<16x16xf32>
    %122 = tpu.matmul %119, %120, %cst_45 {dimension_numbers = #tpu.dot_dimension_numbers<[1], [1], [0], [0], [0, 0, 1, 0], [], []>} : vector<16x16xf32>, vector<16x16xf32>, vector<16x16xf32> -> vector<16x16xf32>
    %123 = arith.addf %122, %11 : vector<16x16xf32>
    %cst_46 = arith.constant dense<0xFF800000> : vector<16xf32>
    %124 = vector.multi_reduction <maximumf>, %123, %cst_46 [1] : vector<16x16xf32> to vector<16xf32>
    %125 = vector.shape_cast %124 : vector<16xf32> to vector<16x1xf32>
    %126 = vector.broadcast %125 : vector<16x1xf32> to vector<16x16xf32>
    %127 = arith.subf %123, %126 : vector<16x16xf32>
    %128 = math.exp %127 : vector<16x16xf32>
    %cst_47 = arith.constant dense<0.000000e+00> : vector<16xf32>
    %129 = vector.multi_reduction <add>, %128, %cst_47 [1] : vector<16x16xf32> to vector<16xf32>
    %130 = vector.shape_cast %129 : vector<16xf32> to vector<16x1xf32>
    %131 = vector.broadcast %130 : vector<16x1xf32> to vector<16x16xf32>
    %132 = arith.divf %128, %131 : vector<16x16xf32>
    %cst_48 = arith.constant dense<0.000000e+00> : vector<16x16xf32>
    %133 = tpu.matmul %132, %121, %cst_48 {dimension_numbers = #tpu.dot_dimension_numbers<[1], [0], [0], [1], [0, 0, 1, 1], [], []>} : vector<16x16xf32>, vector<16x16xf32>, vector<16x16xf32> -> vector<16x16xf32>
    %134 = vector.extract_strided_slice %37 {offsets = [0, 96], sizes = [16, 16], strides = [1, 1]} : vector<16x128xf32> to vector<16x16xf32>
    %135 = vector.extract_strided_slice %40 {offsets = [0, 96], sizes = [16, 16], strides = [1, 1]} : vector<16x128xf32> to vector<16x16xf32>
    %136 = vector.extract_strided_slice %43 {offsets = [0, 96], sizes = [16, 16], strides = [1, 1]} : vector<16x128xf32> to vector<16x16xf32>
    %cst_49 = arith.constant dense<0.000000e+00> : vector<16x16xf32>
    %137 = tpu.matmul %134, %135, %cst_49 {dimension_numbers = #tpu.dot_dimension_numbers<[1], [1], [0], [0], [0, 0, 1, 0], [], []>} : vector<16x16xf32>, vector<16x16xf32>, vector<16x16xf32> -> vector<16x16xf32>
    %138 = arith.addf %137, %11 : vector<16x16xf32>
    %cst_50 = arith.constant dense<0xFF800000> : vector<16xf32>
    %139 = vector.multi_reduction <maximumf>, %138, %cst_50 [1] : vector<16x16xf32> to vector<16xf32>
    %140 = vector.shape_cast %139 : vector<16xf32> to vector<16x1xf32>
    %141 = vector.broadcast %140 : vector<16x1xf32> to vector<16x16xf32>
    %142 = arith.subf %138, %141 : vector<16x16xf32>
    %143 = math.exp %142 : vector<16x16xf32>
    %cst_51 = arith.constant dense<0.000000e+00> : vector<16xf32>
    %144 = vector.multi_reduction <add>, %143, %cst_51 [1] : vector<16x16xf32> to vector<16xf32>
    %145 = vector.shape_cast %144 : vector<16xf32> to vector<16x1xf32>
    %146 = vector.broadcast %145 : vector<16x1xf32> to vector<16x16xf32>
    %147 = arith.divf %143, %146 : vector<16x16xf32>
    %cst_52 = arith.constant dense<0.000000e+00> : vector<16x16xf32>
    %148 = tpu.matmul %147, %136, %cst_52 {dimension_numbers = #tpu.dot_dimension_numbers<[1], [0], [0], [1], [0, 0, 1, 1], [], []>} : vector<16x16xf32>, vector<16x16xf32>, vector<16x16xf32> -> vector<16x16xf32>
    %149 = vector.extract_strided_slice %37 {offsets = [0, 112], sizes = [16, 16], strides = [1, 1]} : vector<16x128xf32> to vector<16x16xf32>
    %150 = vector.extract_strided_slice %40 {offsets = [0, 112], sizes = [16, 16], strides = [1, 1]} : vector<16x128xf32> to vector<16x16xf32>
    %151 = vector.extract_strided_slice %43 {offsets = [0, 112], sizes = [16, 16], strides = [1, 1]} : vector<16x128xf32> to vector<16x16xf32>
    %cst_53 = arith.constant dense<0.000000e+00> : vector<16x16xf32>
    %152 = tpu.matmul %149, %150, %cst_53 {dimension_numbers = #tpu.dot_dimension_numbers<[1], [1], [0], [0], [0, 0, 1, 0], [], []>} : vector<16x16xf32>, vector<16x16xf32>, vector<16x16xf32> -> vector<16x16xf32>
    %153 = arith.addf %152, %11 : vector<16x16xf32>
    %cst_54 = arith.constant dense<0xFF800000> : vector<16xf32>
    %154 = vector.multi_reduction <maximumf>, %153, %cst_54 [1] : vector<16x16xf32> to vector<16xf32>
    %155 = vector.shape_cast %154 : vector<16xf32> to vector<16x1xf32>
    %156 = vector.broadcast %155 : vector<16x1xf32> to vector<16x16xf32>
    %157 = arith.subf %153, %156 : vector<16x16xf32>
    %158 = math.exp %157 : vector<16x16xf32>
    %cst_55 = arith.constant dense<0.000000e+00> : vector<16xf32>
    %159 = vector.multi_reduction <add>, %158, %cst_55 [1] : vector<16x16xf32> to vector<16xf32>
    %160 = vector.shape_cast %159 : vector<16xf32> to vector<16x1xf32>
    %161 = vector.broadcast %160 : vector<16x1xf32> to vector<16x16xf32>
    %162 = arith.divf %158, %161 : vector<16x16xf32>
    %cst_56 = arith.constant dense<0.000000e+00> : vector<16x16xf32>
    %163 = tpu.matmul %162, %151, %cst_56 {dimension_numbers = #tpu.dot_dimension_numbers<[1], [0], [0], [1], [0, 0, 1, 1], [], []>} : vector<16x16xf32>, vector<16x16xf32>, vector<16x16xf32> -> vector<16x16xf32>
    %164 = tpu.concatenate %58, %73, %88, %103, %118, %133, %148, %163 in 1 : vector<16x16xf32>, vector<16x16xf32>, vector<16x16xf32>, vector<16x16xf32>, vector<16x16xf32>, vector<16x16xf32>, vector<16x16xf32>, vector<16x16xf32> -> vector<16x128xf32>
    %cst_57 = arith.constant dense<0.000000e+00> : vector<16x128xf32>
    %165 = tpu.matmul %164, %15, %cst_57 {dimension_numbers = #tpu.dot_dimension_numbers<[1], [0], [0], [1], [0, 0, 1, 1], [], []>} : vector<16x128xf32>, vector<128x128xf32>, vector<16x128xf32> -> vector<16x128xf32>
    %166 = vector.broadcast %25 : vector<1x128xf32> to vector<16x128xf32>
    %167 = arith.addf %165, %166 : vector<16x128xf32>
    %168 = arith.addf %5, %167 : vector<16x128xf32>
    %cst_58 = arith.constant dense<0.000000e+00> : vector<16xf32>
    %169 = vector.multi_reduction <add>, %168, %cst_58 [1] : vector<16x128xf32> to vector<16xf32>
    %170 = vector.shape_cast %169 : vector<16xf32> to vector<16x1xf32>
    %cst_59 = arith.constant 1.280000e+02 : f32
    %171 = vector.broadcast %cst_59 : f32 to vector<16x1xf32>
    %172 = arith.divf %170, %171 : vector<16x1xf32>
    %173 = vector.broadcast %172 : vector<16x1xf32> to vector<16x128xf32>
    %174 = arith.subf %168, %173 : vector<16x128xf32>
    %175 = arith.mulf %174, %174 : vector<16x128xf32>
    %cst_60 = arith.constant dense<0.000000e+00> : vector<16xf32>
    %176 = vector.multi_reduction <add>, %175, %cst_60 [1] : vector<16x128xf32> to vector<16xf32>
    %177 = vector.shape_cast %176 : vector<16xf32> to vector<16x1xf32>
    %cst_61 = arith.constant 1.280000e+02 : f32
    %178 = vector.broadcast %cst_61 : f32 to vector<16x1xf32>
    %179 = arith.divf %177, %178 : vector<16x1xf32>
    %180 = vector.broadcast %172 : vector<16x1xf32> to vector<16x128xf32>
    %181 = arith.subf %168, %180 : vector<16x128xf32>
    %cst_62 = arith.constant 9.99999974E-6 : f32
    %182 = vector.broadcast %cst_62 : f32 to vector<16x1xf32>
    %183 = arith.addf %179, %182 : vector<16x1xf32>
    %184 = math.rsqrt %183 : vector<16x1xf32>
    %185 = vector.broadcast %184 : vector<16x1xf32> to vector<16x128xf32>
    %186 = arith.mulf %181, %185 : vector<16x128xf32>
    %187 = vector.broadcast %26 : vector<1x128xf32> to vector<16x128xf32>
    %188 = arith.mulf %186, %187 : vector<16x128xf32>
    %189 = vector.broadcast %27 : vector<1x128xf32> to vector<16x128xf32>
    %190 = arith.addf %188, %189 : vector<16x128xf32>
    %cst_63 = arith.constant dense<0.000000e+00> : vector<16x128xf32>
    %191 = tpu.matmul %190, %17, %cst_63 {dimension_numbers = #tpu.dot_dimension_numbers<[1], [0], [0], [1], [0, 0, 1, 1], [], []>} : vector<16x128xf32>, vector<128x128xf32>, vector<16x128xf32> -> vector<16x128xf32>
    %192 = vector.broadcast %28 : vector<1x128xf32> to vector<16x128xf32>
    %193 = arith.addf %191, %192 : vector<16x128xf32>
    %cst_64 = arith.constant 0.000000e+00 : f32
    %194 = vector.broadcast %cst_64 : f32 to vector<16x128xf32>
    %195 = arith.maximumf %193, %194 : vector<16x128xf32>
    %cst_65 = arith.constant dense<0.000000e+00> : vector<16x128xf32>
    %196 = tpu.matmul %195, %19, %cst_65 {dimension_numbers = #tpu.dot_dimension_numbers<[1], [0], [0], [1], [0, 0, 1, 1], [], []>} : vector<16x128xf32>, vector<128x128xf32>, vector<16x128xf32> -> vector<16x128xf32>
    %197 = vector.broadcast %29 : vector<1x128xf32> to vector<16x128xf32>
    %198 = arith.addf %196, %197 : vector<16x128xf32>
    %199 = arith.addf %190, %198 : vector<16x128xf32>
    %cst_66 = arith.constant dense<0.000000e+00> : vector<16xf32>
    %200 = vector.multi_reduction <add>, %199, %cst_66 [1] : vector<16x128xf32> to vector<16xf32>
    %201 = vector.shape_cast %200 : vector<16xf32> to vector<16x1xf32>
    %cst_67 = arith.constant 1.280000e+02 : f32
    %202 = vector.broadcast %cst_67 : f32 to vector<16x1xf32>
    %203 = arith.divf %201, %202 : vector<16x1xf32>
    %204 = vector.broadcast %203 : vector<16x1xf32> to vector<16x128xf32>
    %205 = arith.subf %199, %204 : vector<16x128xf32>
    %206 = arith.mulf %205, %205 : vector<16x128xf32>
    %cst_68 = arith.constant dense<0.000000e+00> : vector<16xf32>
    %207 = vector.multi_reduction <add>, %206, %cst_68 [1] : vector<16x128xf32> to vector<16xf32>
    %208 = vector.shape_cast %207 : vector<16xf32> to vector<16x1xf32>
    %cst_69 = arith.constant 1.280000e+02 : f32
    %209 = vector.broadcast %cst_69 : f32 to vector<16x1xf32>
    %210 = arith.divf %208, %209 : vector<16x1xf32>
    %211 = vector.broadcast %203 : vector<16x1xf32> to vector<16x128xf32>
    %212 = arith.subf %199, %211 : vector<16x128xf32>
    %cst_70 = arith.constant 9.99999974E-6 : f32
    %213 = vector.broadcast %cst_70 : f32 to vector<16x1xf32>
    %214 = arith.addf %210, %213 : vector<16x1xf32>
    %215 = math.rsqrt %214 : vector<16x1xf32>
    %216 = vector.broadcast %215 : vector<16x1xf32> to vector<16x128xf32>
    %217 = arith.mulf %212, %216 : vector<16x128xf32>
    %218 = vector.broadcast %30 : vector<1x128xf32> to vector<16x128xf32>
    %219 = arith.mulf %217, %218 : vector<16x128xf32>
    %220 = vector.broadcast %31 : vector<1x128xf32> to vector<16x128xf32>
    %221 = arith.addf %219, %220 : vector<16x128xf32>
    %c1 = arith.constant 1 : index
    %c0_71 = arith.constant 0 : index
    %c0_72 = arith.constant 0 : index
    %222 = vector.load %arg4[%c1, %c0_71, %c0_72] : memref<2x128x384xf32, #tpu.memory_space<vmem>>, vector<1x128x384xf32>
    %223 = vector.shape_cast %222 : vector<1x128x384xf32> to vector<128x384xf32>
    %c1_73 = arith.constant 1 : index
    %c0_74 = arith.constant 0 : index
    %c0_75 = arith.constant 0 : index
    %224 = vector.load %arg5[%c1_73, %c0_74, %c0_75] : memref<2x128x128xf32, #tpu.memory_space<vmem>>, vector<1x128x128xf32>
    %225 = vector.shape_cast %224 : vector<1x128x128xf32> to vector<128x128xf32>
    %c1_76 = arith.constant 1 : index
    %c0_77 = arith.constant 0 : index
    %c0_78 = arith.constant 0 : index
    %226 = vector.load %arg6[%c1_76, %c0_77, %c0_78] : memref<2x128x128xf32, #tpu.memory_space<vmem>>, vector<1x128x128xf32>
    %227 = vector.shape_cast %226 : vector<1x128x128xf32> to vector<128x128xf32>
    %c1_79 = arith.constant 1 : index
    %c0_80 = arith.constant 0 : index
    %c0_81 = arith.constant 0 : index
    %228 = vector.load %arg7[%c1_79, %c0_80, %c0_81] : memref<2x128x128xf32, #tpu.memory_space<vmem>>, vector<1x128x128xf32>
    %229 = vector.shape_cast %228 : vector<1x128x128xf32> to vector<128x128xf32>
    %c1_82 = arith.constant 1 : index
    %c0_83 = arith.constant 0 : index
    %c0_84 = arith.constant 0 : index
    %230 = vector.load %arg8[%c1_82, %c0_83, %c0_84] : memref<2x16x128xf32, #tpu.memory_space<vmem>>, vector<1x16x128xf32>
    %231 = vector.shape_cast %230 : vector<1x16x128xf32> to vector<16x128xf32>
    %232 = vector.extract_strided_slice %231 {offsets = [0, 0], sizes = [1, 128], strides = [1, 1]} : vector<16x128xf32> to vector<1x128xf32>
    %233 = vector.extract_strided_slice %231 {offsets = [1, 0], sizes = [1, 128], strides = [1, 1]} : vector<16x128xf32> to vector<1x128xf32>
    %234 = vector.extract_strided_slice %231 {offsets = [2, 0], sizes = [1, 128], strides = [1, 1]} : vector<16x128xf32> to vector<1x128xf32>
    %235 = vector.extract_strided_slice %231 {offsets = [3, 0], sizes = [1, 128], strides = [1, 1]} : vector<16x128xf32> to vector<1x128xf32>
    %236 = vector.extract_strided_slice %231 {offsets = [4, 0], sizes = [1, 128], strides = [1, 1]} : vector<16x128xf32> to vector<1x128xf32>
    %237 = vector.extract_strided_slice %231 {offsets = [5, 0], sizes = [1, 128], strides = [1, 1]} : vector<16x128xf32> to vector<1x128xf32>
    %238 = vector.extract_strided_slice %231 {offsets = [6, 0], sizes = [1, 128], strides = [1, 1]} : vector<16x128xf32> to vector<1x128xf32>
    %239 = vector.extract_strided_slice %231 {offsets = [7, 0], sizes = [1, 128], strides = [1, 1]} : vector<16x128xf32> to vector<1x128xf32>
    %240 = vector.extract_strided_slice %231 {offsets = [8, 0], sizes = [1, 128], strides = [1, 1]} : vector<16x128xf32> to vector<1x128xf32>
    %241 = vector.extract_strided_slice %231 {offsets = [9, 0], sizes = [1, 128], strides = [1, 1]} : vector<16x128xf32> to vector<1x128xf32>
    %cst_85 = arith.constant dense<0.000000e+00> : vector<16x384xf32>
    %242 = tpu.matmul %221, %223, %cst_85 {dimension_numbers = #tpu.dot_dimension_numbers<[1], [0], [0], [1], [0, 0, 1, 1], [], []>} : vector<16x128xf32>, vector<128x384xf32>, vector<16x384xf32> -> vector<16x384xf32>
    %243 = vector.extract_strided_slice %242 {offsets = [0, 0], sizes = [16, 128], strides = [1, 1]} : vector<16x384xf32> to vector<16x128xf32>
    %244 = vector.broadcast %232 : vector<1x128xf32> to vector<16x128xf32>
    %245 = arith.addf %243, %244 : vector<16x128xf32>
    %cst_86 = arith.constant 2.500000e-01 : f32
    %246 = vector.broadcast %cst_86 : f32 to vector<16x128xf32>
    %247 = arith.mulf %245, %246 : vector<16x128xf32>
    %248 = vector.extract_strided_slice %242 {offsets = [0, 128], sizes = [16, 128], strides = [1, 1]} : vector<16x384xf32> to vector<16x128xf32>
    %249 = vector.broadcast %233 : vector<1x128xf32> to vector<16x128xf32>
    %250 = arith.addf %248, %249 : vector<16x128xf32>
    %251 = vector.extract_strided_slice %242 {offsets = [0, 256], sizes = [16, 128], strides = [1, 1]} : vector<16x384xf32> to vector<16x128xf32>
    %252 = vector.broadcast %234 : vector<1x128xf32> to vector<16x128xf32>
    %253 = arith.addf %251, %252 : vector<16x128xf32>
    %254 = vector.extract_strided_slice %247 {offsets = [0, 0], sizes = [16, 16], strides = [1, 1]} : vector<16x128xf32> to vector<16x16xf32>
    %255 = vector.extract_strided_slice %250 {offsets = [0, 0], sizes = [16, 16], strides = [1, 1]} : vector<16x128xf32> to vector<16x16xf32>
    %256 = vector.extract_strided_slice %253 {offsets = [0, 0], sizes = [16, 16], strides = [1, 1]} : vector<16x128xf32> to vector<16x16xf32>
    %cst_87 = arith.constant dense<0.000000e+00> : vector<16x16xf32>
    %257 = tpu.matmul %254, %255, %cst_87 {dimension_numbers = #tpu.dot_dimension_numbers<[1], [1], [0], [0], [0, 0, 1, 0], [], []>} : vector<16x16xf32>, vector<16x16xf32>, vector<16x16xf32> -> vector<16x16xf32>
    %258 = arith.addf %257, %11 : vector<16x16xf32>
    %cst_88 = arith.constant dense<0xFF800000> : vector<16xf32>
    %259 = vector.multi_reduction <maximumf>, %258, %cst_88 [1] : vector<16x16xf32> to vector<16xf32>
    %260 = vector.shape_cast %259 : vector<16xf32> to vector<16x1xf32>
    %261 = vector.broadcast %260 : vector<16x1xf32> to vector<16x16xf32>
    %262 = arith.subf %258, %261 : vector<16x16xf32>
    %263 = math.exp %262 : vector<16x16xf32>
    %cst_89 = arith.constant dense<0.000000e+00> : vector<16xf32>
    %264 = vector.multi_reduction <add>, %263, %cst_89 [1] : vector<16x16xf32> to vector<16xf32>
    %265 = vector.shape_cast %264 : vector<16xf32> to vector<16x1xf32>
    %266 = vector.broadcast %265 : vector<16x1xf32> to vector<16x16xf32>
    %267 = arith.divf %263, %266 : vector<16x16xf32>
    %cst_90 = arith.constant dense<0.000000e+00> : vector<16x16xf32>
    %268 = tpu.matmul %267, %256, %cst_90 {dimension_numbers = #tpu.dot_dimension_numbers<[1], [0], [0], [1], [0, 0, 1, 1], [], []>} : vector<16x16xf32>, vector<16x16xf32>, vector<16x16xf32> -> vector<16x16xf32>
    %269 = vector.extract_strided_slice %247 {offsets = [0, 16], sizes = [16, 16], strides = [1, 1]} : vector<16x128xf32> to vector<16x16xf32>
    %270 = vector.extract_strided_slice %250 {offsets = [0, 16], sizes = [16, 16], strides = [1, 1]} : vector<16x128xf32> to vector<16x16xf32>
    %271 = vector.extract_strided_slice %253 {offsets = [0, 16], sizes = [16, 16], strides = [1, 1]} : vector<16x128xf32> to vector<16x16xf32>
    %cst_91 = arith.constant dense<0.000000e+00> : vector<16x16xf32>
    %272 = tpu.matmul %269, %270, %cst_91 {dimension_numbers = #tpu.dot_dimension_numbers<[1], [1], [0], [0], [0, 0, 1, 0], [], []>} : vector<16x16xf32>, vector<16x16xf32>, vector<16x16xf32> -> vector<16x16xf32>
    %273 = arith.addf %272, %11 : vector<16x16xf32>
    %cst_92 = arith.constant dense<0xFF800000> : vector<16xf32>
    %274 = vector.multi_reduction <maximumf>, %273, %cst_92 [1] : vector<16x16xf32> to vector<16xf32>
    %275 = vector.shape_cast %274 : vector<16xf32> to vector<16x1xf32>
    %276 = vector.broadcast %275 : vector<16x1xf32> to vector<16x16xf32>
    %277 = arith.subf %273, %276 : vector<16x16xf32>
    %278 = math.exp %277 : vector<16x16xf32>
    %cst_93 = arith.constant dense<0.000000e+00> : vector<16xf32>
    %279 = vector.multi_reduction <add>, %278, %cst_93 [1] : vector<16x16xf32> to vector<16xf32>
    %280 = vector.shape_cast %279 : vector<16xf32> to vector<16x1xf32>
    %281 = vector.broadcast %280 : vector<16x1xf32> to vector<16x16xf32>
    %282 = arith.divf %278, %281 : vector<16x16xf32>
    %cst_94 = arith.constant dense<0.000000e+00> : vector<16x16xf32>
    %283 = tpu.matmul %282, %271, %cst_94 {dimension_numbers = #tpu.dot_dimension_numbers<[1], [0], [0], [1], [0, 0, 1, 1], [], []>} : vector<16x16xf32>, vector<16x16xf32>, vector<16x16xf32> -> vector<16x16xf32>
    %284 = vector.extract_strided_slice %247 {offsets = [0, 32], sizes = [16, 16], strides = [1, 1]} : vector<16x128xf32> to vector<16x16xf32>
    %285 = vector.extract_strided_slice %250 {offsets = [0, 32], sizes = [16, 16], strides = [1, 1]} : vector<16x128xf32> to vector<16x16xf32>
    %286 = vector.extract_strided_slice %253 {offsets = [0, 32], sizes = [16, 16], strides = [1, 1]} : vector<16x128xf32> to vector<16x16xf32>
    %cst_95 = arith.constant dense<0.000000e+00> : vector<16x16xf32>
    %287 = tpu.matmul %284, %285, %cst_95 {dimension_numbers = #tpu.dot_dimension_numbers<[1], [1], [0], [0], [0, 0, 1, 0], [], []>} : vector<16x16xf32>, vector<16x16xf32>, vector<16x16xf32> -> vector<16x16xf32>
    %288 = arith.addf %287, %11 : vector<16x16xf32>
    %cst_96 = arith.constant dense<0xFF800000> : vector<16xf32>
    %289 = vector.multi_reduction <maximumf>, %288, %cst_96 [1] : vector<16x16xf32> to vector<16xf32>
    %290 = vector.shape_cast %289 : vector<16xf32> to vector<16x1xf32>
    %291 = vector.broadcast %290 : vector<16x1xf32> to vector<16x16xf32>
    %292 = arith.subf %288, %291 : vector<16x16xf32>
    %293 = math.exp %292 : vector<16x16xf32>
    %cst_97 = arith.constant dense<0.000000e+00> : vector<16xf32>
    %294 = vector.multi_reduction <add>, %293, %cst_97 [1] : vector<16x16xf32> to vector<16xf32>
    %295 = vector.shape_cast %294 : vector<16xf32> to vector<16x1xf32>
    %296 = vector.broadcast %295 : vector<16x1xf32> to vector<16x16xf32>
    %297 = arith.divf %293, %296 : vector<16x16xf32>
    %cst_98 = arith.constant dense<0.000000e+00> : vector<16x16xf32>
    %298 = tpu.matmul %297, %286, %cst_98 {dimension_numbers = #tpu.dot_dimension_numbers<[1], [0], [0], [1], [0, 0, 1, 1], [], []>} : vector<16x16xf32>, vector<16x16xf32>, vector<16x16xf32> -> vector<16x16xf32>
    %299 = vector.extract_strided_slice %247 {offsets = [0, 48], sizes = [16, 16], strides = [1, 1]} : vector<16x128xf32> to vector<16x16xf32>
    %300 = vector.extract_strided_slice %250 {offsets = [0, 48], sizes = [16, 16], strides = [1, 1]} : vector<16x128xf32> to vector<16x16xf32>
    %301 = vector.extract_strided_slice %253 {offsets = [0, 48], sizes = [16, 16], strides = [1, 1]} : vector<16x128xf32> to vector<16x16xf32>
    %cst_99 = arith.constant dense<0.000000e+00> : vector<16x16xf32>
    %302 = tpu.matmul %299, %300, %cst_99 {dimension_numbers = #tpu.dot_dimension_numbers<[1], [1], [0], [0], [0, 0, 1, 0], [], []>} : vector<16x16xf32>, vector<16x16xf32>, vector<16x16xf32> -> vector<16x16xf32>
    %303 = arith.addf %302, %11 : vector<16x16xf32>
    %cst_100 = arith.constant dense<0xFF800000> : vector<16xf32>
    %304 = vector.multi_reduction <maximumf>, %303, %cst_100 [1] : vector<16x16xf32> to vector<16xf32>
    %305 = vector.shape_cast %304 : vector<16xf32> to vector<16x1xf32>
    %306 = vector.broadcast %305 : vector<16x1xf32> to vector<16x16xf32>
    %307 = arith.subf %303, %306 : vector<16x16xf32>
    %308 = math.exp %307 : vector<16x16xf32>
    %cst_101 = arith.constant dense<0.000000e+00> : vector<16xf32>
    %309 = vector.multi_reduction <add>, %308, %cst_101 [1] : vector<16x16xf32> to vector<16xf32>
    %310 = vector.shape_cast %309 : vector<16xf32> to vector<16x1xf32>
    %311 = vector.broadcast %310 : vector<16x1xf32> to vector<16x16xf32>
    %312 = arith.divf %308, %311 : vector<16x16xf32>
    %cst_102 = arith.constant dense<0.000000e+00> : vector<16x16xf32>
    %313 = tpu.matmul %312, %301, %cst_102 {dimension_numbers = #tpu.dot_dimension_numbers<[1], [0], [0], [1], [0, 0, 1, 1], [], []>} : vector<16x16xf32>, vector<16x16xf32>, vector<16x16xf32> -> vector<16x16xf32>
    %314 = vector.extract_strided_slice %247 {offsets = [0, 64], sizes = [16, 16], strides = [1, 1]} : vector<16x128xf32> to vector<16x16xf32>
    %315 = vector.extract_strided_slice %250 {offsets = [0, 64], sizes = [16, 16], strides = [1, 1]} : vector<16x128xf32> to vector<16x16xf32>
    %316 = vector.extract_strided_slice %253 {offsets = [0, 64], sizes = [16, 16], strides = [1, 1]} : vector<16x128xf32> to vector<16x16xf32>
    %cst_103 = arith.constant dense<0.000000e+00> : vector<16x16xf32>
    %317 = tpu.matmul %314, %315, %cst_103 {dimension_numbers = #tpu.dot_dimension_numbers<[1], [1], [0], [0], [0, 0, 1, 0], [], []>} : vector<16x16xf32>, vector<16x16xf32>, vector<16x16xf32> -> vector<16x16xf32>
    %318 = arith.addf %317, %11 : vector<16x16xf32>
    %cst_104 = arith.constant dense<0xFF800000> : vector<16xf32>
    %319 = vector.multi_reduction <maximumf>, %318, %cst_104 [1] : vector<16x16xf32> to vector<16xf32>
    %320 = vector.shape_cast %319 : vector<16xf32> to vector<16x1xf32>
    %321 = vector.broadcast %320 : vector<16x1xf32> to vector<16x16xf32>
    %322 = arith.subf %318, %321 : vector<16x16xf32>
    %323 = math.exp %322 : vector<16x16xf32>
    %cst_105 = arith.constant dense<0.000000e+00> : vector<16xf32>
    %324 = vector.multi_reduction <add>, %323, %cst_105 [1] : vector<16x16xf32> to vector<16xf32>
    %325 = vector.shape_cast %324 : vector<16xf32> to vector<16x1xf32>
    %326 = vector.broadcast %325 : vector<16x1xf32> to vector<16x16xf32>
    %327 = arith.divf %323, %326 : vector<16x16xf32>
    %cst_106 = arith.constant dense<0.000000e+00> : vector<16x16xf32>
    %328 = tpu.matmul %327, %316, %cst_106 {dimension_numbers = #tpu.dot_dimension_numbers<[1], [0], [0], [1], [0, 0, 1, 1], [], []>} : vector<16x16xf32>, vector<16x16xf32>, vector<16x16xf32> -> vector<16x16xf32>
    %329 = vector.extract_strided_slice %247 {offsets = [0, 80], sizes = [16, 16], strides = [1, 1]} : vector<16x128xf32> to vector<16x16xf32>
    %330 = vector.extract_strided_slice %250 {offsets = [0, 80], sizes = [16, 16], strides = [1, 1]} : vector<16x128xf32> to vector<16x16xf32>
    %331 = vector.extract_strided_slice %253 {offsets = [0, 80], sizes = [16, 16], strides = [1, 1]} : vector<16x128xf32> to vector<16x16xf32>
    %cst_107 = arith.constant dense<0.000000e+00> : vector<16x16xf32>
    %332 = tpu.matmul %329, %330, %cst_107 {dimension_numbers = #tpu.dot_dimension_numbers<[1], [1], [0], [0], [0, 0, 1, 0], [], []>} : vector<16x16xf32>, vector<16x16xf32>, vector<16x16xf32> -> vector<16x16xf32>
    %333 = arith.addf %332, %11 : vector<16x16xf32>
    %cst_108 = arith.constant dense<0xFF800000> : vector<16xf32>
    %334 = vector.multi_reduction <maximumf>, %333, %cst_108 [1] : vector<16x16xf32> to vector<16xf32>
    %335 = vector.shape_cast %334 : vector<16xf32> to vector<16x1xf32>
    %336 = vector.broadcast %335 : vector<16x1xf32> to vector<16x16xf32>
    %337 = arith.subf %333, %336 : vector<16x16xf32>
    %338 = math.exp %337 : vector<16x16xf32>
    %cst_109 = arith.constant dense<0.000000e+00> : vector<16xf32>
    %339 = vector.multi_reduction <add>, %338, %cst_109 [1] : vector<16x16xf32> to vector<16xf32>
    %340 = vector.shape_cast %339 : vector<16xf32> to vector<16x1xf32>
    %341 = vector.broadcast %340 : vector<16x1xf32> to vector<16x16xf32>
    %342 = arith.divf %338, %341 : vector<16x16xf32>
    %cst_110 = arith.constant dense<0.000000e+00> : vector<16x16xf32>
    %343 = tpu.matmul %342, %331, %cst_110 {dimension_numbers = #tpu.dot_dimension_numbers<[1], [0], [0], [1], [0, 0, 1, 1], [], []>} : vector<16x16xf32>, vector<16x16xf32>, vector<16x16xf32> -> vector<16x16xf32>
    %344 = vector.extract_strided_slice %247 {offsets = [0, 96], sizes = [16, 16], strides = [1, 1]} : vector<16x128xf32> to vector<16x16xf32>
    %345 = vector.extract_strided_slice %250 {offsets = [0, 96], sizes = [16, 16], strides = [1, 1]} : vector<16x128xf32> to vector<16x16xf32>
    %346 = vector.extract_strided_slice %253 {offsets = [0, 96], sizes = [16, 16], strides = [1, 1]} : vector<16x128xf32> to vector<16x16xf32>
    %cst_111 = arith.constant dense<0.000000e+00> : vector<16x16xf32>
    %347 = tpu.matmul %344, %345, %cst_111 {dimension_numbers = #tpu.dot_dimension_numbers<[1], [1], [0], [0], [0, 0, 1, 0], [], []>} : vector<16x16xf32>, vector<16x16xf32>, vector<16x16xf32> -> vector<16x16xf32>
    %348 = arith.addf %347, %11 : vector<16x16xf32>
    %cst_112 = arith.constant dense<0xFF800000> : vector<16xf32>
    %349 = vector.multi_reduction <maximumf>, %348, %cst_112 [1] : vector<16x16xf32> to vector<16xf32>
    %350 = vector.shape_cast %349 : vector<16xf32> to vector<16x1xf32>
    %351 = vector.broadcast %350 : vector<16x1xf32> to vector<16x16xf32>
    %352 = arith.subf %348, %351 : vector<16x16xf32>
    %353 = math.exp %352 : vector<16x16xf32>
    %cst_113 = arith.constant dense<0.000000e+00> : vector<16xf32>
    %354 = vector.multi_reduction <add>, %353, %cst_113 [1] : vector<16x16xf32> to vector<16xf32>
    %355 = vector.shape_cast %354 : vector<16xf32> to vector<16x1xf32>
    %356 = vector.broadcast %355 : vector<16x1xf32> to vector<16x16xf32>
    %357 = arith.divf %353, %356 : vector<16x16xf32>
    %cst_114 = arith.constant dense<0.000000e+00> : vector<16x16xf32>
    %358 = tpu.matmul %357, %346, %cst_114 {dimension_numbers = #tpu.dot_dimension_numbers<[1], [0], [0], [1], [0, 0, 1, 1], [], []>} : vector<16x16xf32>, vector<16x16xf32>, vector<16x16xf32> -> vector<16x16xf32>
    %359 = vector.extract_strided_slice %247 {offsets = [0, 112], sizes = [16, 16], strides = [1, 1]} : vector<16x128xf32> to vector<16x16xf32>
    %360 = vector.extract_strided_slice %250 {offsets = [0, 112], sizes = [16, 16], strides = [1, 1]} : vector<16x128xf32> to vector<16x16xf32>
    %361 = vector.extract_strided_slice %253 {offsets = [0, 112], sizes = [16, 16], strides = [1, 1]} : vector<16x128xf32> to vector<16x16xf32>
    %cst_115 = arith.constant dense<0.000000e+00> : vector<16x16xf32>
    %362 = tpu.matmul %359, %360, %cst_115 {dimension_numbers = #tpu.dot_dimension_numbers<[1], [1], [0], [0], [0, 0, 1, 0], [], []>} : vector<16x16xf32>, vector<16x16xf32>, vector<16x16xf32> -> vector<16x16xf32>
    %363 = arith.addf %362, %11 : vector<16x16xf32>
    %cst_116 = arith.constant dense<0xFF800000> : vector<16xf32>
    %364 = vector.multi_reduction <maximumf>, %363, %cst_116 [1] : vector<16x16xf32> to vector<16xf32>
    %365 = vector.shape_cast %364 : vector<16xf32> to vector<16x1xf32>
    %366 = vector.broadcast %365 : vector<16x1xf32> to vector<16x16xf32>
    %367 = arith.subf %363, %366 : vector<16x16xf32>
    %368 = math.exp %367 : vector<16x16xf32>
    %cst_117 = arith.constant dense<0.000000e+00> : vector<16xf32>
    %369 = vector.multi_reduction <add>, %368, %cst_117 [1] : vector<16x16xf32> to vector<16xf32>
    %370 = vector.shape_cast %369 : vector<16xf32> to vector<16x1xf32>
    %371 = vector.broadcast %370 : vector<16x1xf32> to vector<16x16xf32>
    %372 = arith.divf %368, %371 : vector<16x16xf32>
    %cst_118 = arith.constant dense<0.000000e+00> : vector<16x16xf32>
    %373 = tpu.matmul %372, %361, %cst_118 {dimension_numbers = #tpu.dot_dimension_numbers<[1], [0], [0], [1], [0, 0, 1, 1], [], []>} : vector<16x16xf32>, vector<16x16xf32>, vector<16x16xf32> -> vector<16x16xf32>
    %374 = tpu.concatenate %268, %283, %298, %313, %328, %343, %358, %373 in 1 : vector<16x16xf32>, vector<16x16xf32>, vector<16x16xf32>, vector<16x16xf32>, vector<16x16xf32>, vector<16x16xf32>, vector<16x16xf32>, vector<16x16xf32> -> vector<16x128xf32>
    %cst_119 = arith.constant dense<0.000000e+00> : vector<16x128xf32>
    %375 = tpu.matmul %374, %225, %cst_119 {dimension_numbers = #tpu.dot_dimension_numbers<[1], [0], [0], [1], [0, 0, 1, 1], [], []>} : vector<16x128xf32>, vector<128x128xf32>, vector<16x128xf32> -> vector<16x128xf32>
    %376 = vector.broadcast %235 : vector<1x128xf32> to vector<16x128xf32>
    %377 = arith.addf %375, %376 : vector<16x128xf32>
    %378 = arith.addf %221, %377 : vector<16x128xf32>
    %cst_120 = arith.constant dense<0.000000e+00> : vector<16xf32>
    %379 = vector.multi_reduction <add>, %378, %cst_120 [1] : vector<16x128xf32> to vector<16xf32>
    %380 = vector.shape_cast %379 : vector<16xf32> to vector<16x1xf32>
    %cst_121 = arith.constant 1.280000e+02 : f32
    %381 = vector.broadcast %cst_121 : f32 to vector<16x1xf32>
    %382 = arith.divf %380, %381 : vector<16x1xf32>
    %383 = vector.broadcast %382 : vector<16x1xf32> to vector<16x128xf32>
    %384 = arith.subf %378, %383 : vector<16x128xf32>
    %385 = arith.mulf %384, %384 : vector<16x128xf32>
    %cst_122 = arith.constant dense<0.000000e+00> : vector<16xf32>
    %386 = vector.multi_reduction <add>, %385, %cst_122 [1] : vector<16x128xf32> to vector<16xf32>
    %387 = vector.shape_cast %386 : vector<16xf32> to vector<16x1xf32>
    %cst_123 = arith.constant 1.280000e+02 : f32
    %388 = vector.broadcast %cst_123 : f32 to vector<16x1xf32>
    %389 = arith.divf %387, %388 : vector<16x1xf32>
    %390 = vector.broadcast %382 : vector<16x1xf32> to vector<16x128xf32>
    %391 = arith.subf %378, %390 : vector<16x128xf32>
    %cst_124 = arith.constant 9.99999974E-6 : f32
    %392 = vector.broadcast %cst_124 : f32 to vector<16x1xf32>
    %393 = arith.addf %389, %392 : vector<16x1xf32>
    %394 = math.rsqrt %393 : vector<16x1xf32>
    %395 = vector.broadcast %394 : vector<16x1xf32> to vector<16x128xf32>
    %396 = arith.mulf %391, %395 : vector<16x128xf32>
    %397 = vector.broadcast %236 : vector<1x128xf32> to vector<16x128xf32>
    %398 = arith.mulf %396, %397 : vector<16x128xf32>
    %399 = vector.broadcast %237 : vector<1x128xf32> to vector<16x128xf32>
    %400 = arith.addf %398, %399 : vector<16x128xf32>
    %cst_125 = arith.constant dense<0.000000e+00> : vector<16x128xf32>
    %401 = tpu.matmul %400, %227, %cst_125 {dimension_numbers = #tpu.dot_dimension_numbers<[1], [0], [0], [1], [0, 0, 1, 1], [], []>} : vector<16x128xf32>, vector<128x128xf32>, vector<16x128xf32> -> vector<16x128xf32>
    %402 = vector.broadcast %238 : vector<1x128xf32> to vector<16x128xf32>
    %403 = arith.addf %401, %402 : vector<16x128xf32>
    %cst_126 = arith.constant 0.000000e+00 : f32
    %404 = vector.broadcast %cst_126 : f32 to vector<16x128xf32>
    %405 = arith.maximumf %403, %404 : vector<16x128xf32>
    %cst_127 = arith.constant dense<0.000000e+00> : vector<16x128xf32>
    %406 = tpu.matmul %405, %229, %cst_127 {dimension_numbers = #tpu.dot_dimension_numbers<[1], [0], [0], [1], [0, 0, 1, 1], [], []>} : vector<16x128xf32>, vector<128x128xf32>, vector<16x128xf32> -> vector<16x128xf32>
    %407 = vector.broadcast %239 : vector<1x128xf32> to vector<16x128xf32>
    %408 = arith.addf %406, %407 : vector<16x128xf32>
    %409 = arith.addf %400, %408 : vector<16x128xf32>
    %cst_128 = arith.constant dense<0.000000e+00> : vector<16xf32>
    %410 = vector.multi_reduction <add>, %409, %cst_128 [1] : vector<16x128xf32> to vector<16xf32>
    %411 = vector.shape_cast %410 : vector<16xf32> to vector<16x1xf32>
    %cst_129 = arith.constant 1.280000e+02 : f32
    %412 = vector.broadcast %cst_129 : f32 to vector<16x1xf32>
    %413 = arith.divf %411, %412 : vector<16x1xf32>
    %414 = vector.broadcast %413 : vector<16x1xf32> to vector<16x128xf32>
    %415 = arith.subf %409, %414 : vector<16x128xf32>
    %416 = arith.mulf %415, %415 : vector<16x128xf32>
    %cst_130 = arith.constant dense<0.000000e+00> : vector<16xf32>
    %417 = vector.multi_reduction <add>, %416, %cst_130 [1] : vector<16x128xf32> to vector<16xf32>
    %418 = vector.shape_cast %417 : vector<16xf32> to vector<16x1xf32>
    %cst_131 = arith.constant 1.280000e+02 : f32
    %419 = vector.broadcast %cst_131 : f32 to vector<16x1xf32>
    %420 = arith.divf %418, %419 : vector<16x1xf32>
    %421 = vector.broadcast %413 : vector<16x1xf32> to vector<16x128xf32>
    %422 = arith.subf %409, %421 : vector<16x128xf32>
    %cst_132 = arith.constant 9.99999974E-6 : f32
    %423 = vector.broadcast %cst_132 : f32 to vector<16x1xf32>
    %424 = arith.addf %420, %423 : vector<16x1xf32>
    %425 = math.rsqrt %424 : vector<16x1xf32>
    %426 = vector.broadcast %425 : vector<16x1xf32> to vector<16x128xf32>
    %427 = arith.mulf %422, %426 : vector<16x128xf32>
    %428 = vector.broadcast %240 : vector<1x128xf32> to vector<16x128xf32>
    %429 = arith.mulf %427, %428 : vector<16x128xf32>
    %430 = vector.broadcast %241 : vector<1x128xf32> to vector<16x128xf32>
    %431 = arith.addf %429, %430 : vector<16x128xf32>
    %432 = vector.extract_strided_slice %431 {offsets = [0, 0], sizes = [1, 128], strides = [1, 1]} : vector<16x128xf32> to vector<1x128xf32>
    %c0_133 = arith.constant 0 : index
    %c0_134 = arith.constant 0 : index
    %433 = vector.load %arg10[%c0_133, %c0_134] : memref<8x128xf32, #tpu.memory_space<vmem>>, vector<1x128xf32>
    %c1_135 = arith.constant 1 : index
    %c0_136 = arith.constant 0 : index
    %434 = vector.load %arg10[%c1_135, %c0_136] : memref<8x128xf32, #tpu.memory_space<vmem>>, vector<1x128xf32>
    %cst_137 = arith.constant dense<0.000000e+00> : vector<1xf32>
    %435 = vector.multi_reduction <add>, %432, %cst_137 [1] : vector<1x128xf32> to vector<1xf32>
    %436 = vector.shape_cast %435 : vector<1xf32> to vector<1x1xf32>
    %cst_138 = arith.constant 1.280000e+02 : f32
    %437 = vector.broadcast %cst_138 : f32 to vector<1x1xf32>
    %438 = arith.divf %436, %437 : vector<1x1xf32>
    %439 = vector.broadcast %438 : vector<1x1xf32> to vector<1x128xf32>
    %440 = arith.subf %432, %439 : vector<1x128xf32>
    %441 = arith.mulf %440, %440 : vector<1x128xf32>
    %cst_139 = arith.constant dense<0.000000e+00> : vector<1xf32>
    %442 = vector.multi_reduction <add>, %441, %cst_139 [1] : vector<1x128xf32> to vector<1xf32>
    %443 = vector.shape_cast %442 : vector<1xf32> to vector<1x1xf32>
    %cst_140 = arith.constant 1.280000e+02 : f32
    %444 = vector.broadcast %cst_140 : f32 to vector<1x1xf32>
    %445 = arith.divf %443, %444 : vector<1x1xf32>
    %446 = vector.broadcast %438 : vector<1x1xf32> to vector<1x128xf32>
    %447 = arith.subf %432, %446 : vector<1x128xf32>
    %cst_141 = arith.constant 9.99999974E-6 : f32
    %448 = vector.broadcast %cst_141 : f32 to vector<1x1xf32>
    %449 = arith.addf %445, %448 : vector<1x1xf32>
    %450 = math.rsqrt %449 : vector<1x1xf32>
    %451 = vector.broadcast %450 : vector<1x1xf32> to vector<1x128xf32>
    %452 = arith.mulf %447, %451 : vector<1x128xf32>
    %453 = arith.mulf %452, %433 : vector<1x128xf32>
    %454 = arith.addf %453, %434 : vector<1x128xf32>
    %c0_142 = arith.constant 0 : index
    %c0_143 = arith.constant 0 : index
    %455 = vector.load %arg9[%c0_142, %c0_143] : memref<128x128xf32, #tpu.memory_space<vmem>>, vector<128x128xf32>
    %cst_144 = arith.constant dense<0.000000e+00> : vector<1x128xf32>
    %456 = tpu.matmul %454, %455, %cst_144 {dimension_numbers = #tpu.dot_dimension_numbers<[1], [0], [0], [1], [0, 0, 1, 1], [], []>} : vector<1x128xf32>, vector<128x128xf32>, vector<1x128xf32> -> vector<1x128xf32>
    %c2 = arith.constant 2 : index
    %c0_145 = arith.constant 0 : index
    %457 = vector.load %arg10[%c2, %c0_145] : memref<8x128xf32, #tpu.memory_space<vmem>>, vector<1x128xf32>
    %458 = arith.addf %456, %457 : vector<1x128xf32>
    %c0_146 = arith.constant 0 : index
    %c0_147 = arith.constant 0 : index
    %c0_148 = arith.constant 0 : index
    %459 = vector.load %arg11[%c0_146, %c0_147, %c0_148] : memref<1x1x128xf32, #tpu.memory_space<vmem>>, vector<1x1x128xf32>
    %460 = vector.shape_cast %459 : vector<1x1x128xf32> to vector<1x128xf32>
    %461 = vector.shape_cast %458 : vector<1x128xf32> to vector<1x1x128xf32>
    tpu.vector_store %arg11[%c0_146, %c0_147, %c0_148], %461 {strides = array<i32>} : memref<1x1x128xf32, #tpu.memory_space<vmem>>, vector<1x1x128xf32>,
    return
  }
  func.func @transform_0(%arg0: i32) -> (i32, i32, i32) {
    %c0_i32 = arith.constant 0 : i32
    %c0_i32_0 = arith.constant 0 : i32
    %c0_i32_1 = arith.constant 0 : i32
    return %arg0, %c0_i32, %c0_i32_0 : i32, i32, i32
  }
  func.func @transform_1(%arg0: i32) -> (i32, i32) {
    %c0_i32 = arith.constant 0 : i32
    %c0_i32_0 = arith.constant 0 : i32
    %c0_i32_1 = arith.constant 0 : i32
    return %c0_i32, %c0_i32_0 : i32, i32
  }
  func.func @transform_2(%arg0: i32) -> (i32, i32) {
    %c0_i32 = arith.constant 0 : i32
    %c0_i32_0 = arith.constant 0 : i32
    %c0_i32_1 = arith.constant 0 : i32
    return %c0_i32, %c0_i32_0 : i32, i32
  }
  func.func @transform_3(%arg0: i32) -> (i32, i32, i32) {
    %c0_i32 = arith.constant 0 : i32
    %c0_i32_0 = arith.constant 0 : i32
    %c0_i32_1 = arith.constant 0 : i32
    %c0_i32_2 = arith.constant 0 : i32
    return %c0_i32, %c0_i32_0, %c0_i32_1 : i32, i32, i32
  }
  func.func @transform_4(%arg0: i32) -> (i32, i32, i32) {
    %c0_i32 = arith.constant 0 : i32
    %c0_i32_0 = arith.constant 0 : i32
    %c0_i32_1 = arith.constant 0 : i32
    %c0_i32_2 = arith.constant 0 : i32
    return %c0_i32, %c0_i32_0, %c0_i32_1 : i32, i32, i32
  }
  func.func @transform_5(%arg0: i32) -> (i32, i32, i32) {
    %c0_i32 = arith.constant 0 : i32
    %c0_i32_0 = arith.constant 0 : i32
    %c0_i32_1 = arith.constant 0 : i32
    %c0_i32_2 = arith.constant 0 : i32
    return %c0_i32, %c0_i32_0, %c0_i32_1 : i32, i32, i32
  }
  func.func @transform_6(%arg0: i32) -> (i32, i32, i32) {
    %c0_i32 = arith.constant 0 : i32
    %c0_i32_0 = arith.constant 0 : i32
    %c0_i32_1 = arith.constant 0 : i32
    %c0_i32_2 = arith.constant 0 : i32
    return %c0_i32, %c0_i32_0, %c0_i32_1 : i32, i32, i32
  }
  func.func @transform_7(%arg0: i32) -> (i32, i32, i32) {
    %c0_i32 = arith.constant 0 : i32
    %c0_i32_0 = arith.constant 0 : i32
    %c0_i32_1 = arith.constant 0 : i32
    %c0_i32_2 = arith.constant 0 : i32
    return %c0_i32, %c0_i32_0, %c0_i32_1 : i32, i32, i32
  }
  func.func @transform_8(%arg0: i32) -> (i32, i32) {
    %c0_i32 = arith.constant 0 : i32
    %c0_i32_0 = arith.constant 0 : i32
    %c0_i32_1 = arith.constant 0 : i32
    return %c0_i32, %c0_i32_0 : i32, i32
  }
  func.func @transform_9(%arg0: i32) -> (i32, i32) {
    %c0_i32 = arith.constant 0 : i32
    %c0_i32_0 = arith.constant 0 : i32
    %c0_i32_1 = arith.constant 0 : i32
    return %c0_i32, %c0_i32_0 : i32, i32
  }
  func.func @transform_10(%arg0: i32) -> (i32, i32, i32) {
    %c0_i32 = arith.constant 0 : i32
    %c0_i32_0 = arith.constant 0 : i32
    %c0_i32_1 = arith.constant 0 : i32
    return %arg0, %c0_i32, %c0_i32_0 : i32, i32, i32
  }
}

</mosaic_0001>

<llo_original>
// kernel: tpu_custom_call.1
$region0: #{tpu_custom_call.1}
  #allocation0 [shape = 'u32[]', space=smem, size = 0x4, offset = 0x4, fixed_abs, tag = 'smem constant byte address 0x4 - core index']
  #allocation1 [shape = 'u32[144,128]{1,0:T(1,128)}', space=vmem, size = 0x12000, scoped, tag = 'internal scratch']
  %s0 = inlined_call_operand.hbm [shape: f32[2,16,256], index: 0, kind: input, shape index: {}]
  %s1 = inlined_call_operand.hbm [shape: f32[256,128], index: 1, kind: input, shape index: {}]
  %s2 = inlined_call_operand.hbm [shape: f32[16,128], index: 2, kind: input, shape index: {}]
  %s3 = inlined_call_operand.hbm [shape: f32[2,128,384], index: 3, kind: input, shape index: {}]
  %s4 = inlined_call_operand.hbm [shape: f32[2,128,128], index: 4, kind: input, shape index: {}]
  %s5 = inlined_call_operand.hbm [shape: f32[2,128,128], index: 5, kind: input, shape index: {}]
  %s6 = inlined_call_operand.hbm [shape: f32[2,128,128], index: 6, kind: input, shape index: {}]
  %s7 = inlined_call_operand.hbm [shape: f32[2,16,128], index: 7, kind: input, shape index: {}]
  %s8 = inlined_call_operand.hbm [shape: f32[128,128], index: 8, kind: input, shape index: {}]
  %s9 = inlined_call_operand.vmem [shape: f32[8,128], index: 9, kind: input, shape index: {}]
  %s10 = inlined_call_operand.hbm [shape: f32[2,1,128], index: 10, kind: output, shape index: {}]
  %s11 = sld [smem:[#allocation0]]
  $region109: #{tpu_custom_call.1} parent=0
    _
  %s13 = ssub.s32 1, %s11
  %s14 = scalar_select 0, %s13, %s11
  $region1: #{tpu_custom_call.1} parent=0
    #allocation2 [shape = 'u8[32768]{0}', space=vmem, size = 0x8000, scoped, tag = 'input window, operand 0']
    #allocation3 [shape = 's32[2]{0}', space=sflag, size = 0x8, scoped, tag = 'scoped memory for tpu_custom_call.1']
    #allocation4 [shape = 's32[2]{0}', space=sflag, size = 0x8, scoped, tag = 'scoped memory for tpu_custom_call.1']
    #allocation5 [shape = 'u8[131072]{0}', space=vmem, size = 0x20000, scoped, tag = 'input window, operand 1, single buffered']
    #allocation6 [shape = 's32[1]{0}', space=sflag, size = 0x4, scoped, tag = 'scoped memory for tpu_custom_call.1']
    #allocation7 [shape = 'u8[8192]{0}', space=vmem, size = 0x2000, scoped, tag = 'input window, operand 2, single buffered']
    #allocation8 [shape = 'u8[393216]{0}', space=vmem, size = 0x60000, scoped, tag = 'input window, operand 3, single buffered']
    #allocation9 [shape = 's32[1]{0}', space=sflag, size = 0x4, scoped, tag = 'scoped memory for tpu_custom_call.1']
    #allocation10 [shape = 'u8[131072]{0}', space=vmem, size = 0x20000, scoped, tag = 'input window, operand 4, single buffered']
    #allocation11 [shape = 'u8[131072]{0}', space=vmem, size = 0x20000, scoped, tag = 'input window, operand 5, single buffered']
    #allocation12 [shape = 's32[1]{0}', space=sflag, size = 0x4, scoped, tag = 'scoped memory for tpu_custom_call.1']
    #allocation13 [shape = 'u8[131072]{0}', space=vmem, size = 0x20000, scoped, tag = 'input window, operand 6, single buffered']
    #allocation14 [shape = 'u8[16384]{0}', space=vmem, size = 0x4000, scoped, tag = 'input window, operand 7, single buffered']
    #allocation15 [shape = 's32[1]{0}', space=sflag, size = 0x4, scoped, tag = 'scoped memory for tpu_custom_call.1']
    #allocation16 [shape = 'u8[65536]{0}', space=vmem, size = 0x10000, scoped, tag = 'input window, operand 8, single buffered']
    #allocation17 [shape = 'u8[1024]{0}', space=vmem, size = 0x400, scoped, tag = 'output window, operand 0']
    %15 = vsyncpa [#allocation3], 0
    %s16 = scalar_lea.sflag [#allocation3], 1
    %17 = vsyncpa %s16, 0
    %18 = vsyncpa [#allocation6], 0
    %19 = vsyncpa [#allocation9], 0
    %20 = vsyncpa [#allocation12], 0
    %21 = vsyncpa [#allocation15], 0
    %22 = vsyncpa [#allocation4], 0
    %s23 = scalar_lea.sflag [#allocation4], 1
    %24 = vsyncpa %s23, 0
    loop: start=0, step=1, limit=4
    $region2: #{tpu_custom_call.1} parent=1 // loop_pre_header
      _
    $region3: #{tpu_custom_call.1} parent=1 // loop_header
      %s26 = sphi 0, %s30
      %p27 = scmp.ge.s32.totalorder %s26, 4
      %s36 = sphi 0, %s38
      %s39 = sphi 0, %s36
      %s40 = sphi 0, %s39
      %s56 = sphi 0, %s40
      %s60 = sphi 0, %s60
      %s62 = sphi 0, %s60
      %s63 = sphi 0, %s62
      %s77 = sphi 0, %s63
      %s81 = sphi 0, %s81
      %s83 = sphi 0, %s81
      %s84 = sphi 0, %s83
      %s98 = sphi 0, %s84
      %s102 = sphi 0, %s102
      %s104 = sphi 0, %s102
      %s105 = sphi 0, %s104
      %s119 = sphi 0, %s105
      %s123 = sphi 0, %s123
      %s125 = sphi 0, %s123
      %s126 = sphi 0, %s125
      %s140 = sphi 0, %s126
      %s144 = sphi 0, %s144
      %s146 = sphi 0, %s144
      %s147 = sphi 0, %s146
      %s161 = sphi 0, %s147
      %s165 = sphi 0, %s165
      %s167 = sphi 0, %s165
      %s168 = sphi 0, %s167
      %s182 = sphi 0, %s168
      %s186 = sphi 0, %s186
      %s188 = sphi 0, %s186
      %s189 = sphi 0, %s188
      %s203 = sphi 0, %s189
      %s207 = sphi 0, %s207
      %s209 = sphi 0, %s207
      %s210 = sphi 0, %s209
      %s224 = sphi 0, %s210
      %s228 = sphi 0, %s228
      %s230 = sphi 0, %s228
      %s231 = sphi 0, %s230
      %s245 = sphi 0, %s231
      %s251 = sphi 0, %s253
      %s254 = sphi 0, %s251
      %s255 = sphi 0, %s254
      %s271 = sphi 0, %s255
    $region4: #{tpu_custom_call.1} parent=1 // loop_header_branch
      %29 = sbr.rel (%p27) target = $region8
    $region5: #{tpu_custom_call.1} parent=1 // loop_body
      %s31 = ssub.s32 %s26, 1
      %s32 = ssub.s32 %s26, 2
      %s33 = sadd.s32 %s26, 1
      %s34 = ssub.s32 %s26, %s33
      %p35 = scmp.eq.s32.totalorder %s34, 0
      %s37 = sadd.s32 %s36, 1
      %s38 = scalar_select %p35, %s36, %s37
      %p41 = pneg %p35
      %p42 = scmp.eq.s32.totalorder %s26, 1
      %p43 = por %p41, %p42
      %p44 = scmp.ne.s32.totalorder %s36, %s39
      %p45 = scmp.eq.s32.totalorder %s26, 0
      %p46 = por %p44, %p45
      %p47 = scmp.ne.s32.totalorder %s36, %s39
      %p48 = scmp.eq.s32.totalorder %s31, 1
      %p49 = por %p47, %p48
      %p50 = scmp.ne.s32.totalorder %s39, %s40
      %p51 = scmp.eq.s32.totalorder %s31, 0
      %p52 = por %p50, %p51
      %p53 = scmp.ne.s32.totalorder %s39, %s40
      %p54 = scmp.eq.s32.totalorder %s32, 1
      %p55 = por %p53, %p54
      %p57 = scmp.ne.s32.totalorder %s40, %s56
      %p58 = scmp.eq.s32.totalorder %s32, 0
      %p59 = por %p57, %p58
      %s61 = sadd.s32 %s60, 1
      %p64 = scmp.eq.s32.totalorder %s26, 1
      %p65 = scmp.ne.s32.totalorder %s60, %s62
      %p66 = scmp.eq.s32.totalorder %s26, 0
      %p67 = por %p65, %p66
      %p68 = scmp.ne.s32.totalorder %s60, %s62
      %p69 = scmp.eq.s32.totalorder %s31, 1
      %p70 = por %p68, %p69
      %p71 = scmp.ne.s32.totalorder %s62, %s63
      %p72 = scmp.eq.s32.totalorder %s31, 0
      %p73 = por %p71, %p72
      %p74 = scmp.ne.s32.totalorder %s62, %s63
      %p75 = scmp.eq.s32.totalorder %s32, 1
      %p76 = por %p74, %p75
      %p78 = scmp.ne.s32.totalorder %s63, %s77
      %p79 = scmp.eq.s32.totalorder %s32, 0
      %p80 = por %p78, %p79
      %s82 = sadd.s32 %s81, 1
      %p85 = scmp.eq.s32.totalorder %s26, 1
      %p86 = scmp.ne.s32.totalorder %s81, %s83
      %p87 = scmp.eq.s32.totalorder %s26, 0
      %p88 = por %p86, %p87
      %p89 = scmp.ne.s32.totalorder %s81, %s83
      %p90 = scmp.eq.s32.totalorder %s31, 1
      %p91 = por %p89, %p90
      %p92 = scmp.ne.s32.totalorder %s83, %s84
      %p93 = scmp.eq.s32.totalorder %s31, 0
      %p94 = por %p92, %p93
      %p95 = scmp.ne.s32.totalorder %s83, %s84
      %p96 = scmp.eq.s32.totalorder %s32, 1
      %p97 = por %p95, %p96
      %p99 = scmp.ne.s32.totalorder %s84, %s98
      %p100 = scmp.eq.s32.totalorder %s32, 0
      %p101 = por %p99, %p100
      %s103 = sadd.s32 %s102, 1
      %p106 = scmp.eq.s32.totalorder %s26, 1
      %p107 = scmp.ne.s32.totalorder %s102, %s104
      %p108 = scmp.eq.s32.totalorder %s26, 0
      %p109 = por %p107, %p108
      %p110 = scmp.ne.s32.totalorder %s102, %s104
      %p111 = scmp.eq.s32.totalorder %s31, 1
      %p112 = por %p110, %p111
      %p113 = scmp.ne.s32.totalorder %s104, %s105
      %p114 = scmp.eq.s32.totalorder %s31, 0
      %p115 = por %p113, %p114
      %p116 = scmp.ne.s32.totalorder %s104, %s105
      %p117 = scmp.eq.s32.totalorder %s32, 1
      %p118 = por %p116, %p117
      %p120 = scmp.ne.s32.totalorder %s105, %s119
      %p121 = scmp.eq.s32.totalorder %s32, 0
      %p122 = por %p120, %p121
      %s124 = sadd.s32 %s123, 1
      %p127 = scmp.eq.s32.totalorder %s26, 1
      %p128 = scmp.ne.s32.totalorder %s123, %s125
      %p129 = scmp.eq.s32.totalorder %s26, 0
      %p130 = por %p128, %p129
      %p131 = scmp.ne.s32.totalorder %s123, %s125
      %p132 = scmp.eq.s32.totalorder %s31, 1
      %p133 = por %p131, %p132
      %p134 = scmp.ne.s32.totalorder %s125, %s126
      %p135 = scmp.eq.s32.totalorder %s31, 0
      %p136 = por %p134, %p135
      %p137 = scmp.ne.s32.totalorder %s125, %s126
      %p138 = scmp.eq.s32.totalorder %s32, 1
      %p139 = por %p137, %p138
      %p141 = scmp.ne.s32.totalorder %s126, %s140
      %p142 = scmp.eq.s32.totalorder %s32, 0
      %p143 = por %p141, %p142
      %s145 = sadd.s32 %s144, 1
      %p148 = scmp.eq.s32.totalorder %s26, 1
      %p149 = scmp.ne.s32.totalorder %s144, %s146
      %p150 = scmp.eq.s32.totalorder %s26, 0
      %p151 = por %p149, %p150
      %p152 = scmp.ne.s32.totalorder %s144, %s146
      %p153 = scmp.eq.s32.totalorder %s31, 1
      %p154 = por %p152, %p153
      %p155 = scmp.ne.s32.totalorder %s146, %s147
      %p156 = scmp.eq.s32.totalorder %s31, 0
      %p157 = por %p155, %p156
      %p158 = scmp.ne.s32.totalorder %s146, %s147
      %p159 = scmp.eq.s32.totalorder %s32, 1
      %p160 = por %p158, %p159
      %p162 = scmp.ne.s32.totalorder %s147, %s161
      %p163 = scmp.eq.s32.totalorder %s32, 0
      %p164 = por %p162, %p163
      %s166 = sadd.s32 %s165, 1
      %p169 = scmp.eq.s32.totalorder %s26, 1
      %p170 = scmp.ne.s32.totalorder %s165, %s167
      %p171 = scmp.eq.s32.totalorder %s26, 0
      %p172 = por %p170, %p171
      %p173 = scmp.ne.s32.totalorder %s165, %s167
      %p174 = scmp.eq.s32.totalorder %s31, 1
      %p175 = por %p173, %p174
      %p176 = scmp.ne.s32.totalorder %s167, %s168
      %p177 = scmp.eq.s32.totalorder %s31, 0
      %p178 = por %p176, %p177
      %p179 = scmp.ne.s32.totalorder %s167, %s168
      %p180 = scmp.eq.s32.totalorder %s32, 1
      %p181 = por %p179, %p180
      %p183 = scmp.ne.s32.totalorder %s168, %s182
      %p184 = scmp.eq.s32.totalorder %s32, 0
      %p185 = por %p183, %p184
      %s187 = sadd.s32 %s186, 1
      %p190 = scmp.eq.s32.totalorder %s26, 1
      %p191 = scmp.ne.s32.totalorder %s186, %s188
      %p192 = scmp.eq.s32.totalorder %s26, 0
      %p193 = por %p191, %p192
      %p194 = scmp.ne.s32.totalorder %s186, %s188
      %p195 = scmp.eq.s32.totalorder %s31, 1
      %p196 = por %p194, %p195
      %p197 = scmp.ne.s32.totalorder %s188, %s189
      %p198 = scmp.eq.s32.totalorder %s31, 0
      %p199 = por %p197, %p198
      %p200 = scmp.ne.s32.totalorder %s188, %s189
      %p201 = scmp.eq.s32.totalorder %s32, 1
      %p202 = por %p200, %p201
      %p204 = scmp.ne.s32.totalorder %s189, %s203
      %p205 = scmp.eq.s32.totalorder %s32, 0
      %p206 = por %p204, %p205
      %s208 = sadd.s32 %s207, 1
      %p211 = scmp.eq.s32.totalorder %s26, 1
      %p212 = scmp.ne.s32.totalorder %s207, %s209
      %p213 = scmp.eq.s32.totalorder %s26, 0
      %p214 = por %p212, %p213
      %p215 = scmp.ne.s32.totalorder %s207, %s209
      %p216 = scmp.eq.s32.totalorder %s31, 1
      %p217 = por %p215, %p216
      %p218 = scmp.ne.s32.totalorder %s209, %s210
      %p219 = scmp.eq.s32.totalorder %s31, 0
      %p220 = por %p218, %p219
      %p221 = scmp.ne.s32.totalorder %s209, %s210
      %p222 = scmp.eq.s32.totalorder %s32, 1
      %p223 = por %p221, %p222
      %p225 = scmp.ne.s32.totalorder %s210, %s224
      %p226 = scmp.eq.s32.totalorder %s32, 0
      %p227 = por %p225, %p226
      %s229 = sadd.s32 %s228, 1
      %p232 = scmp.eq.s32.totalorder %s26, 1
      %p233 = scmp.ne.s32.totalorder %s228, %s230
      %p234 = scmp.eq.s32.totalorder %s26, 0
      %p235 = por %p233, %p234
      %p236 = scmp.ne.s32.totalorder %s228, %s230
      %p237 = scmp.eq.s32.totalorder %s31, 1
      %p238 = por %p236, %p237
      %p239 = scmp.ne.s32.totalorder %s230, %s231
      %p240 = scmp.eq.s32.totalorder %s31, 0
      %p241 = por %p239, %p240
      %p242 = scmp.ne.s32.totalorder %s230, %s231
      %p243 = scmp.eq.s32.totalorder %s32, 1
      %p244 = por %p242, %p243
      %p246 = scmp.ne.s32.totalorder %s231, %s245
      %p247 = scmp.eq.s32.totalorder %s32, 0
      %p248 = por %p246, %p247
      %s249 = ssub.s32 %s26, %s33
      %p250 = scmp.eq.s32.totalorder %s249, 0
      %s252 = sadd.s32 %s251, 1
      %s253 = scalar_select %p250, %s251, %s252
      %p256 = pneg %p250
      %p257 = scmp.eq.s32.totalorder %s26, 1
      %p258 = por %p256, %p257
      %p259 = scmp.ne.s32.totalorder %s251, %s254
      %p260 = scmp.eq.s32.totalorder %s26, 0
      %p261 = por %p259, %p260
      %p262 = scmp.ne.s32.totalorder %s251, %s254
      %p263 = scmp.eq.s32.totalorder %s31, 1
      %p264 = por %p262, %p263
      %p265 = scmp.ne.s32.totalorder %s254, %s255
      %p266 = scmp.eq.s32.totalorder %s31, 0
      %p267 = por %p265, %p266
      %p268 = scmp.ne.s32.totalorder %s254, %s255
      %p269 = scmp.eq.s32.totalorder %s32, 1
      %p270 = por %p268, %p269
      %p272 = scmp.ne.s32.totalorder %s255, %s271
      %p273 = scmp.eq.s32.totalorder %s32, 0
      %p274 = por %p272, %p273
      %p275 = scmp.le.s32.totalorder 1, %s26
      %p276 = scmp.lt.s32.totalorder %s26, 3
      %p277 = pnand %p275, %p276
      %p278 = pneg %p277
      // Predicated region
      $region9: #{tpu_custom_call.1} parent=5 // pred_check
        _
      $region10: #{tpu_custom_call.1} parent=5 // pred_check_branch
        %280 = sbr.rel (%p277) target = $region12
      $region11: #{tpu_custom_call.1} parent=5 // pred_region
        %s281 = ssub.s32 %s26, 1
        // Predicated region
        $region13: #{tpu_custom_call.1} parent=11 // pred_check
          %p282 = pneg %p73
        $region14: #{tpu_custom_call.1} parent=11 // pred_check_branch
          %284 = sbr.rel (%p282) target = $region16
        $region15: #{tpu_custom_call.1} parent=11 // pred_region
          %s286 = ssub.s32 4096, 4096
          %287 = vsyncadd [#allocation6], %s286
          %s288 = sshll.u32 [#allocation5], 4
          %s289 = int_to_ptr.vmem [resolvable:$true] %s288
          %294 = dma.hbm_to_vmem [thread:$0]  %s1, 4096, %s289, [#allocation6], 128, 128, 8
        $region16: #{tpu_custom_call.1} parent=11 // pred_fallthru
          _
        // Predicated region
        $region17: #{tpu_custom_call.1} parent=11 // pred_check
          %p295 = pneg %p94
        $region18: #{tpu_custom_call.1} parent=11 // pred_check_branch
          %297 = sbr.rel (%p295) target = $region20
        $region19: #{tpu_custom_call.1} parent=11 // pred_region
          %s299 = ssub.s32 256, 256
          %300 = vsyncadd [#allocation6], %s299
          %s301 = sshll.u32 [#allocation7], 4
          %s302 = int_to_ptr.vmem [resolvable:$true] %s301
          %307 = dma.hbm_to_vmem [thread:$0]  %s2, 256, %s302, [#allocation6], 128, 128, 8
        $region20: #{tpu_custom_call.1} parent=11 // pred_fallthru
          _
        // Predicated region
        $region21: #{tpu_custom_call.1} parent=11 // pred_check
          %p308 = pneg %p115
        $region22: #{tpu_custom_call.1} parent=11 // pred_check_branch
          %310 = sbr.rel (%p308) target = $region24
        $region23: #{tpu_custom_call.1} parent=11 // pred_region
          %s312 = ssub.s32 12288, 12288
          %313 = vsyncadd [#allocation9], %s312
          %s314 = sshll.u32 [#allocation8], 4
          %s315 = int_to_ptr.vmem [resolvable:$true] %s314
          %320 = dma.hbm_to_vmem [thread:$0]  %s3, 12288, %s315, [#allocation9], 384, 384, 24
        $region24: #{tpu_custom_call.1} parent=11 // pred_fallthru
          _
        // Predicated region
        $region25: #{tpu_custom_call.1} parent=11 // pred_check
          %p321 = pneg %p136
        $region26: #{tpu_custom_call.1} parent=11 // pred_check_branch
          %323 = sbr.rel (%p321) target = $region28
        $region27: #{tpu_custom_call.1} parent=11 // pred_region
          %s325 = ssub.s32 4096, 4096
          %326 = vsyncadd [#allocation9], %s325
          %s327 = sshll.u32 [#allocation10], 4
          %s328 = int_to_ptr.vmem [resolvable:$true] %s327
          %333 = dma.hbm_to_vmem [thread:$0]  %s4, 4096, %s328, [#allocation9], 128, 128, 8
        $region28: #{tpu_custom_call.1} parent=11 // pred_fallthru
          _
        // Predicated region
        $region29: #{tpu_custom_call.1} parent=11 // pred_check
          %p334 = pneg %p157
        $region30: #{tpu_custom_call.1} parent=11 // pred_check_branch
          %336 = sbr.rel (%p334) target = $region32
        $region31: #{tpu_custom_call.1} parent=11 // pred_region
          %s338 = ssub.s32 4096, 4096
          %339 = vsyncadd [#allocation12], %s338
          %s340 = sshll.u32 [#allocation11], 4
          %s341 = int_to_ptr.vmem [resolvable:$true] %s340
          %346 = dma.hbm_to_vmem [thread:$0]  %s5, 4096, %s341, [#allocation12], 128, 128, 8
        $region32: #{tpu_custom_call.1} parent=11 // pred_fallthru
          _
        // Predicated region
        $region33: #{tpu_custom_call.1} parent=11 // pred_check
          %p347 = pneg %p178
        $region34: #{tpu_custom_call.1} parent=11 // pred_check_branch
          %349 = sbr.rel (%p347) target = $region36
        $region35: #{tpu_custom_call.1} parent=11 // pred_region
          %s351 = ssub.s32 4096, 4096
          %352 = vsyncadd [#allocation12], %s351
          %s353 = sshll.u32 [#allocation13], 4
          %s354 = int_to_ptr.vmem [resolvable:$true] %s353
          %359 = dma.hbm_to_vmem [thread:$0]  %s6, 4096, %s354, [#allocation12], 128, 128, 8
        $region36: #{tpu_custom_call.1} parent=11 // pred_fallthru
          _
        // Predicated region
        $region37: #{tpu_custom_call.1} parent=11 // pred_check
          %p360 = pneg %p199
        $region38: #{tpu_custom_call.1} parent=11 // pred_check_branch
          %362 = sbr.rel (%p360) target = $region40
        $region39: #{tpu_custom_call.1} parent=11 // pred_region
          %s364 = ssub.s32 512, 512
          %365 = vsyncadd [#allocation15], %s364
          %s366 = sshll.u32 [#allocation14], 4
          %s367 = int_to_ptr.vmem [resolvable:$true] %s366
          %372 = dma.hbm_to_vmem [thread:$0]  %s7, 512, %s367, [#allocation15], 128, 128, 8
        $region40: #{tpu_custom_call.1} parent=11 // pred_fallthru
          _
        // Predicated region
        $region41: #{tpu_custom_call.1} parent=11 // pred_check
          %p373 = pneg %p220
        $region42: #{tpu_custom_call.1} parent=11 // pred_check_branch
          %375 = sbr.rel (%p373) target = $region44
        $region43: #{tpu_custom_call.1} parent=11 // pred_region
          %s377 = ssub.s32 2048, 2048
          %378 = vsyncadd [#allocation15], %s377
          %s379 = sshll.u32 [#allocation16], 4
          %s380 = int_to_ptr.vmem [resolvable:$true] %s379
          %385 = dma.hbm_to_vmem [thread:$0]  %s8, 2048, %s380, [#allocation15], 128, 128, 8
        $region44: #{tpu_custom_call.1} parent=11 // pred_fallthru
          _
        // Predicated region
        $region45: #{tpu_custom_call.1} parent=11 // pred_check
          %p386 = pneg %p241
        $region46: #{tpu_custom_call.1} parent=11 // pred_check_branch
          %388 = sbr.rel (%p386) target = $region48
        $region47: #{tpu_custom_call.1} parent=11 // pred_region
          _
        $region48: #{tpu_custom_call.1} parent=11 // pred_fallthru
          _
      $region12: #{tpu_custom_call.1} parent=5 // pred_fallthru
        _
      %p389 = scmp.lt.s32.totalorder %s26, 2
      // Predicated region
      $region49: #{tpu_custom_call.1} parent=5 // pred_check
        %p390 = pneg %p389
      $region50: #{tpu_custom_call.1} parent=5 // pred_check_branch
        %392 = sbr.rel (%p390) target = $region52
      $region51: #{tpu_custom_call.1} parent=5 // pred_region
        // Predicated region
        $region53: #{tpu_custom_call.1} parent=51 // pred_check
          %p393 = pneg %p46
        $region54: #{tpu_custom_call.1} parent=51 // pred_check_branch
          %395 = sbr.rel (%p393) target = $region56
        $region55: #{tpu_custom_call.1} parent=51 // pred_region
          %s396 = sand.u32 %s36, 1
          %s397 = scalar_lea.sflag [#allocation3], %s396
          %s398 = sand.u32 %s36, 1
          %s399 = smul.addr %s398, 32
          %s400 = scalar_lea.vmem [#allocation2], %s399
          %s402 = ssub.s32 512, 512
          %403 = vsyncadd %s397, %s402
          %s404 = smul.addr %s26, 4
          %s405 = smul.addr %s404, 128
          %s406 = scalar_lea.hbm %s0, %s405
          %s407 = sshll.u32 %s400, 4
          %s408 = int_to_ptr.vmem [resolvable:$true] %s407
          %413 = dma.hbm_to_vmem [thread:$0]  %s406, 512, %s408, %s397, 256, 256, 16
        $region56: #{tpu_custom_call.1} parent=51 // pred_fallthru
          _
      $region52: #{tpu_custom_call.1} parent=5 // pred_fallthru
        _
      %p414 = scmp.le.s32.totalorder 1, %s26
      %p415 = scmp.lt.s32.totalorder %s26, 3
      %p416 = pnand %p414, %p415
      %p417 = pneg %p416
      // Predicated region
      $region57: #{tpu_custom_call.1} parent=5 // pred_check
        _
      $region58: #{tpu_custom_call.1} parent=5 // pred_check_branch
        %419 = sbr.rel (%p416) target = $region60
      $region59: #{tpu_custom_call.1} parent=5 // pred_region
        %s420 = ssub.s32 %s26, 1
        %s421 = sand.u32 %s39, 1
        %s422 = scalar_lea.sflag [#allocation3], %s421
        %s423 = sand.u32 %s39, 1
        %s424 = smul.addr %s423, 32
        %s425 = scalar_lea.vmem [#allocation2], %s424
        // Predicated region
        $region61: #{tpu_custom_call.1} parent=59 // pred_check
          %p426 = pneg %p52
        $region62: #{tpu_custom_call.1} parent=59 // pred_check_branch
          %428 = sbr.rel (%p426) target = $region64
        $region63: #{tpu_custom_call.1} parent=59 // pred_region
          %429 = dma.done %s422, 512
        $region64: #{tpu_custom_call.1} parent=59 // pred_fallthru
          _
        // Predicated region
        $region65: #{tpu_custom_call.1} parent=59 // pred_check
          %p430 = pneg %p73
        $region66: #{tpu_custom_call.1} parent=59 // pred_check_branch
          %432 = sbr.rel (%p430) target = $region68
        $region67: #{tpu_custom_call.1} parent=59 // pred_region
          %433 = dma.done [#allocation6], 4096
        $region68: #{tpu_custom_call.1} parent=59 // pred_fallthru
          _
        // Predicated region
        $region69: #{tpu_custom_call.1} parent=59 // pred_check
          %p434 = pneg %p94
        $region70: #{tpu_custom_call.1} parent=59 // pred_check_branch
          %436 = sbr.rel (%p434) target = $region72
        $region71: #{tpu_custom_call.1} parent=59 // pred_region
          %437 = dma.done [#allocation6], 256
        $region72: #{tpu_custom_call.1} parent=59 // pred_fallthru
          _
        // Predicated region
        $region73: #{tpu_custom_call.1} parent=59 // pred_check
          %p438 = pneg %p115
        $region74: #{tpu_custom_call.1} parent=59 // pred_check_branch
          %440 = sbr.rel (%p438) target = $region76
        $region75: #{tpu_custom_call.1} parent=59 // pred_region
          %441 = dma.done [#allocation9], 12288
        $region76: #{tpu_custom_call.1} parent=59 // pred_fallthru
          _
        // Predicated region
        $region77: #{tpu_custom_call.1} parent=59 // pred_check
          %p442 = pneg %p136
        $region78: #{tpu_custom_call.1} parent=59 // pred_check_branch
          %444 = sbr.rel (%p442) target = $region80
        $region79: #{tpu_custom_call.1} parent=59 // pred_region
          %445 = dma.done [#allocation9], 4096
        $region80: #{tpu_custom_call.1} parent=59 // pred_fallthru
          _
        // Predicated region
        $region81: #{tpu_custom_call.1} parent=59 // pred_check
          %p446 = pneg %p157
        $region82: #{tpu_custom_call.1} parent=59 // pred_check_branch
          %448 = sbr.rel (%p446) target = $region84
        $region83: #{tpu_custom_call.1} parent=59 // pred_region
          %449 = dma.done [#allocation12], 4096
        $region84: #{tpu_custom_call.1} parent=59 // pred_fallthru
          _
        // Predicated region
        $region85: #{tpu_custom_call.1} parent=59 // pred_check
          %p450 = pneg %p178
        $region86: #{tpu_custom_call.1} parent=59 // pred_check_branch
          %452 = sbr.rel (%p450) target = $region88
        $region87: #{tpu_custom_call.1} parent=59 // pred_region
          %453 = dma.done [#allocation12], 4096
        $region88: #{tpu_custom_call.1} parent=59 // pred_fallthru
          _
        // Predicated region
        $region89: #{tpu_custom_call.1} parent=59 // pred_check
          %p454 = pneg %p199
        $region90: #{tpu_custom_call.1} parent=59 // pred_check_branch
          %456 = sbr.rel (%p454) target = $region92
        $region91: #{tpu_custom_call.1} parent=59 // pred_region
          %457 = dma.done [#allocation15], 512
        $region92: #{tpu_custom_call.1} parent=59 // pred_fallthru
          _
        // Predicated region
        $region93: #{tpu_custom_call.1} parent=59 // pred_check
          %p458 = pneg %p220
        $region94: #{tpu_custom_call.1} parent=59 // pred_check_branch
          %460 = sbr.rel (%p458) target = $region96
        $region95: #{tpu_custom_call.1} parent=59 // pred_region
          %461 = dma.done [#allocation15], 2048
        $region96: #{tpu_custom_call.1} parent=59 // pred_fallthru
          _
        %s462 = sand.u32 %s39, 1
        %s463 = scalar_lea.sflag [#allocation3], %s462
        %s464 = sand.u32 %s39, 1
        %s465 = smul.addr %s464, 32
        %s466 = scalar_lea.vmem [#allocation2], %s465
        %p467 = pneg %p52
        %p468 = pneg %p49
        %p469 = pneg %p73
        %p470 = pneg %p70
        %p471 = pneg %p94
        %p472 = pneg %p91
        %p473 = pneg %p115
        %p474 = pneg %p112
        %p475 = pneg %p136
        %p476 = pneg %p133
        %p477 = pneg %p157
        %p478 = pneg %p154
        %p479 = pneg %p178
        %p480 = pneg %p175
        %p481 = pneg %p199
        %p482 = pneg %p196
        %p483 = pneg %p220
        %p484 = pneg %p217
        %p485 = pneg %p241
        %p486 = pneg %p238
        %p487 = pneg %p267
        %p488 = pneg %p264
        %s489 = sand.u32 %s254, 1
        %s490 = scalar_lea.sflag [#allocation4], %s489
        %s491 = sand.u32 %s254, 1
        %s492 = scalar_lea.vmem [#allocation17], %s491
        %v493 = vld [vmem:[%s425] sm:$0xff]
        %v494 = vld [vmem:[%s425 + $0x8] sm:$0xff]
        %v495 = vld [vmem:[%s425 + $0x10] sm:$0xff]
        %v496 = vld [vmem:[%s425 + $0x18] sm:$0xff]
        %v497 = vld [vmem:[#allocation5] sm:$0xff]
        %v498 = vld [vmem:[#allocation5 + $0x8] sm:$0xff]
        %v499 = vld [vmem:[#allocation5 + $0x10] sm:$0xff]
        %v500 = vld [vmem:[#allocation5 + $0x18] sm:$0xff]
        %v501 = vld [vmem:[#allocation5 + $0x20] sm:$0xff]
        %v502 = vld [vmem:[#allocation5 + $0x28] sm:$0xff]
        %v503 = vld [vmem:[#allocation5 + $0x30] sm:$0xff]
        %v504 = vld [vmem:[#allocation5 + $0x38] sm:$0xff]
        %v505 = vld [vmem:[#allocation5 + $0x40] sm:$0xff]
        %v506 = vld [vmem:[#allocation5 + $0x48] sm:$0xff]
        %v507 = vld [vmem:[#allocation5 + $0x50] sm:$0xff]
        %v508 = vld [vmem:[#allocation5 + $0x58] sm:$0xff]
        %v509 = vld [vmem:[#allocation5 + $0x60] sm:$0xff]
        %v510 = vld [vmem:[#allocation5 + $0x68] sm:$0xff]
        %v511 = vld [vmem:[#allocation5 + $0x70] sm:$0xff]
        %v512 = vld [vmem:[#allocation5 + $0x78] sm:$0xff]
        %v513 = vld [vmem:[#allocation5 + $0x80] sm:$0xff]
        %v514 = vld [vmem:[#allocation5 + $0x88] sm:$0xff]
        %v515 = vld [vmem:[#allocation5 + $0x90] sm:$0xff]
        %v516 = vld [vmem:[#allocation5 + $0x98] sm:$0xff]
        %v517 = vld [vmem:[#allocation5 + $0xa0] sm:$0xff]
        %v518 = vld [vmem:[#allocation5 + $0xa8] sm:$0xff]
        %v519 = vld [vmem:[#allocation5 + $0xb0] sm:$0xff]
        %v520 = vld [vmem:[#allocation5 + $0xb8] sm:$0xff]
        %v521 = vld [vmem:[#allocation5 + $0xc0] sm:$0xff]
        %v522 = vld [vmem:[#allocation5 + $0xc8] sm:$0xff]
        %v523 = vld [vmem:[#allocation5 + $0xd0] sm:$0xff]
        %v524 = vld [vmem:[#allocation5 + $0xd8] sm:$0xff]
        %v525 = vld [vmem:[#allocation5 + $0xe0] sm:$0xff]
        %v526 = vld [vmem:[#allocation5 + $0xe8] sm:$0xff]
        %v527 = vld [vmem:[#allocation5 + $0xf0] sm:$0xff]
        %v528 = vld [vmem:[#allocation5 + $0xf8] sm:$0xff]
        %v529 = vld [vmem:[#allocation7] sm:$0xff]
        %v530 = vld [vmem:[#allocation7 + $0x8] sm:$0xff]
        %531 = vmatprep.subr.mxu0 0.0
        %532 = vmatpush1.msra.mxu0 %v512
        %533 = vmatprep.subr.mxu0 0.0
        %534 = vmatpush1.msra.mxu0 %v511
        %535 = vmatprep.subr.mxu0 0.0
        %536 = vmatpush1.msra.mxu0 %v510
        %537 = vmatprep.subr.mxu0 0.0
        %538 = vmatpush1.msra.mxu0 %v509
        %539 = vmatprep.subr.mxu0 0.0
        %540 = vmatpush1.msra.mxu0 %v508
        %541 = vmatprep.subr.mxu0 0.0
        %542 = vmatpush1.msra.mxu0 %v507
        %543 = vmatprep.subr.mxu0 0.0
        %544 = vmatpush1.msra.mxu0 %v506
        %545 = vmatprep.subr.mxu0 0.0
        %546 = vmatpush1.msra.mxu0 %v505
        %547 = vmatprep.subr.mxu0 0.0
        %548 = vmatpush1.msra.mxu0 %v504
        %549 = vmatprep.subr.mxu0 0.0
        %550 = vmatpush1.msra.mxu0 %v503
        %551 = vmatprep.subr.mxu0 0.0
        %552 = vmatpush1.msra.mxu0 %v502
        %553 = vmatprep.subr.mxu0 0.0
        %554 = vmatpush1.msra.mxu0 %v501
        %555 = vmatprep.subr.mxu0 0.0
        %556 = vmatpush1.msra.mxu0 %v500
        %557 = vmatprep.subr.mxu0 0.0
        %558 = vmatpush1.msra.mxu0 %v499
        %559 = vmatprep.subr.mxu0 0.0
        %560 = vmatpush1.msra.mxu0 %v498
        %561 = vmatprep.subr.mxu0 0.0
        %562 = vmatpush1.msra.mxu0 %v497
        %563 = vmatprep.subr.mxu0 0.0
        %564 = vmatpush2.msra.mxu0 %v528
        %565 = vmatprep.subr.mxu0 0.0
        %566 = vmatpush2.msra.mxu0 %v527
        %567 = vmatprep.subr.mxu0 0.0
        %568 = vmatpush2.msra.mxu0 %v526
        %569 = vmatprep.subr.mxu0 0.0
        %570 = vmatpush2.msra.mxu0 %v525
        %571 = vmatprep.subr.mxu0 0.0
        %572 = vmatpush2.msra.mxu0 %v524
        %573 = vmatprep.subr.mxu0 0.0
        %574 = vmatpush2.msra.mxu0 %v523
        %575 = vmatprep.subr.mxu0 0.0
        %576 = vmatpush2.msra.mxu0 %v522
        %577 = vmatprep.subr.mxu0 0.0
        %578 = vmatpush2.msra.mxu0 %v521
        %579 = vmatprep.subr.mxu0 0.0
        %580 = vmatpush2.msra.mxu0 %v520
        %581 = vmatprep.subr.mxu0 0.0
        %582 = vmatpush2.msra.mxu0 %v519
        %583 = vmatprep.subr.mxu0 0.0
        %584 = vmatpush2.msra.mxu0 %v518
        %585 = vmatprep.subr.mxu0 0.0
        %586 = vmatpush2.msra.mxu0 %v517
        %587 = vmatprep.subr.mxu0 0.0
        %588 = vmatpush2.msra.mxu0 %v516
        %589 = vmatprep.subr.mxu0 0.0
        %590 = vmatpush2.msra.mxu0 %v515
        %591 = vmatprep.subr.mxu0 0.0
        %592 = vmatpush2.msra.mxu0 %v514
        %593 = vmatprep.subr.mxu0 0.0
        %594 = vmatpush2.msra.mxu0 %v513
        %595 = vmatprep.mubr.f32.mxu0 %v494
        %596 = vmatmul.mubr.f32.gmra.mxu0 %v493
        %v597 = vpop.f32.mrf.mxu0
        %v598 = vadd.f32 %v529, %v597
        %v599 = vpop.f32.mrf.mxu0
        %600 = vmatprep.mubr.f32.mxu0 %v496
        %601 = vmatmul.mubr.f32.gmra.mxu0 %v495
        %v602 = vpop.f32.mrf.mxu0
        %v603 = vadd.f32 %v530, %v602
        %v604 = vpop.f32.mrf.mxu0
        %605 = vdwg.mxu0
        %v606 = vlaneseq
        %v607 = vand.u32 %v606, 127
        %vm608 = vcmp.lt.s32.totalorder %v607, 9
        %v609 = vsel %vm608, 0.0, -1e+30
        %v610 = vld [vmem:[#allocation8] sm:$0xff]
        %v611 = vld [vmem:[#allocation8 + $0x8] sm:$0xff]
        %v612 = vld [vmem:[#allocation8 + $0x10] sm:$0xff]
        %v613 = vld [vmem:[#allocation8 + $0x18] sm:$0xff]
        %v614 = vld [vmem:[#allocation8 + $0x20] sm:$0xff]
        %v615 = vld [vmem:[#allocation8 + $0x28] sm:$0xff]
        %v616 = vld [vmem:[#allocation8 + $0x30] sm:$0xff]
        %v617 = vld [vmem:[#allocation8 + $0x38] sm:$0xff]
        %v618 = vld [vmem:[#allocation8 + $0x40] sm:$0xff]
        %v619 = vld [vmem:[#allocation8 + $0x48] sm:$0xff]
        %v620 = vld [vmem:[#allocation8 + $0x50] sm:$0xff]
        %v621 = vld [vmem:[#allocation8 + $0x58] sm:$0xff]
        %v622 = vld [vmem:[#allocation8 + $0x60] sm:$0xff]
        %v623 = vld [vmem:[#allocation8 + $0x68] sm:$0xff]
        %v624 = vld [vmem:[#allocation8 + $0x70] sm:$0xff]
        %v625 = vld [vmem:[#allocation8 + $0x78] sm:$0xff]
        %v626 = vld [vmem:[#allocation8 + $0x80] sm:$0xff]
        %v627 = vld [vmem:[#allocation8 + $0x88] sm:$0xff]
        %v628 = vld [vmem:[#allocation8 + $0x90] sm:$0xff]
        %v629 = vld [vmem:[#allocation8 + $0x98] sm:$0xff]
        %v630 = vld [vmem:[#allocation8 + $0xa0] sm:$0xff]
        %v631 = vld [vmem:[#allocation8 + $0xa8] sm:$0xff]
        %v632 = vld [vmem:[#allocation8 + $0xb0] sm:$0xff]
        %v633 = vld [vmem:[#allocation8 + $0xb8] sm:$0xff]
        %v634 = vld [vmem:[#allocation8 + $0xc0] sm:$0xff]
        %v635 = vld [vmem:[#allocation8 + $0xc8] sm:$0xff]
        %v636 = vld [vmem:[#allocation8 + $0xd0] sm:$0xff]
        %v637 = vld [vmem:[#allocation8 + $0xd8] sm:$0xff]
        %v638 = vld [vmem:[#allocation8 + $0xe0] sm:$0xff]
        %v639 = vld [vmem:[#allocation8 + $0xe8] sm:$0xff]
        %v640 = vld [vmem:[#allocation8 + $0xf0] sm:$0xff]
        %v641 = vld [vmem:[#allocation8 + $0xf8] sm:$0xff]
        %v642 = vld [vmem:[#allocation8 + $0x100] sm:$0xff]
        %v643 = vld [vmem:[#allocation8 + $0x108] sm:$0xff]
        %v644 = vld [vmem:[#allocation8 + $0x110] sm:$0xff]
        %v645 = vld [vmem:[#allocation8 + $0x118] sm:$0xff]
        %v646 = vld [vmem:[#allocation8 + $0x120] sm:$0xff]
        %v647 = vld [vmem:[#allocation8 + $0x128] sm:$0xff]
        %v648 = vld [vmem:[#allocation8 + $0x130] sm:$0xff]
        %v649 = vld [vmem:[#allocation8 + $0x138] sm:$0xff]
        %v650 = vld [vmem:[#allocation8 + $0x140] sm:$0xff]
        %v651 = vld [vmem:[#allocation8 + $0x148] sm:$0xff]
        %v652 = vld [vmem:[#allocation8 + $0x150] sm:$0xff]
        %v653 = vld [vmem:[#allocation8 + $0x158] sm:$0xff]
        %v654 = vld [vmem:[#allocation8 + $0x160] sm:$0xff]
        %v655 = vld [vmem:[#allocation8 + $0x168] sm:$0xff]
        %v656 = vld [vmem:[#allocation8 + $0x170] sm:$0xff]
        %v657 = vld [vmem:[#allocation8 + $0x178] sm:$0xff]
        %v658 = vld [vmem:[#allocation10] sm:$0xff]
        %v659 = vld [vmem:[#allocation10 + $0x8] sm:$0xff]
        %v660 = vld [vmem:[#allocation10 + $0x10] sm:$0xff]
        %v661 = vld [vmem:[#allocation10 + $0x18] sm:$0xff]
        %v662 = vld [vmem:[#allocation10 + $0x20] sm:$0xff]
        %v663 = vld [vmem:[#allocation10 + $0x28] sm:$0xff]
        %v664 = vld [vmem:[#allocation10 + $0x30] sm:$0xff]
        %v665 = vld [vmem:[#allocation10 + $0x38] sm:$0xff]
        %v666 = vld [vmem:[#allocation10 + $0x40] sm:$0xff]
        %v667 = vld [vmem:[#allocation10 + $0x48] sm:$0xff]
        %v668 = vld [vmem:[#allocation10 + $0x50] sm:$0xff]
        %v669 = vld [vmem:[#allocation10 + $0x58] sm:$0xff]
        %v670 = vld [vmem:[#allocation10 + $0x60] sm:$0xff]
        %v671 = vld [vmem:[#allocation10 + $0x68] sm:$0xff]
        %v672 = vld [vmem:[#allocation10 + $0x70] sm:$0xff]
        %v673 = vld [vmem:[#allocation10 + $0x78] sm:$0xff]
        %v674 = vld [vmem:[#allocation11] sm:$0xff]
        %v675 = vld [vmem:[#allocation11 + $0x8] sm:$0xff]
        %v676 = vld [vmem:[#allocation11 + $0x10] sm:$0xff]
        %v677 = vld [vmem:[#allocation11 + $0x18] sm:$0xff]
        %v678 = vld [vmem:[#allocation11 + $0x20] sm:$0xff]
        %v679 = vld [vmem:[#allocation11 + $0x28] sm:$0xff]
        %v680 = vld [vmem:[#allocation11 + $0x30] sm:$0xff]
        %v681 = vld [vmem:[#allocation11 + $0x38] sm:$0xff]
        %v682 = vld [vmem:[#allocation11 + $0x40] sm:$0xff]
        %v683 = vld [vmem:[#allocation11 + $0x48] sm:$0xff]
        %v684 = vld [vmem:[#allocation11 + $0x50] sm:$0xff]
        %v685 = vld [vmem:[#allocation11 + $0x58] sm:$0xff]
        %v686 = vld [vmem:[#allocation11 + $0x60] sm:$0xff]
        %v687 = vld [vmem:[#allocation11 + $0x68] sm:$0xff]
        %v688 = vld [vmem:[#allocation11 + $0x70] sm:$0xff]
        %v689 = vld [vmem:[#allocation11 + $0x78] sm:$0xff]
        %v690 = vld [vmem:[#allocation13] sm:$0xff]
        %v691 = vld [vmem:[#allocation13 + $0x8] sm:$0xff]
        %v692 = vld [vmem:[#allocation13 + $0x10] sm:$0xff]
        %v693 = vld [vmem:[#allocation13 + $0x18] sm:$0xff]
        %v694 = vld [vmem:[#allocation13 + $0x20] sm:$0xff]
        %v695 = vld [vmem:[#allocation13 + $0x28] sm:$0xff]
        %v696 = vld [vmem:[#allocation13 + $0x30] sm:$0xff]
        %v697 = vld [vmem:[#allocation13 + $0x38] sm:$0xff]
        %v698 = vld [vmem:[#allocation13 + $0x40] sm:$0xff]
        %v699 = vld [vmem:[#allocation13 + $0x48] sm:$0xff]
        %v700 = vld [vmem:[#allocation13 + $0x50] sm:$0xff]
        %v701 = vld [vmem:[#allocation13 + $0x58] sm:$0xff]
        %v702 = vld [vmem:[#allocation13 + $0x60] sm:$0xff]
        %v703 = vld [vmem:[#allocation13 + $0x68] sm:$0xff]
        %v704 = vld [vmem:[#allocation13 + $0x70] sm:$0xff]
        %v705 = vld [vmem:[#allocation13 + $0x78] sm:$0xff]
        %v706 = vld [vmem:[#allocation14] sm:$0xff]
        %v707 = vld [vmem:[#allocation14 + $0x8] sm:$0xff]
        %708 = vmatprep.subr.mxu0 %v656
        %709 = vmatpush1.msra.mxu0 %v655
        %710 = vmatprep.subr.mxu0 %v653
        %711 = vmatpush1.msra.mxu0 %v652
        %712 = vmatprep.subr.mxu0 %v650
        %713 = vmatpush1.msra.mxu0 %v649
        %714 = vmatprep.subr.mxu0 %v647
        %715 = vmatpush1.msra.mxu0 %v646
        %716 = vmatprep.subr.mxu0 %v644
        %717 = vmatpush1.msra.mxu0 %v643
        %718 = vmatprep.subr.mxu0 %v641
        %719 = vmatpush1.msra.mxu0 %v640
        %720 = vmatprep.subr.mxu0 %v638
        %721 = vmatpush1.msra.mxu0 %v637
        %722 = vmatprep.subr.mxu0 %v635
        %723 = vmatpush1.msra.mxu0 %v634
        %724 = vmatprep.subr.mxu0 %v632
        %725 = vmatpush1.msra.mxu0 %v631
        %726 = vmatprep.subr.mxu0 %v629
        %727 = vmatpush1.msra.mxu0 %v628
        %728 = vmatprep.subr.mxu0 %v626
        %729 = vmatpush1.msra.mxu0 %v625
        %730 = vmatprep.subr.mxu0 %v623
        %731 = vmatpush1.msra.mxu0 %v622
        %732 = vmatprep.subr.mxu0 %v620
        %733 = vmatpush1.msra.mxu0 %v619
        %734 = vmatprep.subr.mxu0 %v617
        %735 = vmatpush1.msra.mxu0 %v616
        %736 = vmatprep.subr.mxu0 %v614
        %737 = vmatpush1.msra.mxu0 %v613
        %738 = vmatprep.subr.mxu0 %v611
        %739 = vmatpush1.msra.mxu0 %v610
        %740 = vmatprep.subr.mxu0 0.0
        %741 = vmatpush2.msra.mxu0 0.0
        %742 = vmatprep.subr.mxu0 0.0
        %743 = vmatpush2.msra.mxu0 0.0
        %744 = vmatprep.subr.mxu0 0.0
        %745 = vmatpush2.msra.mxu0 0.0
        %746 = vmatprep.subr.mxu0 0.0
        %747 = vmatpush2.msra.mxu0 0.0
        %748 = vmatprep.subr.mxu0 0.0
        %749 = vmatpush2.msra.mxu0 0.0
        %750 = vmatprep.subr.mxu0 0.0
        %751 = vmatpush2.msra.mxu0 0.0
        %752 = vmatprep.subr.mxu0 0.0
        %753 = vmatpush2.msra.mxu0 0.0
        %754 = vmatprep.subr.mxu0 0.0
        %755 = vmatpush2.msra.mxu0 0.0
        %756 = vmatprep.subr.mxu0 0.0
        %757 = vmatpush2.msra.mxu0 0.0
        %758 = vmatprep.subr.mxu0 0.0
        %759 = vmatpush2.msra.mxu0 0.0
        %760 = vmatprep.subr.mxu0 0.0
        %761 = vmatpush2.msra.mxu0 0.0
        %762 = vmatprep.subr.mxu0 0.0
        %763 = vmatpush2.msra.mxu0 0.0
        %764 = vmatprep.subr.mxu0 0.0
        %765 = vmatpush2.msra.mxu0 0.0
        %766 = vmatprep.subr.mxu0 0.0
        %767 = vmatpush2.msra.mxu0 0.0
        %768 = vmatprep.subr.mxu0 0.0
        %769 = vmatpush2.msra.mxu0 0.0
        %770 = vmatprep.subr.mxu0 0.0
        %771 = vmatpush2.msra.mxu0 0.0
        %772 = vmatprep.mubr.f32.mxu0 0.0
        %773 = vmatmul.mubr.f32.gmra.mxu0 %v598
        %v774 = vpop.f32.mrf.mxu0
        %v775 = vadd.f32 0.0, %v774
        %v776 = vpop.f32.mrf.mxu0
        %v777 = vadd.f32 0.0, %v776
        %778 = vmatprep.mubr.f32.mxu0 0.0
        %779 = vmatmul.mubr.f32.gmra.mxu0 %v603
        %v780 = vpop.f32.mrf.mxu0
        %v781 = vadd.f32 0.0, %v780
        %v782 = vpop.f32.mrf.mxu0
        %v783 = vadd.f32 0.0, %v782
        %784 = vdwg.mxu0
        %785 = vmatprep.subr.mxu0 0.0
        %786 = vmatpush1.msra.mxu0 %v657
        %787 = vmatprep.subr.mxu0 0.0
        %788 = vmatpush1.msra.mxu0 %v654
        %789 = vmatprep.subr.mxu0 0.0
        %790 = vmatpush1.msra.mxu0 %v651
        %791 = vmatprep.subr.mxu0 0.0
        %792 = vmatpush1.msra.mxu0 %v648
        %793 = vmatprep.subr.mxu0 0.0
        %794 = vmatpush1.msra.mxu0 %v645
        %795 = vmatprep.subr.mxu0 0.0
        %796 = vmatpush1.msra.mxu0 %v642
        %797 = vmatprep.subr.mxu0 0.0
        %798 = vmatpush1.msra.mxu0 %v639
        %799 = vmatprep.subr.mxu0 0.0
        %800 = vmatpush1.msra.mxu0 %v636
        %801 = vmatprep.subr.mxu0 0.0
        %802 = vmatpush1.msra.mxu0 %v633
        %803 = vmatprep.subr.mxu0 0.0
        %804 = vmatpush1.msra.mxu0 %v630
        %805 = vmatprep.subr.mxu0 0.0
        %806 = vmatpush1.msra.mxu0 %v627
        %807 = vmatprep.subr.mxu0 0.0
        %808 = vmatpush1.msra.mxu0 %v624
        %809 = vmatprep.subr.mxu0 0.0
        %810 = vmatpush1.msra.mxu0 %v621
        %811 = vmatprep.subr.mxu0 0.0
        %812 = vmatpush1.msra.mxu0 %v618
        %813 = vmatprep.subr.mxu0 0.0
        %814 = vmatpush1.msra.mxu0 %v615
        %815 = vmatprep.subr.mxu0 0.0
        %816 = vmatpush1.msra.mxu0 %v612
        %817 = vmatprep.subr.mxu0 0.0
        %818 = vmatpush2.msra.mxu0 0.0
        %819 = vmatprep.subr.mxu0 0.0
        %820 = vmatpush2.msra.mxu0 0.0
        %821 = vmatprep.subr.mxu0 0.0
        %822 = vmatpush2.msra.mxu0 0.0
        %823 = vmatprep.subr.mxu0 0.0
        %824 = vmatpush2.msra.mxu0 0.0
        %825 = vmatprep.subr.mxu0 0.0
        %826 = vmatpush2.msra.mxu0 0.0
        %827 = vmatprep.subr.mxu0 0.0
        %828 = vmatpush2.msra.mxu0 0.0
        %829 = vmatprep.subr.mxu0 0.0
        %830 = vmatpush2.msra.mxu0 0.0
        %831 = vmatprep.subr.mxu0 0.0
        %832 = vmatpush2.msra.mxu0 0.0
        %833 = vmatprep.subr.mxu0 0.0
        %834 = vmatpush2.msra.mxu0 0.0
        %835 = vmatprep.subr.mxu0 0.0
        %836 = vmatpush2.msra.mxu0 0.0
        %837 = vmatprep.subr.mxu0 0.0
        %838 = vmatpush2.msra.mxu0 0.0
        %839 = vmatprep.subr.mxu0 0.0
        %840 = vmatpush2.msra.mxu0 0.0
        %841 = vmatprep.subr.mxu0 0.0
        %842 = vmatpush2.msra.mxu0 0.0
        %843 = vmatprep.subr.mxu0 0.0
        %844 = vmatpush2.msra.mxu0 0.0
        %845 = vmatprep.subr.mxu0 0.0
        %846 = vmatpush2.msra.mxu0 0.0
        %847 = vmatprep.subr.mxu0 0.0
        %848 = vmatpush2.msra.mxu0 0.0
        %849 = vmatprep.mubr.f32.mxu0 0.0
        %850 = vmatmul.mubr.f32.gmra.mxu0 %v598
        %v851 = vpop.f32.mrf.mxu0
        %v852 = vadd.f32 0.0, %v851
        %v853 = vpop.f32.mrf.mxu0
        %854 = vmatprep.mubr.f32.mxu0 0.0
        %855 = vmatmul.mubr.f32.gmra.mxu0 %v603
        %v856 = vpop.f32.mrf.mxu0
        %v857 = vadd.f32 0.0, %v856
        %v858 = vpop.f32.mrf.mxu0
        %859 = vdwg.mxu0
        %v860 = vlaneseq
        %v861 = vshrl.u32 %v860, 7
        %v862 = vsub.s32 0, %v861
        %v863 = vrot.slane %v706, %v862
        %v864 = vadd.f32 %v775, %v863
        %v865 = vadd.f32 %v781, %v863
        %v866 = vmul.f32 %v864, 0.25
        %v867 = vmul.f32 %v865, 0.25
        %v868 = vlaneseq
        %v869 = vshrl.u32 %v868, 7
        %v870 = vsub.s32 1, %v869
        %v871 = vrot.slane %v706, %v870
        %v872 = vadd.f32 %v777, %v871
        %v873 = vadd.f32 %v783, %v871
        %v874 = vlaneseq
        %v875 = vshrl.u32 %v874, 7
        %v876 = vsub.s32 2, %v875
        %v877 = vrot.slane %v706, %v876
        %v878 = vadd.f32 %v852, %v877
        %v879 = vadd.f32 %v857, %v877
        %vm880 = vcmask 130048
        %v882 = vsel %vm880, %v866, 0
        %v885 = vsel %vm880, %v867, 0
        %v888 = vsel %vm880, %v872, 0
        %v891 = vsel %vm880, %v873, 0
        %893 = vmatprep.subr.mxu0 0.0
        %894 = vmatpush1.xpose.msra.mxu0 0.0
        %895 = vmatprep.subr.mxu0 0.0
        %896 = vmatpush1.xpose.msra.mxu0 0.0
        %897 = vmatprep.subr.mxu0 0.0
        %898 = vmatpush1.xpose.msra.mxu0 0.0
        %899 = vmatprep.subr.mxu0 0.0
        %900 = vmatpush1.xpose.msra.mxu0 0.0
        %901 = vmatprep.subr.mxu0 0.0
        %902 = vmatpush1.xpose.msra.mxu0 0.0
        %903 = vmatprep.subr.mxu0 0.0
        %904 = vmatpush1.xpose.msra.mxu0 0.0
        %905 = vmatprep.subr.mxu0 0.0
        %906 = vmatpush1.xpose.msra.mxu0 0.0
        %907 = vmatprep.subr.mxu0 0.0
        %908 = vmatpush1.xpose.msra.mxu0 0.0
        %909 = vmatprep.subr.mxu0 0.0
        %910 = vmatpush1.xpose.msra.mxu0 0.0
        %911 = vmatprep.subr.mxu0 0.0
        %912 = vmatpush1.xpose.msra.mxu0 0.0
        %913 = vmatprep.subr.mxu0 0.0
        %914 = vmatpush1.xpose.msra.mxu0 0.0
        %915 = vmatprep.subr.mxu0 0.0
        %916 = vmatpush1.xpose.msra.mxu0 0.0
        %917 = vmatprep.subr.mxu0 0.0
        %918 = vmatpush1.xpose.msra.mxu0 0.0
        %919 = vmatprep.subr.mxu0 0.0
        %920 = vmatpush1.xpose.msra.mxu0 0.0
        %921 = vmatprep.subr.mxu0 0.0
        %922 = vmatpush1.xpose.msra.mxu0 %v891
        %923 = vmatprep.subr.mxu0 0.0
        %924 = vmatpush1.xpose.msra.mxu0 %v888
        %925 = vmatprep.subr.mxu0 0.0
        %926 = vmatpush2.xpose.msra.mxu0 0.0
        %927 = vmatprep.subr.mxu0 0.0
        %928 = vmatpush2.xpose.msra.mxu0 0.0
        %929 = vmatprep.subr.mxu0 0.0
        %930 = vmatpush2.xpose.msra.mxu0 0.0
        %931 = vmatprep.subr.mxu0 0.0
        %932 = vmatpush2.xpose.msra.mxu0 0.0
        %933 = vmatprep.subr.mxu0 0.0
        %934 = vmatpush2.xpose.msra.mxu0 0.0
        %935 = vmatprep.subr.mxu0 0.0
        %936 = vmatpush2.xpose.msra.mxu0 0.0
        %937 = vmatprep.subr.mxu0 0.0
        %938 = vmatpush2.xpose.msra.mxu0 0.0
        %939 = vmatprep.subr.mxu0 0.0
        %940 = vmatpush2.xpose.msra.mxu0 0.0
        %941 = vmatprep.subr.mxu0 0.0
        %942 = vmatpush2.xpose.msra.mxu0 0.0
        %943 = vmatprep.subr.mxu0 0.0
        %944 = vmatpush2.xpose.msra.mxu0 0.0
        %945 = vmatprep.subr.mxu0 0.0
        %946 = vmatpush2.xpose.msra.mxu0 0.0
        %947 = vmatprep.subr.mxu0 0.0
        %948 = vmatpush2.xpose.msra.mxu0 0.0
        %949 = vmatprep.subr.mxu0 0.0
        %950 = vmatpush2.xpose.msra.mxu0 0.0
        %951 = vmatprep.subr.mxu0 0.0
        %952 = vmatpush2.xpose.msra.mxu0 0.0
        %953 = vmatprep.subr.mxu0 0.0
        %954 = vmatpush2.xpose.msra.mxu0 0.0
        %955 = vmatprep.subr.mxu0 0.0
        %956 = vmatpush2.xpose.msra.mxu0 0.0
        %957 = vmatprep.mubr.f32.mxu0 0.0
        %958 = vmatmul.mubr.f32.gmra.mxu0 %v882
        %v959 = vpop.f32.mrf.mxu0
        %v960 = vadd.f32 %v609, %v959
        %v961 = vpop.f32.mrf.mxu0
        %962 = vmatprep.mubr.f32.mxu0 0.0
        %963 = vmatmul.mubr.f32.gmra.mxu0 %v885
        %v964 = vpop.f32.mrf.mxu0
        %v965 = vadd.f32 %v609, %v964
        %v966 = vpop.f32.mrf.mxu0
        %967 = vdwg.mxu0
        %v968 = vsel %vm880, %v960, -inf
        %969 = vmax.xlane.f32.xlu0 %v968
        %v970 = vpop.xlane.xlu0 %969
        %v971 = vsel %vm880, %v965, -inf
        %972 = vmax.xlane.f32.xlu0 %v971
        %v973 = vpop.xlane.xlu0 %972
        %v974 = vsub.f32 %v960, %v970
        %v975 = vsub.f32 %v965, %v973
        %v976 = vmul.f32 %v974, 1.442695
        %v977 = vpow.pop %v976
        %v978 = vmul.f32 %v975, 1.442695
        %v979 = vpow.pop %v978
        %v980 = vsel %vm880, %v977, 0.0
        %981 = vadd.xlane.f32.xlu0 %v980
        %v982 = vpop.xlane.xlu0 %981
        %v983 = vsel %vm880, %v979, 0.0
        %984 = vadd.xlane.f32.xlu0 %v983
        %v985 = vpop.xlane.xlu0 %984
        %v986 = vrcp.pop %v982
        %v987 = vmul.f32 %v977, %v986
        %v988 = vrcp.pop %v985
        %v989 = vmul.f32 %v979, %v988
        %v991 = vsel %vm880, %v987, 0
        %v994 = vsel %vm880, %v989, 0
        %996 = vmatprep.subr.mxu0 0.0
        %997 = vmatpush1.msra.mxu0 0.0
        %998 = vmatprep.subr.mxu0 0.0
        %999 = vmatpush1.msra.mxu0 0.0
        %1000 = vmatprep.subr.mxu0 0.0
        %1001 = vmatpush1.msra.mxu0 0.0
        %1002 = vmatprep.subr.mxu0 0.0
        %1003 = vmatpush1.msra.mxu0 0.0
        %1004 = vmatprep.subr.mxu0 0.0
        %1005 = vmatpush1.msra.mxu0 0.0
        %1006 = vmatprep.subr.mxu0 0.0
        %1007 = vmatpush1.msra.mxu0 0.0
        %1008 = vmatprep.subr.mxu0 0.0
        %1009 = vmatpush1.msra.mxu0 0.0
        %1010 = vmatprep.subr.mxu0 0.0
        %1011 = vmatpush1.msra.mxu0 0.0
        %1012 = vmatprep.subr.mxu0 0.0
        %1013 = vmatpush1.msra.mxu0 0.0
        %1014 = vmatprep.subr.mxu0 0.0
        %1015 = vmatpush1.msra.mxu0 0.0
        %1016 = vmatprep.subr.mxu0 0.0
        %1017 = vmatpush1.msra.mxu0 0.0
        %1018 = vmatprep.subr.mxu0 0.0
        %1019 = vmatpush1.msra.mxu0 0.0
        %1020 = vmatprep.subr.mxu0 0.0
        %1021 = vmatpush1.msra.mxu0 0.0
        %1022 = vmatprep.subr.mxu0 0.0
        %1023 = vmatpush1.msra.mxu0 0.0
        %1024 = vmatprep.subr.mxu0 0.0
        %1025 = vmatpush1.msra.mxu0 %v879
        %1026 = vmatprep.subr.mxu0 0.0
        %1027 = vmatpush1.msra.mxu0 %v878
        %1028 = vmatprep.subr.mxu0 0.0
        %1029 = vmatpush2.msra.mxu0 0.0
        %1030 = vmatprep.subr.mxu0 0.0
        %1031 = vmatpush2.msra.mxu0 0.0
        %1032 = vmatprep.subr.mxu0 0.0
        %1033 = vmatpush2.msra.mxu0 0.0
        %1034 = vmatprep.subr.mxu0 0.0
        %1035 = vmatpush2.msra.mxu0 0.0
        %1036 = vmatprep.subr.mxu0 0.0
        %1037 = vmatpush2.msra.mxu0 0.0
        %1038 = vmatprep.subr.mxu0 0.0
        %1039 = vmatpush2.msra.mxu0 0.0
        %1040 = vmatprep.subr.mxu0 0.0
        %1041 = vmatpush2.msra.mxu0 0.0
        %1042 = vmatprep.subr.mxu0 0.0
        %1043 = vmatpush2.msra.mxu0 0.0
        %1044 = vmatprep.subr.mxu0 0.0
        %1045 = vmatpush2.msra.mxu0 0.0
        %1046 = vmatprep.subr.mxu0 0.0
        %1047 = vmatpush2.msra.mxu0 0.0
        %1048 = vmatprep.subr.mxu0 0.0
        %1049 = vmatpush2.msra.mxu0 0.0
        %1050 = vmatprep.subr.mxu0 0.0
        %1051 = vmatpush2.msra.mxu0 0.0
        %1052 = vmatprep.subr.mxu0 0.0
        %1053 = vmatpush2.msra.mxu0 0.0
        %1054 = vmatprep.subr.mxu0 0.0
        %1055 = vmatpush2.msra.mxu0 0.0
        %1056 = vmatprep.subr.mxu0 0.0
        %1057 = vmatpush2.msra.mxu0 0.0
        %1058 = vmatprep.subr.mxu0 0.0
        %1059 = vmatpush2.msra.mxu0 0.0
        %1060 = vmatprep.mubr.f32.mxu0 0.0
        %1061 = vmatmul.mubr.f32.gmra.mxu0 %v991
        %v1062 = vpop.f32.mrf.mxu0
        %v1063 = vadd.f32 0.0, %v1062
        %v1064 = vpop.f32.mrf.mxu0
        %1065 = vmatprep.mubr.f32.mxu0 0.0
        %1066 = vmatmul.mubr.f32.gmra.mxu0 %v994
        %v1067 = vpop.f32.mrf.mxu0
        %v1068 = vadd.f32 0.0, %v1067
        %v1069 = vpop.f32.mrf.mxu0
        %1070 = vdwg.mxu0
        %1071 = vrot.lane.b32.xlu0 %v866, 112
        %v1072 = vpop.permute.xlu0 %1071
        %1073 = vrot.lane.b32.xlu0 %v867, 112
        %v1074 = vpop.permute.xlu0 %1073
        %1075 = vrot.lane.b32.xlu0 %v872, 112
        %v1076 = vpop.permute.xlu0 %1075
        %1077 = vrot.lane.b32.xlu0 %v873, 112
        %v1078 = vpop.permute.xlu0 %1077
        %v1079 = vsel %vm880, %v1072, 0
        %v1081 = vsel %vm880, %v1074, 0
        %v1083 = vsel %vm880, %v1076, 0
        %v1085 = vsel %vm880, %v1078, 0
        %1087 = vmatprep.subr.mxu0 0.0
        %1088 = vmatpush1.xpose.msra.mxu0 0.0
        %1089 = vmatprep.subr.mxu0 0.0
        %1090 = vmatpush1.xpose.msra.mxu0 0.0
        %1091 = vmatprep.subr.mxu0 0.0
        %1092 = vmatpush1.xpose.msra.mxu0 0.0
        %1093 = vmatprep.subr.mxu0 0.0
        %1094 = vmatpush1.xpose.msra.mxu0 0.0
        %1095 = vmatprep.subr.mxu0 0.0
        %1096 = vmatpush1.xpose.msra.mxu0 0.0
        %1097 = vmatprep.subr.mxu0 0.0
        %1098 = vmatpush1.xpose.msra.mxu0 0.0
        %1099 = vmatprep.subr.mxu0 0.0
        %1100 = vmatpush1.xpose.msra.mxu0 0.0
        %1101 = vmatprep.subr.mxu0 0.0
        %1102 = vmatpush1.xpose.msra.mxu0 0.0
        %1103 = vmatprep.subr.mxu0 0.0
        %1104 = vmatpush1.xpose.msra.mxu0 0.0
        %1105 = vmatprep.subr.mxu0 0.0
        %1106 = vmatpush1.xpose.msra.mxu0 0.0
        %1107 = vmatprep.subr.mxu0 0.0
        %1108 = vmatpush1.xpose.msra.mxu0 0.0
        %1109 = vmatprep.subr.mxu0 0.0
        %1110 = vmatpush1.xpose.msra.mxu0 0.0
        %1111 = vmatprep.subr.mxu0 0.0
        %1112 = vmatpush1.xpose.msra.mxu0 0.0
        %1113 = vmatprep.subr.mxu0 0.0
        %1114 = vmatpush1.xpose.msra.mxu0 0.0
        %1115 = vmatprep.subr.mxu0 0.0
        %1116 = vmatpush1.xpose.msra.mxu0 %v1085
        %1117 = vmatprep.subr.mxu0 0.0
        %1118 = vmatpush1.xpose.msra.mxu0 %v1083
        %1119 = vmatprep.subr.mxu0 0.0
        %1120 = vmatpush2.xpose.msra.mxu0 0.0
        %1121 = vmatprep.subr.mxu0 0.0
        %1122 = vmatpush2.xpose.msra.mxu0 0.0
        %1123 = vmatprep.subr.mxu0 0.0
        %1124 = vmatpush2.xpose.msra.mxu0 0.0
        %1125 = vmatprep.subr.mxu0 0.0
        %1126 = vmatpush2.xpose.msra.mxu0 0.0
        %1127 = vmatprep.subr.mxu0 0.0
        %1128 = vmatpush2.xpose.msra.mxu0 0.0
        %1129 = vmatprep.subr.mxu0 0.0
        %1130 = vmatpush2.xpose.msra.mxu0 0.0
        %1131 = vmatprep.subr.mxu0 0.0
        %1132 = vmatpush2.xpose.msra.mxu0 0.0
        %1133 = vmatprep.subr.mxu0 0.0
        %1134 = vmatpush2.xpose.msra.mxu0 0.0
        %1135 = vmatprep.subr.mxu0 0.0
        %1136 = vmatpush2.xpose.msra.mxu0 0.0
        %1137 = vmatprep.subr.mxu0 0.0
        %1138 = vmatpush2.xpose.msra.mxu0 0.0
        %1139 = vmatprep.subr.mxu0 0.0
        %1140 = vmatpush2.xpose.msra.mxu0 0.0
        %1141 = vmatprep.subr.mxu0 0.0
        %1142 = vmatpush2.xpose.msra.mxu0 0.0
        %1143 = vmatprep.subr.mxu0 0.0
        %1144 = vmatpush2.xpose.msra.mxu0 0.0
        %1145 = vmatprep.subr.mxu0 0.0
        %1146 = vmatpush2.xpose.msra.mxu0 0.0
        %1147 = vmatprep.subr.mxu0 0.0
        %1148 = vmatpush2.xpose.msra.mxu0 0.0
        %1149 = vmatprep.subr.mxu0 0.0
        %1150 = vmatpush2.xpose.msra.mxu0 0.0
        %1151 = vmatprep.mubr.f32.mxu0 0.0
        %1152 = vmatmul.mubr.f32.gmra.mxu0 %v1079
        %v1153 = vpop.f32.mrf.mxu0
        %v1154 = vadd.f32 %v609, %v1153
        %v1155 = vpop.f32.mrf.mxu0
        %1156 = vmatprep.mubr.f32.mxu0 0.0
        %1157 = vmatmul.mubr.f32.gmra.mxu0 %v1081
        %v1158 = vpop.f32.mrf.mxu0
        %v1159 = vadd.f32 %v609, %v1158
        %v1160 = vpop.f32.mrf.mxu0
        %1161 = vdwg.mxu0
        %v1162 = vsel %vm880, %v1154, -inf
        %1163 = vmax.xlane.f32.xlu0 %v1162
        %v1164 = vpop.xlane.xlu0 %1163
        %v1165 = vsel %vm880, %v1159, -inf
        %1166 = vmax.xlane.f32.xlu0 %v1165
        %v1167 = vpop.xlane.xlu0 %1166
        %v1168 = vsub.f32 %v1154, %v1164
        %v1169 = vsub.f32 %v1159, %v1167
        %v1170 = vmul.f32 %v1168, 1.442695
        %v1171 = vpow.pop %v1170
        %v1172 = vmul.f32 %v1169, 1.442695
        %v1173 = vpow.pop %v1172
        %v1174 = vsel %vm880, %v1171, 0.0
        %1175 = vadd.xlane.f32.xlu0 %v1174
        %v1176 = vpop.xlane.xlu0 %1175
        %v1177 = vsel %vm880, %v1173, 0.0
        %1178 = vadd.xlane.f32.xlu0 %v1177
        %v1179 = vpop.xlane.xlu0 %1178
        %v1180 = vrcp.pop %v1176
        %v1181 = vmul.f32 %v1171, %v1180
        %v1182 = vrcp.pop %v1179
        %v1183 = vmul.f32 %v1173, %v1182
        %1186 = vrot.lane.b32.xlu0 %v878, 112
        %v1187 = vpop.permute.xlu0 %1186
        %1188 = vrot.lane.b32.xlu0 %v879, 112
        %v1189 = vpop.permute.xlu0 %1188
        %v1193 = vsel %vm880, %v1181, 0
        %v1196 = vsel %vm880, %v1183, 0
        %1198 = vmatprep.subr.mxu0 0.0
        %1199 = vmatpush1.msra.mxu0 0.0
        %1200 = vmatprep.subr.mxu0 0.0
        %1201 = vmatpush1.msra.mxu0 0.0
        %1202 = vmatprep.subr.mxu0 0.0
        %1203 = vmatpush1.msra.mxu0 0.0
        %1204 = vmatprep.subr.mxu0 0.0
        %1205 = vmatpush1.msra.mxu0 0.0
        %1206 = vmatprep.subr.mxu0 0.0
        %1207 = vmatpush1.msra.mxu0 0.0
        %1208 = vmatprep.subr.mxu0 0.0
        %1209 = vmatpush1.msra.mxu0 0.0
        %1210 = vmatprep.subr.mxu0 0.0
        %1211 = vmatpush1.msra.mxu0 0.0
        %1212 = vmatprep.subr.mxu0 0.0
        %1213 = vmatpush1.msra.mxu0 0.0
        %1214 = vmatprep.subr.mxu0 0.0
        %1215 = vmatpush1.msra.mxu0 0.0
        %1216 = vmatprep.subr.mxu0 0.0
        %1217 = vmatpush1.msra.mxu0 0.0
        %1218 = vmatprep.subr.mxu0 0.0
        %1219 = vmatpush1.msra.mxu0 0.0
        %1220 = vmatprep.subr.mxu0 0.0
        %1221 = vmatpush1.msra.mxu0 0.0
        %1222 = vmatprep.subr.mxu0 0.0
        %1223 = vmatpush1.msra.mxu0 0.0
        %1224 = vmatprep.subr.mxu0 0.0
        %1225 = vmatpush1.msra.mxu0 0.0
        %1226 = vmatprep.subr.mxu0 0.0
        %1227 = vmatpush1.msra.mxu0 %v1189
        %1228 = vmatprep.subr.mxu0 0.0
        %1229 = vmatpush1.msra.mxu0 %v1187
        %1230 = vmatprep.subr.mxu0 0.0
        %1231 = vmatpush2.msra.mxu0 0.0
        %1232 = vmatprep.subr.mxu0 0.0
        %1233 = vmatpush2.msra.mxu0 0.0
        %1234 = vmatprep.subr.mxu0 0.0
        %1235 = vmatpush2.msra.mxu0 0.0
        %1236 = vmatprep.subr.mxu0 0.0
        %1237 = vmatpush2.msra.mxu0 0.0
        %1238 = vmatprep.subr.mxu0 0.0
        %1239 = vmatpush2.msra.mxu0 0.0
        %1240 = vmatprep.subr.mxu0 0.0
        %1241 = vmatpush2.msra.mxu0 0.0
        %1242 = vmatprep.subr.mxu0 0.0
        %1243 = vmatpush2.msra.mxu0 0.0
        %1244 = vmatprep.subr.mxu0 0.0
        %1245 = vmatpush2.msra.mxu0 0.0
        %1246 = vmatprep.subr.mxu0 0.0
        %1247 = vmatpush2.msra.mxu0 0.0
        %1248 = vmatprep.subr.mxu0 0.0
        %1249 = vmatpush2.msra.mxu0 0.0
        %1250 = vmatprep.subr.mxu0 0.0
        %1251 = vmatpush2.msra.mxu0 0.0
        %1252 = vmatprep.subr.mxu0 0.0
        %1253 = vmatpush2.msra.mxu0 0.0
        %1254 = vmatprep.subr.mxu0 0.0
        %1255 = vmatpush2.msra.mxu0 0.0
        %1256 = vmatprep.subr.mxu0 0.0
        %1257 = vmatpush2.msra.mxu0 0.0
        %1258 = vmatprep.subr.mxu0 0.0
        %1259 = vmatpush2.msra.mxu0 0.0
        %1260 = vmatprep.subr.mxu0 0.0
        %1261 = vmatpush2.msra.mxu0 0.0
        %1262 = vmatprep.mubr.f32.mxu0 0.0
        %1263 = vmatmul.mubr.f32.gmra.mxu0 %v1193
        %v1264 = vpop.f32.mrf.mxu0
        %v1265 = vadd.f32 0.0, %v1264
        %v1266 = vpop.f32.mrf.mxu0
        %1267 = vmatprep.mubr.f32.mxu0 0.0
        %1268 = vmatmul.mubr.f32.gmra.mxu0 %v1196
        %v1269 = vpop.f32.mrf.mxu0
        %v1270 = vadd.f32 0.0, %v1269
        %v1271 = vpop.f32.mrf.mxu0
        %1272 = vdwg.mxu0
        %1273 = vrot.lane.b32.xlu0 %v866, 96
        %v1274 = vpop.permute.xlu0 %1273
        %1275 = vrot.lane.b32.xlu0 %v867, 96
        %v1276 = vpop.permute.xlu0 %1275
        %1277 = vrot.lane.b32.xlu0 %v872, 96
        %v1278 = vpop.permute.xlu0 %1277
        %1279 = vrot.lane.b32.xlu0 %v873, 96
        %v1280 = vpop.permute.xlu0 %1279
        %v1281 = vsel %vm880, %v1274, 0
        %v1283 = vsel %vm880, %v1276, 0
        %v1285 = vsel %vm880, %v1278, 0
        %v1287 = vsel %vm880, %v1280, 0
        %1289 = vmatprep.subr.mxu0 0.0
        %1290 = vmatpush1.xpose.msra.mxu0 0.0
        %1291 = vmatprep.subr.mxu0 0.0
        %1292 = vmatpush1.xpose.msra.mxu0 0.0
        %1293 = vmatprep.subr.mxu0 0.0
        %1294 = vmatpush1.xpose.msra.mxu0 0.0
        %1295 = vmatprep.subr.mxu0 0.0
        %1296 = vmatpush1.xpose.msra.mxu0 0.0
        %1297 = vmatprep.subr.mxu0 0.0
        %1298 = vmatpush1.xpose.msra.mxu0 0.0
        %1299 = vmatprep.subr.mxu0 0.0
        %1300 = vmatpush1.xpose.msra.mxu0 0.0
        %1301 = vmatprep.subr.mxu0 0.0
        %1302 = vmatpush1.xpose.msra.mxu0 0.0
        %1303 = vmatprep.subr.mxu0 0.0
        %1304 = vmatpush1.xpose.msra.mxu0 0.0
        %1305 = vmatprep.subr.mxu0 0.0
        %1306 = vmatpush1.xpose.msra.mxu0 0.0
        %1307 = vmatprep.subr.mxu0 0.0
        %1308 = vmatpush1.xpose.msra.mxu0 0.0
        %1309 = vmatprep.subr.mxu0 0.0
        %1310 = vmatpush1.xpose.msra.mxu0 0.0
        %1311 = vmatprep.subr.mxu0 0.0
        %1312 = vmatpush1.xpose.msra.mxu0 0.0
        %1313 = vmatprep.subr.mxu0 0.0
        %1314 = vmatpush1.xpose.msra.mxu0 0.0
        %1315 = vmatprep.subr.mxu0 0.0
        %1316 = vmatpush1.xpose.msra.mxu0 0.0
        %1317 = vmatprep.subr.mxu0 0.0
        %1318 = vmatpush1.xpose.msra.mxu0 %v1287
        %1319 = vmatprep.subr.mxu0 0.0
        %1320 = vmatpush1.xpose.msra.mxu0 %v1285
        %1321 = vmatprep.subr.mxu0 0.0
        %1322 = vmatpush2.xpose.msra.mxu0 0.0
        %1323 = vmatprep.subr.mxu0 0.0
        %1324 = vmatpush2.xpose.msra.mxu0 0.0
        %1325 = vmatprep.subr.mxu0 0.0
        %1326 = vmatpush2.xpose.msra.mxu0 0.0
        %1327 = vmatprep.subr.mxu0 0.0
        %1328 = vmatpush2.xpose.msra.mxu0 0.0
        %1329 = vmatprep.subr.mxu0 0.0
        %1330 = vmatpush2.xpose.msra.mxu0 0.0
        %1331 = vmatprep.subr.mxu0 0.0
        %1332 = vmatpush2.xpose.msra.mxu0 0.0
        %1333 = vmatprep.subr.mxu0 0.0
        %1334 = vmatpush2.xpose.msra.mxu0 0.0
        %1335 = vmatprep.subr.mxu0 0.0
        %1336 = vmatpush2.xpose.msra.mxu0 0.0
        %1337 = vmatprep.subr.mxu0 0.0
        %1338 = vmatpush2.xpose.msra.mxu0 0.0
        %1339 = vmatprep.subr.mxu0 0.0
        %1340 = vmatpush2.xpose.msra.mxu0 0.0
        %1341 = vmatprep.subr.mxu0 0.0
        %1342 = vmatpush2.xpose.msra.mxu0 0.0
        %1343 = vmatprep.subr.mxu0 0.0
        %1344 = vmatpush2.xpose.msra.mxu0 0.0
        %1345 = vmatprep.subr.mxu0 0.0
        %1346 = vmatpush2.xpose.msra.mxu0 0.0
        %1347 = vmatprep.subr.mxu0 0.0
        %1348 = vmatpush2.xpose.msra.mxu0 0.0
        %1349 = vmatprep.subr.mxu0 0.0
        %1350 = vmatpush2.xpose.msra.mxu0 0.0
        %1351 = vmatprep.subr.mxu0 0.0
        %1352 = vmatpush2.xpose.msra.mxu0 0.0
        %1353 = vmatprep.mubr.f32.mxu0 0.0
        %1354 = vmatmul.mubr.f32.gmra.mxu0 %v1281
        %v1355 = vpop.f32.mrf.mxu0
        %v1356 = vadd.f32 %v609, %v1355
        %v1357 = vpop.f32.mrf.mxu0
        %1358 = vmatprep.mubr.f32.mxu0 0.0
        %1359 = vmatmul.mubr.f32.gmra.mxu0 %v1283
        %v1360 = vpop.f32.mrf.mxu0
        %v1361 = vadd.f32 %v609, %v1360
        %v1362 = vpop.f32.mrf.mxu0
        %1363 = vdwg.mxu0
        %v1364 = vsel %vm880, %v1356, -inf
        %1365 = vmax.xlane.f32.xlu0 %v1364
        %v1366 = vpop.xlane.xlu0 %1365
        %v1367 = vsel %vm880, %v1361, -inf
        %1368 = vmax.xlane.f32.xlu0 %v1367
        %v1369 = vpop.xlane.xlu0 %1368
        %v1370 = vsub.f32 %v1356, %v1366
        %v1371 = vsub.f32 %v1361, %v1369
        %v1372 = vmul.f32 %v1370, 1.442695
        %v1373 = vpow.pop %v1372
        %v1374 = vmul.f32 %v1371, 1.442695
        %v1375 = vpow.pop %v1374
        %v1376 = vsel %vm880, %v1373, 0.0
        %1377 = vadd.xlane.f32.xlu0 %v1376
        %v1378 = vpop.xlane.xlu0 %1377
        %v1379 = vsel %vm880, %v1375, 0.0
        %1380 = vadd.xlane.f32.xlu0 %v1379
        %v1381 = vpop.xlane.xlu0 %1380
        %v1382 = vrcp.pop %v1378
        %v1383 = vmul.f32 %v1373, %v1382
        %v1384 = vrcp.pop %v1381
        %v1385 = vmul.f32 %v1375, %v1384
        %1386 = vrot.lane.b32.xlu0 %v878, 96
        %v1387 = vpop.permute.xlu0 %1386
        %1388 = vrot.lane.b32.xlu0 %v879, 96
        %v1389 = vpop.permute.xlu0 %1388
        %v1393 = vsel %vm880, %v1383, 0
        %v1396 = vsel %vm880, %v1385, 0
        %1398 = vmatprep.subr.mxu0 0.0
        %1399 = vmatpush1.msra.mxu0 0.0
        %1400 = vmatprep.subr.mxu0 0.0
        %1401 = vmatpush1.msra.mxu0 0.0
        %1402 = vmatprep.subr.mxu0 0.0
        %1403 = vmatpush1.msra.mxu0 0.0
        %1404 = vmatprep.subr.mxu0 0.0
        %1405 = vmatpush1.msra.mxu0 0.0
        %1406 = vmatprep.subr.mxu0 0.0
        %1407 = vmatpush1.msra.mxu0 0.0
        %1408 = vmatprep.subr.mxu0 0.0
        %1409 = vmatpush1.msra.mxu0 0.0
        %1410 = vmatprep.subr.mxu0 0.0
        %1411 = vmatpush1.msra.mxu0 0.0
        %1412 = vmatprep.subr.mxu0 0.0
        %1413 = vmatpush1.msra.mxu0 0.0
        %1414 = vmatprep.subr.mxu0 0.0
        %1415 = vmatpush1.msra.mxu0 0.0
        %1416 = vmatprep.subr.mxu0 0.0
        %1417 = vmatpush1.msra.mxu0 0.0
        %1418 = vmatprep.subr.mxu0 0.0
        %1419 = vmatpush1.msra.mxu0 0.0
        %1420 = vmatprep.subr.mxu0 0.0
        %1421 = vmatpush1.msra.mxu0 0.0
        %1422 = vmatprep.subr.mxu0 0.0
        %1423 = vmatpush1.msra.mxu0 0.0
        %1424 = vmatprep.subr.mxu0 0.0
        %1425 = vmatpush1.msra.mxu0 0.0
        %1426 = vmatprep.subr.mxu0 0.0
        %1427 = vmatpush1.msra.mxu0 %v1389
        %1428 = vmatprep.subr.mxu0 0.0
        %1429 = vmatpush1.msra.mxu0 %v1387
        %1430 = vmatprep.subr.mxu0 0.0
        %1431 = vmatpush2.msra.mxu0 0.0
        %1432 = vmatprep.subr.mxu0 0.0
        %1433 = vmatpush2.msra.mxu0 0.0
        %1434 = vmatprep.subr.mxu0 0.0
        %1435 = vmatpush2.msra.mxu0 0.0
        %1436 = vmatprep.subr.mxu0 0.0
        %1437 = vmatpush2.msra.mxu0 0.0
        %1438 = vmatprep.subr.mxu0 0.0
        %1439 = vmatpush2.msra.mxu0 0.0
        %1440 = vmatprep.subr.mxu0 0.0
        %1441 = vmatpush2.msra.mxu0 0.0
        %1442 = vmatprep.subr.mxu0 0.0
        %1443 = vmatpush2.msra.mxu0 0.0
        %1444 = vmatprep.subr.mxu0 0.0
        %1445 = vmatpush2.msra.mxu0 0.0
        %1446 = vmatprep.subr.mxu0 0.0
        %1447 = vmatpush2.msra.mxu0 0.0
        %1448 = vmatprep.subr.mxu0 0.0
        %1449 = vmatpush2.msra.mxu0 0.0
        %1450 = vmatprep.subr.mxu0 0.0
        %1451 = vmatpush2.msra.mxu0 0.0
        %1452 = vmatprep.subr.mxu0 0.0
        %1453 = vmatpush2.msra.mxu0 0.0
        %1454 = vmatprep.subr.mxu0 0.0
        %1455 = vmatpush2.msra.mxu0 0.0
        %1456 = vmatprep.subr.mxu0 0.0
        %1457 = vmatpush2.msra.mxu0 0.0
        %1458 = vmatprep.subr.mxu0 0.0
        %1459 = vmatpush2.msra.mxu0 0.0
        %1460 = vmatprep.subr.mxu0 0.0
        %1461 = vmatpush2.msra.mxu0 0.0
        %1462 = vmatprep.mubr.f32.mxu0 0.0
        %1463 = vmatmul.mubr.f32.gmra.mxu0 %v1393
        %v1464 = vpop.f32.mrf.mxu0
        %v1465 = vadd.f32 0.0, %v1464
        %v1466 = vpop.f32.mrf.mxu0
        %1467 = vmatprep.mubr.f32.mxu0 0.0
        %1468 = vmatmul.mubr.f32.gmra.mxu0 %v1396
        %v1469 = vpop.f32.mrf.mxu0
        %v1470 = vadd.f32 0.0, %v1469
        %v1471 = vpop.f32.mrf.mxu0
        %1472 = vdwg.mxu0
        %1473 = vrot.lane.b32.xlu0 %v866, 80
        %v1474 = vpop.permute.xlu0 %1473
        %1475 = vrot.lane.b32.xlu0 %v867, 80
        %v1476 = vpop.permute.xlu0 %1475
        %1477 = vrot.lane.b32.xlu0 %v872, 80
        %v1478 = vpop.permute.xlu0 %1477
        %1479 = vrot.lane.b32.xlu0 %v873, 80
        %v1480 = vpop.permute.xlu0 %1479
        %v1481 = vsel %vm880, %v1474, 0
        %v1483 = vsel %vm880, %v1476, 0
        %v1485 = vsel %vm880, %v1478, 0
        %v1487 = vsel %vm880, %v1480, 0
        %1489 = vmatprep.subr.mxu0 0.0
        %1490 = vmatpush1.xpose.msra.mxu0 0.0
        %1491 = vmatprep.subr.mxu0 0.0
        %1492 = vmatpush1.xpose.msra.mxu0 0.0
        %1493 = vmatprep.subr.mxu0 0.0
        %1494 = vmatpush1.xpose.msra.mxu0 0.0
        %1495 = vmatprep.subr.mxu0 0.0
        %1496 = vmatpush1.xpose.msra.mxu0 0.0
        %1497 = vmatprep.subr.mxu0 0.0
        %1498 = vmatpush1.xpose.msra.mxu0 0.0
        %1499 = vmatprep.subr.mxu0 0.0
        %1500 = vmatpush1.xpose.msra.mxu0 0.0
        %1501 = vmatprep.subr.mxu0 0.0
        %1502 = vmatpush1.xpose.msra.mxu0 0.0
        %1503 = vmatprep.subr.mxu0 0.0
        %1504 = vmatpush1.xpose.msra.mxu0 0.0
        %1505 = vmatprep.subr.mxu0 0.0
        %1506 = vmatpush1.xpose.msra.mxu0 0.0
        %1507 = vmatprep.subr.mxu0 0.0
        %1508 = vmatpush1.xpose.msra.mxu0 0.0
        %1509 = vmatprep.subr.mxu0 0.0
        %1510 = vmatpush1.xpose.msra.mxu0 0.0
        %1511 = vmatprep.subr.mxu0 0.0
        %1512 = vmatpush1.xpose.msra.mxu0 0.0
        %1513 = vmatprep.subr.mxu0 0.0
        %1514 = vmatpush1.xpose.msra.mxu0 0.0
        %1515 = vmatprep.subr.mxu0 0.0
        %1516 = vmatpush1.xpose.msra.mxu0 0.0
        %1517 = vmatprep.subr.mxu0 0.0
        %1518 = vmatpush1.xpose.msra.mxu0 %v1487
        %1519 = vmatprep.subr.mxu0 0.0
        %1520 = vmatpush1.xpose.msra.mxu0 %v1485
        %1521 = vmatprep.subr.mxu0 0.0
        %1522 = vmatpush2.xpose.msra.mxu0 0.0
        %1523 = vmatprep.subr.mxu0 0.0
        %1524 = vmatpush2.xpose.msra.mxu0 0.0
        %1525 = vmatprep.subr.mxu0 0.0
        %1526 = vmatpush2.xpose.msra.mxu0 0.0
        %1527 = vmatprep.subr.mxu0 0.0
        %1528 = vmatpush2.xpose.msra.mxu0 0.0
        %1529 = vmatprep.subr.mxu0 0.0
        %1530 = vmatpush2.xpose.msra.mxu0 0.0
        %1531 = vmatprep.subr.mxu0 0.0
        %1532 = vmatpush2.xpose.msra.mxu0 0.0
        %1533 = vmatprep.subr.mxu0 0.0
        %1534 = vmatpush2.xpose.msra.mxu0 0.0
        %1535 = vmatprep.subr.mxu0 0.0
        %1536 = vmatpush2.xpose.msra.mxu0 0.0
        %1537 = vmatprep.subr.mxu0 0.0
        %1538 = vmatpush2.xpose.msra.mxu0 0.0
        %1539 = vmatprep.subr.mxu0 0.0
        %1540 = vmatpush2.xpose.msra.mxu0 0.0
        %1541 = vmatprep.subr.mxu0 0.0
        %1542 = vmatpush2.xpose.msra.mxu0 0.0
        %1543 = vmatprep.subr.mxu0 0.0
        %1544 = vmatpush2.xpose.msra.mxu0 0.0
        %1545 = vmatprep.subr.mxu0 0.0
        %1546 = vmatpush2.xpose.msra.mxu0 0.0
        %1547 = vmatprep.subr.mxu0 0.0
        %1548 = vmatpush2.xpose.msra.mxu0 0.0
        %1549 = vmatprep.subr.mxu0 0.0
        %1550 = vmatpush2.xpose.msra.mxu0 0.0
        %1551 = vmatprep.subr.mxu0 0.0
        %1552 = vmatpush2.xpose.msra.mxu0 0.0
        %1553 = vmatprep.mubr.f32.mxu0 0.0
        %1554 = vmatmul.mubr.f32.gmra.mxu0 %v1481
        %v1555 = vpop.f32.mrf.mxu0
        %v1556 = vadd.f32 %v609, %v1555
        %v1557 = vpop.f32.mrf.mxu0
        %1558 = vmatprep.mubr.f32.mxu0 0.0
        %1559 = vmatmul.mubr.f32.gmra.mxu0 %v1483
        %v1560 = vpop.f32.mrf.mxu0
        %v1561 = vadd.f32 %v609, %v1560
        %v1562 = vpop.f32.mrf.mxu0
        %1563 = vdwg.mxu0
        %v1564 = vsel %vm880, %v1556, -inf
        %1565 = vmax.xlane.f32.xlu0 %v1564
        %v1566 = vpop.xlane.xlu0 %1565
        %v1567 = vsel %vm880, %v1561, -inf
        %1568 = vmax.xlane.f32.xlu0 %v1567
        %v1569 = vpop.xlane.xlu0 %1568
        %v1570 = vsub.f32 %v1556, %v1566
        %v1571 = vsub.f32 %v1561, %v1569
        %v1572 = vmul.f32 %v1570, 1.442695
        %v1573 = vpow.pop %v1572
        %v1574 = vmul.f32 %v1571, 1.442695
        %v1575 = vpow.pop %v1574
        %v1576 = vsel %vm880, %v1573, 0.0
        %1577 = vadd.xlane.f32.xlu0 %v1576
        %v1578 = vpop.xlane.xlu0 %1577
        %v1579 = vsel %vm880, %v1575, 0.0
        %1580 = vadd.xlane.f32.xlu0 %v1579
        %v1581 = vpop.xlane.xlu0 %1580
        %v1582 = vrcp.pop %v1578
        %v1583 = vmul.f32 %v1573, %v1582
        %v1584 = vrcp.pop %v1581
        %v1585 = vmul.f32 %v1575, %v1584
        %1586 = vrot.lane.b32.xlu0 %v878, 80
        %v1587 = vpop.permute.xlu0 %1586
        %1588 = vrot.lane.b32.xlu0 %v879, 80
        %v1589 = vpop.permute.xlu0 %1588
        %v1593 = vsel %vm880, %v1583, 0
        %v1596 = vsel %vm880, %v1585, 0
        %1598 = vmatprep.subr.mxu0 0.0
        %1599 = vmatpush1.msra.mxu0 0.0
        %1600 = vmatprep.subr.mxu0 0.0
        %1601 = vmatpush1.msra.mxu0 0.0
        %1602 = vmatprep.subr.mxu0 0.0
        %1603 = vmatpush1.msra.mxu0 0.0
        %1604 = vmatprep.subr.mxu0 0.0
        %1605 = vmatpush1.msra.mxu0 0.0
        %1606 = vmatprep.subr.mxu0 0.0
        %1607 = vmatpush1.msra.mxu0 0.0
        %1608 = vmatprep.subr.mxu0 0.0
        %1609 = vmatpush1.msra.mxu0 0.0
        %1610 = vmatprep.subr.mxu0 0.0
        %1611 = vmatpush1.msra.mxu0 0.0
        %1612 = vmatprep.subr.mxu0 0.0
        %1613 = vmatpush1.msra.mxu0 0.0
        %1614 = vmatprep.subr.mxu0 0.0
        %1615 = vmatpush1.msra.mxu0 0.0
        %1616 = vmatprep.subr.mxu0 0.0
        %1617 = vmatpush1.msra.mxu0 0.0
        %1618 = vmatprep.subr.mxu0 0.0
        %1619 = vmatpush1.msra.mxu0 0.0
        %1620 = vmatprep.subr.mxu0 0.0
        %1621 = vmatpush1.msra.mxu0 0.0
        %1622 = vmatprep.subr.mxu0 0.0
        %1623 = vmatpush1.msra.mxu0 0.0
        %1624 = vmatprep.subr.mxu0 0.0
        %1625 = vmatpush1.msra.mxu0 0.0
        %1626 = vmatprep.subr.mxu0 0.0
        %1627 = vmatpush1.msra.mxu0 %v1589
        %1628 = vmatprep.subr.mxu0 0.0
        %1629 = vmatpush1.msra.mxu0 %v1587
        %1630 = vmatprep.subr.mxu0 0.0
        %1631 = vmatpush2.msra.mxu0 0.0
        %1632 = vmatprep.subr.mxu0 0.0
        %1633 = vmatpush2.msra.mxu0 0.0
        %1634 = vmatprep.subr.mxu0 0.0
        %1635 = vmatpush2.msra.mxu0 0.0
        %1636 = vmatprep.subr.mxu0 0.0
        %1637 = vmatpush2.msra.mxu0 0.0
        %1638 = vmatprep.subr.mxu0 0.0
        %1639 = vmatpush2.msra.mxu0 0.0
        %1640 = vmatprep.subr.mxu0 0.0
        %1641 = vmatpush2.msra.mxu0 0.0
        %1642 = vmatprep.subr.mxu0 0.0
        %1643 = vmatpush2.msra.mxu0 0.0
        %1644 = vmatprep.subr.mxu0 0.0
        %1645 = vmatpush2.msra.mxu0 0.0
        %1646 = vmatprep.subr.mxu0 0.0
        %1647 = vmatpush2.msra.mxu0 0.0
        %1648 = vmatprep.subr.mxu0 0.0
        %1649 = vmatpush2.msra.mxu0 0.0
        %1650 = vmatprep.subr.mxu0 0.0
        %1651 = vmatpush2.msra.mxu0 0.0
        %1652 = vmatprep.subr.mxu0 0.0
        %1653 = vmatpush2.msra.mxu0 0.0
        %1654 = vmatprep.subr.mxu0 0.0
        %1655 = vmatpush2.msra.mxu0 0.0
        %1656 = vmatprep.subr.mxu0 0.0
        %1657 = vmatpush2.msra.mxu0 0.0
        %1658 = vmatprep.subr.mxu0 0.0
        %1659 = vmatpush2.msra.mxu0 0.0
        %1660 = vmatprep.subr.mxu0 0.0
        %1661 = vmatpush2.msra.mxu0 0.0
        %1662 = vmatprep.mubr.f32.mxu0 0.0
        %1663 = vmatmul.mubr.f32.gmra.mxu0 %v1593
        %v1664 = vpop.f32.mrf.mxu0
        %v1665 = vadd.f32 0.0, %v1664
        %v1666 = vpop.f32.mrf.mxu0
        %1667 = vmatprep.mubr.f32.mxu0 0.0
        %1668 = vmatmul.mubr.f32.gmra.mxu0 %v1596
        %v1669 = vpop.f32.mrf.mxu0
        %v1670 = vadd.f32 0.0, %v1669
        %v1671 = vpop.f32.mrf.mxu0
        %1672 = vdwg.mxu0
        %1673 = vrot.lane.b32.xlu0 %v866, 64
        %v1674 = vpop.permute.xlu0 %1673
        %1675 = vrot.lane.b32.xlu0 %v867, 64
        %v1676 = vpop.permute.xlu0 %1675
        %1677 = vrot.lane.b32.xlu0 %v872, 64
        %v1678 = vpop.permute.xlu0 %1677
        %1679 = vrot.lane.b32.xlu0 %v873, 64
        %v1680 = vpop.permute.xlu0 %1679
        %v1681 = vsel %vm880, %v1674, 0
        %v1683 = vsel %vm880, %v1676, 0
        %v1685 = vsel %vm880, %v1678, 0
        %v1687 = vsel %vm880, %v1680, 0
        %1689 = vmatprep.subr.mxu0 0.0
        %1690 = vmatpush1.xpose.msra.mxu0 0.0
        %1691 = vmatprep.subr.mxu0 0.0
        %1692 = vmatpush1.xpose.msra.mxu0 0.0
        %1693 = vmatprep.subr.mxu0 0.0
        %1694 = vmatpush1.xpose.msra.mxu0 0.0
        %1695 = vmatprep.subr.mxu0 0.0
        %1696 = vmatpush1.xpose.msra.mxu0 0.0
        %1697 = vmatprep.subr.mxu0 0.0
        %1698 = vmatpush1.xpose.msra.mxu0 0.0
        %1699 = vmatprep.subr.mxu0 0.0
        %1700 = vmatpush1.xpose.msra.mxu0 0.0
        %1701 = vmatprep.subr.mxu0 0.0
        %1702 = vmatpush1.xpose.msra.mxu0 0.0
        %1703 = vmatprep.subr.mxu0 0.0
        %1704 = vmatpush1.xpose.msra.mxu0 0.0
        %1705 = vmatprep.subr.mxu0 0.0
        %1706 = vmatpush1.xpose.msra.mxu0 0.0
        %1707 = vmatprep.subr.mxu0 0.0
        %1708 = vmatpush1.xpose.msra.mxu0 0.0
        %1709 = vmatprep.subr.mxu0 0.0
        %1710 = vmatpush1.xpose.msra.mxu0 0.0
        %1711 = vmatprep.subr.mxu0 0.0
        %1712 = vmatpush1.xpose.msra.mxu0 0.0
        %1713 = vmatprep.subr.mxu0 0.0
        %1714 = vmatpush1.xpose.msra.mxu0 0.0
        %1715 = vmatprep.subr.mxu0 0.0
        %1716 = vmatpush1.xpose.msra.mxu0 0.0
        %1717 = vmatprep.subr.mxu0 0.0
        %1718 = vmatpush1.xpose.msra.mxu0 %v1687
        %1719 = vmatprep.subr.mxu0 0.0
        %1720 = vmatpush1.xpose.msra.mxu0 %v1685
        %1721 = vmatprep.subr.mxu0 0.0
        %1722 = vmatpush2.xpose.msra.mxu0 0.0
        %1723 = vmatprep.subr.mxu0 0.0
        %1724 = vmatpush2.xpose.msra.mxu0 0.0
        %1725 = vmatprep.subr.mxu0 0.0
        %1726 = vmatpush2.xpose.msra.mxu0 0.0
        %1727 = vmatprep.subr.mxu0 0.0
        %1728 = vmatpush2.xpose.msra.mxu0 0.0
        %1729 = vmatprep.subr.mxu0 0.0
        %1730 = vmatpush2.xpose.msra.mxu0 0.0
        %1731 = vmatprep.subr.mxu0 0.0
        %1732 = vmatpush2.xpose.msra.mxu0 0.0
        %1733 = vmatprep.subr.mxu0 0.0
        %1734 = vmatpush2.xpose.msra.mxu0 0.0
        %1735 = vmatprep.subr.mxu0 0.0
        %1736 = vmatpush2.xpose.msra.mxu0 0.0
        %1737 = vmatprep.subr.mxu0 0.0
        %1738 = vmatpush2.xpose.msra.mxu0 0.0
        %1739 = vmatprep.subr.mxu0 0.0
        %1740 = vmatpush2.xpose.msra.mxu0 0.0
        %1741 = vmatprep.subr.mxu0 0.0
        %1742 = vmatpush2.xpose.msra.mxu0 0.0
        %1743 = vmatprep.subr.mxu0 0.0
        %1744 = vmatpush2.xpose.msra.mxu0 0.0
        %1745 = vmatprep.subr.mxu0 0.0
        %1746 = vmatpush2.xpose.msra.mxu0 0.0
        %1747 = vmatprep.subr.mxu0 0.0
        %1748 = vmatpush2.xpose.msra.mxu0 0.0
        %1749 = vmatprep.subr.mxu0 0.0
        %1750 = vmatpush2.xpose.msra.mxu0 0.0
        %1751 = vmatprep.subr.mxu0 0.0
        %1752 = vmatpush2.xpose.msra.mxu0 0.0
        %1753 = vmatprep.mubr.f32.mxu0 0.0
        %1754 = vmatmul.mubr.f32.gmra.mxu0 %v1681
        %v1755 = vpop.f32.mrf.mxu0
        %v1756 = vadd.f32 %v609, %v1755
        %v1757 = vpop.f32.mrf.mxu0
        %1758 = vmatprep.mubr.f32.mxu0 0.0
        %1759 = vmatmul.mubr.f32.gmra.mxu0 %v1683
        %v1760 = vpop.f32.mrf.mxu0
        %v1761 = vadd.f32 %v609, %v1760
        %v1762 = vpop.f32.mrf.mxu0
        %1763 = vdwg.mxu0
        %v1764 = vsel %vm880, %v1756, -inf
        %1765 = vmax.xlane.f32.xlu0 %v1764
        %v1766 = vpop.xlane.xlu0 %1765
        %v1767 = vsel %vm880, %v1761, -inf
        %1768 = vmax.xlane.f32.xlu0 %v1767
        %v1769 = vpop.xlane.xlu0 %1768
        %v1770 = vsub.f32 %v1756, %v1766
        %v1771 = vsub.f32 %v1761, %v1769
        %v1772 = vmul.f32 %v1770, 1.442695
        %v1773 = vpow.pop %v1772
        %v1774 = vmul.f32 %v1771, 1.442695
        %v1775 = vpow.pop %v1774
        %v1776 = vsel %vm880, %v1773, 0.0
        %1777 = vadd.xlane.f32.xlu0 %v1776
        %v1778 = vpop.xlane.xlu0 %1777
        %v1779 = vsel %vm880, %v1775, 0.0
        %1780 = vadd.xlane.f32.xlu0 %v1779
        %v1781 = vpop.xlane.xlu0 %1780
        %v1782 = vrcp.pop %v1778
        %v1783 = vmul.f32 %v1773, %v1782
        %v1784 = vrcp.pop %v1781
        %v1785 = vmul.f32 %v1775, %v1784
        %1786 = vrot.lane.b32.xlu0 %v878, 64
        %v1787 = vpop.permute.xlu0 %1786
        %1788 = vrot.lane.b32.xlu0 %v879, 64
        %v1789 = vpop.permute.xlu0 %1788
        %v1793 = vsel %vm880, %v1783, 0
        %v1796 = vsel %vm880, %v1785, 0
        %1798 = vmatprep.subr.mxu0 0.0
        %1799 = vmatpush1.msra.mxu0 0.0
        %1800 = vmatprep.subr.mxu0 0.0
        %1801 = vmatpush1.msra.mxu0 0.0
        %1802 = vmatprep.subr.mxu0 0.0
        %1803 = vmatpush1.msra.mxu0 0.0
        %1804 = vmatprep.subr.mxu0 0.0
        %1805 = vmatpush1.msra.mxu0 0.0
        %1806 = vmatprep.subr.mxu0 0.0
        %1807 = vmatpush1.msra.mxu0 0.0
        %1808 = vmatprep.subr.mxu0 0.0
        %1809 = vmatpush1.msra.mxu0 0.0
        %1810 = vmatprep.subr.mxu0 0.0
        %1811 = vmatpush1.msra.mxu0 0.0
        %1812 = vmatprep.subr.mxu0 0.0
        %1813 = vmatpush1.msra.mxu0 0.0
        %1814 = vmatprep.subr.mxu0 0.0
        %1815 = vmatpush1.msra.mxu0 0.0
        %1816 = vmatprep.subr.mxu0 0.0
        %1817 = vmatpush1.msra.mxu0 0.0
        %1818 = vmatprep.subr.mxu0 0.0
        %1819 = vmatpush1.msra.mxu0 0.0
        %1820 = vmatprep.subr.mxu0 0.0
        %1821 = vmatpush1.msra.mxu0 0.0
        %1822 = vmatprep.subr.mxu0 0.0
        %1823 = vmatpush1.msra.mxu0 0.0
        %1824 = vmatprep.subr.mxu0 0.0
        %1825 = vmatpush1.msra.mxu0 0.0
        %1826 = vmatprep.subr.mxu0 0.0
        %1827 = vmatpush1.msra.mxu0 %v1789
        %1828 = vmatprep.subr.mxu0 0.0
        %1829 = vmatpush1.msra.mxu0 %v1787
        %1830 = vmatprep.subr.mxu0 0.0
        %1831 = vmatpush2.msra.mxu0 0.0
        %1832 = vmatprep.subr.mxu0 0.0
        %1833 = vmatpush2.msra.mxu0 0.0
        %1834 = vmatprep.subr.mxu0 0.0
        %1835 = vmatpush2.msra.mxu0 0.0
        %1836 = vmatprep.subr.mxu0 0.0
        %1837 = vmatpush2.msra.mxu0 0.0
        %1838 = vmatprep.subr.mxu0 0.0
        %1839 = vmatpush2.msra.mxu0 0.0
        %1840 = vmatprep.subr.mxu0 0.0
        %1841 = vmatpush2.msra.mxu0 0.0
        %1842 = vmatprep.subr.mxu0 0.0
        %1843 = vmatpush2.msra.mxu0 0.0
        %1844 = vmatprep.subr.mxu0 0.0
        %1845 = vmatpush2.msra.mxu0 0.0
        %1846 = vmatprep.subr.mxu0 0.0
        %1847 = vmatpush2.msra.mxu0 0.0
        %1848 = vmatprep.subr.mxu0 0.0
        %1849 = vmatpush2.msra.mxu0 0.0
        %1850 = vmatprep.subr.mxu0 0.0
        %1851 = vmatpush2.msra.mxu0 0.0
        %1852 = vmatprep.subr.mxu0 0.0
        %1853 = vmatpush2.msra.mxu0 0.0
        %1854 = vmatprep.subr.mxu0 0.0
        %1855 = vmatpush2.msra.mxu0 0.0
        %1856 = vmatprep.subr.mxu0 0.0
        %1857 = vmatpush2.msra.mxu0 0.0
        %1858 = vmatprep.subr.mxu0 0.0
        %1859 = vmatpush2.msra.mxu0 0.0
        %1860 = vmatprep.subr.mxu0 0.0
        %1861 = vmatpush2.msra.mxu0 0.0
        %1862 = vmatprep.mubr.f32.mxu0 0.0
        %1863 = vmatmul.mubr.f32.gmra.mxu0 %v1793
        %v1864 = vpop.f32.mrf.mxu0
        %v1865 = vadd.f32 0.0, %v1864
        %v1866 = vpop.f32.mrf.mxu0
        %1867 = vmatprep.mubr.f32.mxu0 0.0
        %1868 = vmatmul.mubr.f32.gmra.mxu0 %v1796
        %v1869 = vpop.f32.mrf.mxu0
        %v1870 = vadd.f32 0.0, %v1869
        %v1871 = vpop.f32.mrf.mxu0
        %1872 = vdwg.mxu0
        %1873 = vrot.lane.b32.xlu0 %v866, 48
        %v1874 = vpop.permute.xlu0 %1873
        %1875 = vrot.lane.b32.xlu0 %v867, 48
        %v1876 = vpop.permute.xlu0 %1875
        %1877 = vrot.lane.b32.xlu0 %v872, 48
        %v1878 = vpop.permute.xlu0 %1877
        %1879 = vrot.lane.b32.xlu0 %v873, 48
        %v1880 = vpop.permute.xlu0 %1879
        %v1881 = vsel %vm880, %v1874, 0
        %v1883 = vsel %vm880, %v1876, 0
        %v1885 = vsel %vm880, %v1878, 0
        %v1887 = vsel %vm880, %v1880, 0
        %1889 = vmatprep.subr.mxu0 0.0
        %1890 = vmatpush1.xpose.msra.mxu0 0.0
        %1891 = vmatprep.subr.mxu0 0.0
        %1892 = vmatpush1.xpose.msra.mxu0 0.0
        %1893 = vmatprep.subr.mxu0 0.0
        %1894 = vmatpush1.xpose.msra.mxu0 0.0
        %1895 = vmatprep.subr.mxu0 0.0
        %1896 = vmatpush1.xpose.msra.mxu0 0.0
        %1897 = vmatprep.subr.mxu0 0.0
        %1898 = vmatpush1.xpose.msra.mxu0 0.0
        %1899 = vmatprep.subr.mxu0 0.0
        %1900 = vmatpush1.xpose.msra.mxu0 0.0
        %1901 = vmatprep.subr.mxu0 0.0
        %1902 = vmatpush1.xpose.msra.mxu0 0.0
        %1903 = vmatprep.subr.mxu0 0.0
        %1904 = vmatpush1.xpose.msra.mxu0 0.0
        %1905 = vmatprep.subr.mxu0 0.0
        %1906 = vmatpush1.xpose.msra.mxu0 0.0
        %1907 = vmatprep.subr.mxu0 0.0
        %1908 = vmatpush1.xpose.msra.mxu0 0.0
        %1909 = vmatprep.subr.mxu0 0.0
        %1910 = vmatpush1.xpose.msra.mxu0 0.0
        %1911 = vmatprep.subr.mxu0 0.0
        %1912 = vmatpush1.xpose.msra.mxu0 0.0
        %1913 = vmatprep.subr.mxu0 0.0
        %1914 = vmatpush1.xpose.msra.mxu0 0.0
        %1915 = vmatprep.subr.mxu0 0.0
        %1916 = vmatpush1.xpose.msra.mxu0 0.0
        %1917 = vmatprep.subr.mxu0 0.0
        %1918 = vmatpush1.xpose.msra.mxu0 %v1887
        %1919 = vmatprep.subr.mxu0 0.0
        %1920 = vmatpush1.xpose.msra.mxu0 %v1885
        %1921 = vmatprep.subr.mxu0 0.0
        %1922 = vmatpush2.xpose.msra.mxu0 0.0
        %1923 = vmatprep.subr.mxu0 0.0
        %1924 = vmatpush2.xpose.msra.mxu0 0.0
        %1925 = vmatprep.subr.mxu0 0.0
        %1926 = vmatpush2.xpose.msra.mxu0 0.0
        %1927 = vmatprep.subr.mxu0 0.0
        %1928 = vmatpush2.xpose.msra.mxu0 0.0
        %1929 = vmatprep.subr.mxu0 0.0
        %1930 = vmatpush2.xpose.msra.mxu0 0.0
        %1931 = vmatprep.subr.mxu0 0.0
        %1932 = vmatpush2.xpose.msra.mxu0 0.0
        %1933 = vmatprep.subr.mxu0 0.0
        %1934 = vmatpush2.xpose.msra.mxu0 0.0
        %1935 = vmatprep.subr.mxu0 0.0
        %1936 = vmatpush2.xpose.msra.mxu0 0.0
        %1937 = vmatprep.subr.mxu0 0.0
        %1938 = vmatpush2.xpose.msra.mxu0 0.0
        %1939 = vmatprep.subr.mxu0 0.0
        %1940 = vmatpush2.xpose.msra.mxu0 0.0
        %1941 = vmatprep.subr.mxu0 0.0
        %1942 = vmatpush2.xpose.msra.mxu0 0.0
        %1943 = vmatprep.subr.mxu0 0.0
        %1944 = vmatpush2.xpose.msra.mxu0 0.0
        %1945 = vmatprep.subr.mxu0 0.0
        %1946 = vmatpush2.xpose.msra.mxu0 0.0
        %1947 = vmatprep.subr.mxu0 0.0
        %1948 = vmatpush2.xpose.msra.mxu0 0.0
        %1949 = vmatprep.subr.mxu0 0.0
        %1950 = vmatpush2.xpose.msra.mxu0 0.0
        %1951 = vmatprep.subr.mxu0 0.0
        %1952 = vmatpush2.xpose.msra.mxu0 0.0
        %1953 = vmatprep.mubr.f32.mxu0 0.0
        %1954 = vmatmul.mubr.f32.gmra.mxu0 %v1881
        %v1955 = vpop.f32.mrf.mxu0
        %v1956 = vadd.f32 %v609, %v1955
        %v1957 = vpop.f32.mrf.mxu0
        %1958 = vmatprep.mubr.f32.mxu0 0.0
        %1959 = vmatmul.mubr.f32.gmra.mxu0 %v1883
        %v1960 = vpop.f32.mrf.mxu0
        %v1961 = vadd.f32 %v609, %v1960
        %v1962 = vpop.f32.mrf.mxu0
        %1963 = vdwg.mxu0
        %v1964 = vsel %vm880, %v1956, -inf
        %1965 = vmax.xlane.f32.xlu0 %v1964
        %v1966 = vpop.xlane.xlu0 %1965
        %v1967 = vsel %vm880, %v1961, -inf
        %1968 = vmax.xlane.f32.xlu0 %v1967
        %v1969 = vpop.xlane.xlu0 %1968
        %v1970 = vsub.f32 %v1956, %v1966
        %v1971 = vsub.f32 %v1961, %v1969
        %v1972 = vmul.f32 %v1970, 1.442695
        %v1973 = vpow.pop %v1972
        %v1974 = vmul.f32 %v1971, 1.442695
        %v1975 = vpow.pop %v1974
        %v1976 = vsel %vm880, %v1973, 0.0
        %1977 = vadd.xlane.f32.xlu0 %v1976
        %v1978 = vpop.xlane.xlu0 %1977
        %v1979 = vsel %vm880, %v1975, 0.0
        %1980 = vadd.xlane.f32.xlu0 %v1979
        %v1981 = vpop.xlane.xlu0 %1980
        %v1982 = vrcp.pop %v1978
        %v1983 = vmul.f32 %v1973, %v1982
        %v1984 = vrcp.pop %v1981
        %v1985 = vmul.f32 %v1975, %v1984
        %1986 = vrot.lane.b32.xlu0 %v878, 48
        %v1987 = vpop.permute.xlu0 %1986
        %1988 = vrot.lane.b32.xlu0 %v879, 48
        %v1989 = vpop.permute.xlu0 %1988
        %v1993 = vsel %vm880, %v1983, 0
        %v1996 = vsel %vm880, %v1985, 0
        %1998 = vmatprep.subr.mxu0 0.0
        %1999 = vmatpush1.msra.mxu0 0.0
        %2000 = vmatprep.subr.mxu0 0.0
        %2001 = vmatpush1.msra.mxu0 0.0
        %2002 = vmatprep.subr.mxu0 0.0
        %2003 = vmatpush1.msra.mxu0 0.0
        %2004 = vmatprep.subr.mxu0 0.0
        %2005 = vmatpush1.msra.mxu0 0.0
        %2006 = vmatprep.subr.mxu0 0.0
        %2007 = vmatpush1.msra.mxu0 0.0
        %2008 = vmatprep.subr.mxu0 0.0
        %2009 = vmatpush1.msra.mxu0 0.0
        %2010 = vmatprep.subr.mxu0 0.0
        %2011 = vmatpush1.msra.mxu0 0.0
        %2012 = vmatprep.subr.mxu0 0.0
        %2013 = vmatpush1.msra.mxu0 0.0
        %2014 = vmatprep.subr.mxu0 0.0
        %2015 = vmatpush1.msra.mxu0 0.0
        %2016 = vmatprep.subr.mxu0 0.0
        %2017 = vmatpush1.msra.mxu0 0.0
        %2018 = vmatprep.subr.mxu0 0.0
        %2019 = vmatpush1.msra.mxu0 0.0
        %2020 = vmatprep.subr.mxu0 0.0
        %2021 = vmatpush1.msra.mxu0 0.0
        %2022 = vmatprep.subr.mxu0 0.0
        %2023 = vmatpush1.msra.mxu0 0.0
        %2024 = vmatprep.subr.mxu0 0.0
        %2025 = vmatpush1.msra.mxu0 0.0
        %2026 = vmatprep.subr.mxu0 0.0
        %2027 = vmatpush1.msra.mxu0 %v1989
        %2028 = vmatprep.subr.mxu0 0.0
        %2029 = vmatpush1.msra.mxu0 %v1987
        %2030 = vmatprep.subr.mxu0 0.0
        %2031 = vmatpush2.msra.mxu0 0.0
        %2032 = vmatprep.subr.mxu0 0.0
        %2033 = vmatpush2.msra.mxu0 0.0
        %2034 = vmatprep.subr.mxu0 0.0
        %2035 = vmatpush2.msra.mxu0 0.0
        %2036 = vmatprep.subr.mxu0 0.0
        %2037 = vmatpush2.msra.mxu0 0.0
        %2038 = vmatprep.subr.mxu0 0.0
        %2039 = vmatpush2.msra.mxu0 0.0
        %2040 = vmatprep.subr.mxu0 0.0
        %2041 = vmatpush2.msra.mxu0 0.0
        %2042 = vmatprep.subr.mxu0 0.0
        %2043 = vmatpush2.msra.mxu0 0.0
        %2044 = vmatprep.subr.mxu0 0.0
        %2045 = vmatpush2.msra.mxu0 0.0
        %2046 = vmatprep.subr.mxu0 0.0
        %2047 = vmatpush2.msra.mxu0 0.0
        %2048 = vmatprep.subr.mxu0 0.0
        %2049 = vmatpush2.msra.mxu0 0.0
        %2050 = vmatprep.subr.mxu0 0.0
        %2051 = vmatpush2.msra.mxu0 0.0
        %2052 = vmatprep.subr.mxu0 0.0
        %2053 = vmatpush2.msra.mxu0 0.0
        %2054 = vmatprep.subr.mxu0 0.0
        %2055 = vmatpush2.msra.mxu0 0.0
        %2056 = vmatprep.subr.mxu0 0.0
        %2057 = vmatpush2.msra.mxu0 0.0
        %2058 = vmatprep.subr.mxu0 0.0
        %2059 = vmatpush2.msra.mxu0 0.0
        %2060 = vmatprep.subr.mxu0 0.0
        %2061 = vmatpush2.msra.mxu0 0.0
        %2062 = vmatprep.mubr.f32.mxu0 0.0
        %2063 = vmatmul.mubr.f32.gmra.mxu0 %v1993
        %v2064 = vpop.f32.mrf.mxu0
        %v2065 = vadd.f32 0.0, %v2064
        %v2066 = vpop.f32.mrf.mxu0
        %2067 = vmatprep.mubr.f32.mxu0 0.0
        %2068 = vmatmul.mubr.f32.gmra.mxu0 %v1996
        %v2069 = vpop.f32.mrf.mxu0
        %v2070 = vadd.f32 0.0, %v2069
        %v2071 = vpop.f32.mrf.mxu0
        %2072 = vdwg.mxu0
        %2073 = vrot.lane.b32.xlu0 %v866, 32
        %v2074 = vpop.permute.xlu0 %2073
        %2075 = vrot.lane.b32.xlu0 %v867, 32
        %v2076 = vpop.permute.xlu0 %2075
        %2077 = vrot.lane.b32.xlu0 %v872, 32
        %v2078 = vpop.permute.xlu0 %2077
        %2079 = vrot.lane.b32.xlu0 %v873, 32
        %v2080 = vpop.permute.xlu0 %2079
        %v2081 = vsel %vm880, %v2074, 0
        %v2083 = vsel %vm880, %v2076, 0
        %v2085 = vsel %vm880, %v2078, 0
        %v2087 = vsel %vm880, %v2080, 0
        %2089 = vmatprep.subr.mxu0 0.0
        %2090 = vmatpush1.xpose.msra.mxu0 0.0
        %2091 = vmatprep.subr.mxu0 0.0
        %2092 = vmatpush1.xpose.msra.mxu0 0.0
        %2093 = vmatprep.subr.mxu0 0.0
        %2094 = vmatpush1.xpose.msra.mxu0 0.0
        %2095 = vmatprep.subr.mxu0 0.0
        %2096 = vmatpush1.xpose.msra.mxu0 0.0
        %2097 = vmatprep.subr.mxu0 0.0
        %2098 = vmatpush1.xpose.msra.mxu0 0.0
        %2099 = vmatprep.subr.mxu0 0.0
        %2100 = vmatpush1.xpose.msra.mxu0 0.0
        %2101 = vmatprep.subr.mxu0 0.0
        %2102 = vmatpush1.xpose.msra.mxu0 0.0
        %2103 = vmatprep.subr.mxu0 0.0
        %2104 = vmatpush1.xpose.msra.mxu0 0.0
        %2105 = vmatprep.subr.mxu0 0.0
        %2106 = vmatpush1.xpose.msra.mxu0 0.0
        %2107 = vmatprep.subr.mxu0 0.0
        %2108 = vmatpush1.xpose.msra.mxu0 0.0
        %2109 = vmatprep.subr.mxu0 0.0
        %2110 = vmatpush1.xpose.msra.mxu0 0.0
        %2111 = vmatprep.subr.mxu0 0.0
        %2112 = vmatpush1.xpose.msra.mxu0 0.0
        %2113 = vmatprep.subr.mxu0 0.0
        %2114 = vmatpush1.xpose.msra.mxu0 0.0
        %2115 = vmatprep.subr.mxu0 0.0
        %2116 = vmatpush1.xpose.msra.mxu0 0.0
        %2117 = vmatprep.subr.mxu0 0.0
        %2118 = vmatpush1.xpose.msra.mxu0 %v2087
        %2119 = vmatprep.subr.mxu0 0.0
        %2120 = vmatpush1.xpose.msra.mxu0 %v2085
        %2121 = vmatprep.subr.mxu0 0.0
        %2122 = vmatpush2.xpose.msra.mxu0 0.0
        %2123 = vmatprep.subr.mxu0 0.0
        %2124 = vmatpush2.xpose.msra.mxu0 0.0
        %2125 = vmatprep.subr.mxu0 0.0
        %2126 = vmatpush2.xpose.msra.mxu0 0.0
        %2127 = vmatprep.subr.mxu0 0.0
        %2128 = vmatpush2.xpose.msra.mxu0 0.0
        %2129 = vmatprep.subr.mxu0 0.0
        %2130 = vmatpush2.xpose.msra.mxu0 0.0
        %2131 = vmatprep.subr.mxu0 0.0
        %2132 = vmatpush2.xpose.msra.mxu0 0.0
        %2133 = vmatprep.subr.mxu0 0.0
        %2134 = vmatpush2.xpose.msra.mxu0 0.0
        %2135 = vmatprep.subr.mxu0 0.0
        %2136 = vmatpush2.xpose.msra.mxu0 0.0
        %2137 = vmatprep.subr.mxu0 0.0
        %2138 = vmatpush2.xpose.msra.mxu0 0.0
        %2139 = vmatprep.subr.mxu0 0.0
        %2140 = vmatpush2.xpose.msra.mxu0 0.0
        %2141 = vmatprep.subr.mxu0 0.0
        %2142 = vmatpush2.xpose.msra.mxu0 0.0
        %2143 = vmatprep.subr.mxu0 0.0
        %2144 = vmatpush2.xpose.msra.mxu0 0.0
        %2145 = vmatprep.subr.mxu0 0.0
        %2146 = vmatpush2.xpose.msra.mxu0 0.0
        %2147 = vmatprep.subr.mxu0 0.0
        %2148 = vmatpush2.xpose.msra.mxu0 0.0
        %2149 = vmatprep.subr.mxu0 0.0
        %2150 = vmatpush2.xpose.msra.mxu0 0.0
        %2151 = vmatprep.subr.mxu0 0.0
        %2152 = vmatpush2.xpose.msra.mxu0 0.0
        %2153 = vmatprep.mubr.f32.mxu0 0.0
        %2154 = vmatmul.mubr.f32.gmra.mxu0 %v2081
        %v2155 = vpop.f32.mrf.mxu0
        %v2156 = vadd.f32 %v609, %v2155
        %v2157 = vpop.f32.mrf.mxu0
        %2158 = vmatprep.mubr.f32.mxu0 0.0
        %2159 = vmatmul.mubr.f32.gmra.mxu0 %v2083
        %v2160 = vpop.f32.mrf.mxu0
        %v2161 = vadd.f32 %v609, %v2160
        %v2162 = vpop.f32.mrf.mxu0
        %2163 = vdwg.mxu0
        %v2164 = vsel %vm880, %v2156, -inf
        %2165 = vmax.xlane.f32.xlu0 %v2164
        %v2166 = vpop.xlane.xlu0 %2165
        %v2167 = vsel %vm880, %v2161, -inf
        %2168 = vmax.xlane.f32.xlu0 %v2167
        %v2169 = vpop.xlane.xlu0 %2168
        %v2170 = vsub.f32 %v2156, %v2166
        %v2171 = vsub.f32 %v2161, %v2169
        %v2172 = vmul.f32 %v2170, 1.442695
        %v2173 = vpow.pop %v2172
        %v2174 = vmul.f32 %v2171, 1.442695
        %v2175 = vpow.pop %v2174
        %v2176 = vsel %vm880, %v2173, 0.0
        %2177 = vadd.xlane.f32.xlu0 %v2176
        %v2178 = vpop.xlane.xlu0 %2177
        %v2179 = vsel %vm880, %v2175, 0.0
        %2180 = vadd.xlane.f32.xlu0 %v2179
        %v2181 = vpop.xlane.xlu0 %2180
        %v2182 = vrcp.pop %v2178
        %v2183 = vmul.f32 %v2173, %v2182
        %v2184 = vrcp.pop %v2181
        %v2185 = vmul.f32 %v2175, %v2184
        %2186 = vrot.lane.b32.xlu0 %v878, 32
        %v2187 = vpop.permute.xlu0 %2186
        %2188 = vrot.lane.b32.xlu0 %v879, 32
        %v2189 = vpop.permute.xlu0 %2188
        %v2193 = vsel %vm880, %v2183, 0
        %v2196 = vsel %vm880, %v2185, 0
        %2198 = vmatprep.subr.mxu0 0.0
        %2199 = vmatpush1.msra.mxu0 0.0
        %2200 = vmatprep.subr.mxu0 0.0
        %2201 = vmatpush1.msra.mxu0 0.0
        %2202 = vmatprep.subr.mxu0 0.0
        %2203 = vmatpush1.msra.mxu0 0.0
        %2204 = vmatprep.subr.mxu0 0.0
        %2205 = vmatpush1.msra.mxu0 0.0
        %2206 = vmatprep.subr.mxu0 0.0
        %2207 = vmatpush1.msra.mxu0 0.0
        %2208 = vmatprep.subr.mxu0 0.0
        %2209 = vmatpush1.msra.mxu0 0.0
        %2210 = vmatprep.subr.mxu0 0.0
        %2211 = vmatpush1.msra.mxu0 0.0
        %2212 = vmatprep.subr.mxu0 0.0
        %2213 = vmatpush1.msra.mxu0 0.0
        %2214 = vmatprep.subr.mxu0 0.0
        %2215 = vmatpush1.msra.mxu0 0.0
        %2216 = vmatprep.subr.mxu0 0.0
        %2217 = vmatpush1.msra.mxu0 0.0
        %2218 = vmatprep.subr.mxu0 0.0
        %2219 = vmatpush1.msra.mxu0 0.0
        %2220 = vmatprep.subr.mxu0 0.0
        %2221 = vmatpush1.msra.mxu0 0.0
        %2222 = vmatprep.subr.mxu0 0.0
        %2223 = vmatpush1.msra.mxu0 0.0
        %2224 = vmatprep.subr.mxu0 0.0
        %2225 = vmatpush1.msra.mxu0 0.0
        %2226 = vmatprep.subr.mxu0 0.0
        %2227 = vmatpush1.msra.mxu0 %v2189
        %2228 = vmatprep.subr.mxu0 0.0
        %2229 = vmatpush1.msra.mxu0 %v2187
        %2230 = vmatprep.subr.mxu0 0.0
        %2231 = vmatpush2.msra.mxu0 0.0
        %2232 = vmatprep.subr.mxu0 0.0
        %2233 = vmatpush2.msra.mxu0 0.0
        %2234 = vmatprep.subr.mxu0 0.0
        %2235 = vmatpush2.msra.mxu0 0.0
        %2236 = vmatprep.subr.mxu0 0.0
        %2237 = vmatpush2.msra.mxu0 0.0
        %2238 = vmatprep.subr.mxu0 0.0
        %2239 = vmatpush2.msra.mxu0 0.0
        %2240 = vmatprep.subr.mxu0 0.0
        %2241 = vmatpush2.msra.mxu0 0.0
        %2242 = vmatprep.subr.mxu0 0.0
        %2243 = vmatpush2.msra.mxu0 0.0
        %2244 = vmatprep.subr.mxu0 0.0
        %2245 = vmatpush2.msra.mxu0 0.0
        %2246 = vmatprep.subr.mxu0 0.0
        %2247 = vmatpush2.msra.mxu0 0.0
        %2248 = vmatprep.subr.mxu0 0.0
        %2249 = vmatpush2.msra.mxu0 0.0
        %2250 = vmatprep.subr.mxu0 0.0
        %2251 = vmatpush2.msra.mxu0 0.0
        %2252 = vmatprep.subr.mxu0 0.0
        %2253 = vmatpush2.msra.mxu0 0.0
        %2254 = vmatprep.subr.mxu0 0.0
        %2255 = vmatpush2.msra.mxu0 0.0
        %2256 = vmatprep.subr.mxu0 0.0
        %2257 = vmatpush2.msra.mxu0 0.0
        %2258 = vmatprep.subr.mxu0 0.0
        %2259 = vmatpush2.msra.mxu0 0.0
        %2260 = vmatprep.subr.mxu0 0.0
        %2261 = vmatpush2.msra.mxu0 0.0
        %2262 = vmatprep.mubr.f32.mxu0 0.0
        %2263 = vmatmul.mubr.f32.gmra.mxu0 %v2193
        %v2264 = vpop.f32.mrf.mxu0
        %v2265 = vadd.f32 0.0, %v2264
        %v2266 = vpop.f32.mrf.mxu0
        %2267 = vmatprep.mubr.f32.mxu0 0.0
        %2268 = vmatmul.mubr.f32.gmra.mxu0 %v2196
        %v2269 = vpop.f32.mrf.mxu0
        %v2270 = vadd.f32 0.0, %v2269
        %v2271 = vpop.f32.mrf.mxu0
        %2272 = vdwg.mxu0
        %2273 = vrot.lane.b32.xlu0 %v866, 16
        %v2274 = vpop.permute.xlu0 %2273
        %2275 = vrot.lane.b32.xlu0 %v867, 16
        %v2276 = vpop.permute.xlu0 %2275
        %2277 = vrot.lane.b32.xlu0 %v872, 16
        %v2278 = vpop.permute.xlu0 %2277
        %2279 = vrot.lane.b32.xlu0 %v873, 16
        %v2280 = vpop.permute.xlu0 %2279
        %v2281 = vsel %vm880, %v2274, 0
        %v2283 = vsel %vm880, %v2276, 0
        %v2285 = vsel %vm880, %v2278, 0
        %v2287 = vsel %vm880, %v2280, 0
        %2289 = vmatprep.subr.mxu0 0.0
        %2290 = vmatpush1.xpose.msra.mxu0 0.0
        %2291 = vmatprep.subr.mxu0 0.0
        %2292 = vmatpush1.xpose.msra.mxu0 0.0
        %2293 = vmatprep.subr.mxu0 0.0
        %2294 = vmatpush1.xpose.msra.mxu0 0.0
        %2295 = vmatprep.subr.mxu0 0.0
        %2296 = vmatpush1.xpose.msra.mxu0 0.0
        %2297 = vmatprep.subr.mxu0 0.0
        %2298 = vmatpush1.xpose.msra.mxu0 0.0
        %2299 = vmatprep.subr.mxu0 0.0
        %2300 = vmatpush1.xpose.msra.mxu0 0.0
        %2301 = vmatprep.subr.mxu0 0.0
        %2302 = vmatpush1.xpose.msra.mxu0 0.0
        %2303 = vmatprep.subr.mxu0 0.0
        %2304 = vmatpush1.xpose.msra.mxu0 0.0
        %2305 = vmatprep.subr.mxu0 0.0
        %2306 = vmatpush1.xpose.msra.mxu0 0.0
        %2307 = vmatprep.subr.mxu0 0.0
        %2308 = vmatpush1.xpose.msra.mxu0 0.0
        %2309 = vmatprep.subr.mxu0 0.0
        %2310 = vmatpush1.xpose.msra.mxu0 0.0
        %2311 = vmatprep.subr.mxu0 0.0
        %2312 = vmatpush1.xpose.msra.mxu0 0.0
        %2313 = vmatprep.subr.mxu0 0.0
        %2314 = vmatpush1.xpose.msra.mxu0 0.0
        %2315 = vmatprep.subr.mxu0 0.0
        %2316 = vmatpush1.xpose.msra.mxu0 0.0
        %2317 = vmatprep.subr.mxu0 0.0
        %2318 = vmatpush1.xpose.msra.mxu0 %v2287
        %2319 = vmatprep.subr.mxu0 0.0
        %2320 = vmatpush1.xpose.msra.mxu0 %v2285
        %2321 = vmatprep.subr.mxu0 0.0
        %2322 = vmatpush2.xpose.msra.mxu0 0.0
        %2323 = vmatprep.subr.mxu0 0.0
        %2324 = vmatpush2.xpose.msra.mxu0 0.0
        %2325 = vmatprep.subr.mxu0 0.0
        %2326 = vmatpush2.xpose.msra.mxu0 0.0
        %2327 = vmatprep.subr.mxu0 0.0
        %2328 = vmatpush2.xpose.msra.mxu0 0.0
        %2329 = vmatprep.subr.mxu0 0.0
        %2330 = vmatpush2.xpose.msra.mxu0 0.0
        %2331 = vmatprep.subr.mxu0 0.0
        %2332 = vmatpush2.xpose.msra.mxu0 0.0
        %2333 = vmatprep.subr.mxu0 0.0
        %2334 = vmatpush2.xpose.msra.mxu0 0.0
        %2335 = vmatprep.subr.mxu0 0.0
        %2336 = vmatpush2.xpose.msra.mxu0 0.0
        %2337 = vmatprep.subr.mxu0 0.0
        %2338 = vmatpush2.xpose.msra.mxu0 0.0
        %2339 = vmatprep.subr.mxu0 0.0
        %2340 = vmatpush2.xpose.msra.mxu0 0.0
        %2341 = vmatprep.subr.mxu0 0.0
        %2342 = vmatpush2.xpose.msra.mxu0 0.0
        %2343 = vmatprep.subr.mxu0 0.0
        %2344 = vmatpush2.xpose.msra.mxu0 0.0
        %2345 = vmatprep.subr.mxu0 0.0
        %2346 = vmatpush2.xpose.msra.mxu0 0.0
        %2347 = vmatprep.subr.mxu0 0.0
        %2348 = vmatpush2.xpose.msra.mxu0 0.0
        %2349 = vmatprep.subr.mxu0 0.0
        %2350 = vmatpush2.xpose.msra.mxu0 0.0
        %2351 = vmatprep.subr.mxu0 0.0
        %2352 = vmatpush2.xpose.msra.mxu0 0.0
        %2353 = vmatprep.mubr.f32.mxu0 0.0
        %2354 = vmatmul.mubr.f32.gmra.mxu0 %v2281
        %v2355 = vpop.f32.mrf.mxu0
        %v2356 = vadd.f32 %v609, %v2355
        %v2357 = vpop.f32.mrf.mxu0
        %2358 = vmatprep.mubr.f32.mxu0 0.0
        %2359 = vmatmul.mubr.f32.gmra.mxu0 %v2283
        %v2360 = vpop.f32.mrf.mxu0
        %v2361 = vadd.f32 %v609, %v2360
        %v2362 = vpop.f32.mrf.mxu0
        %2363 = vdwg.mxu0
        %v2364 = vsel %vm880, %v2356, -inf
        %2365 = vmax.xlane.f32.xlu0 %v2364
        %v2366 = vpop.xlane.xlu0 %2365
        %v2367 = vsel %vm880, %v2361, -inf
        %2368 = vmax.xlane.f32.xlu0 %v2367
        %v2369 = vpop.xlane.xlu0 %2368
        %v2370 = vsub.f32 %v2356, %v2366
        %v2371 = vsub.f32 %v2361, %v2369
        %v2372 = vmul.f32 %v2370, 1.442695
        %v2373 = vpow.pop %v2372
        %v2374 = vmul.f32 %v2371, 1.442695
        %v2375 = vpow.pop %v2374
        %v2376 = vsel %vm880, %v2373, 0.0
        %2377 = vadd.xlane.f32.xlu0 %v2376
        %v2378 = vpop.xlane.xlu0 %2377
        %v2379 = vsel %vm880, %v2375, 0.0
        %2380 = vadd.xlane.f32.xlu0 %v2379
        %v2381 = vpop.xlane.xlu0 %2380
        %v2382 = vrcp.pop %v2378
        %v2383 = vmul.f32 %v2373, %v2382
        %v2384 = vrcp.pop %v2381
        %v2385 = vmul.f32 %v2375, %v2384
        %2386 = vrot.lane.b32.xlu0 %v878, 16
        %v2387 = vpop.permute.xlu0 %2386
        %2388 = vrot.lane.b32.xlu0 %v879, 16
        %v2389 = vpop.permute.xlu0 %2388
        %v2393 = vsel %vm880, %v2383, 0
        %v2396 = vsel %vm880, %v2385, 0
        %2398 = vmatprep.subr.mxu0 0.0
        %2399 = vmatpush1.msra.mxu0 0.0
        %2400 = vmatprep.subr.mxu0 0.0
        %2401 = vmatpush1.msra.mxu0 0.0
        %2402 = vmatprep.subr.mxu0 0.0
        %2403 = vmatpush1.msra.mxu0 0.0
        %2404 = vmatprep.subr.mxu0 0.0
        %2405 = vmatpush1.msra.mxu0 0.0
        %2406 = vmatprep.subr.mxu0 0.0
        %2407 = vmatpush1.msra.mxu0 0.0
        %2408 = vmatprep.subr.mxu0 0.0
        %2409 = vmatpush1.msra.mxu0 0.0
        %2410 = vmatprep.subr.mxu0 0.0
        %2411 = vmatpush1.msra.mxu0 0.0
        %2412 = vmatprep.subr.mxu0 0.0
        %2413 = vmatpush1.msra.mxu0 0.0
        %2414 = vmatprep.subr.mxu0 0.0
        %2415 = vmatpush1.msra.mxu0 0.0
        %2416 = vmatprep.subr.mxu0 0.0
        %2417 = vmatpush1.msra.mxu0 0.0
        %2418 = vmatprep.subr.mxu0 0.0
        %2419 = vmatpush1.msra.mxu0 0.0
        %2420 = vmatprep.subr.mxu0 0.0
        %2421 = vmatpush1.msra.mxu0 0.0
        %2422 = vmatprep.subr.mxu0 0.0
        %2423 = vmatpush1.msra.mxu0 0.0
        %2424 = vmatprep.subr.mxu0 0.0
        %2425 = vmatpush1.msra.mxu0 0.0
        %2426 = vmatprep.subr.mxu0 0.0
        %2427 = vmatpush1.msra.mxu0 %v2389
        %2428 = vmatprep.subr.mxu0 0.0
        %2429 = vmatpush1.msra.mxu0 %v2387
        %2430 = vmatprep.subr.mxu0 0.0
        %2431 = vmatpush2.msra.mxu0 0.0
        %2432 = vmatprep.subr.mxu0 0.0
        %2433 = vmatpush2.msra.mxu0 0.0
        %2434 = vmatprep.subr.mxu0 0.0
        %2435 = vmatpush2.msra.mxu0 0.0
        %2436 = vmatprep.subr.mxu0 0.0
        %2437 = vmatpush2.msra.mxu0 0.0
        %2438 = vmatprep.subr.mxu0 0.0
        %2439 = vmatpush2.msra.mxu0 0.0
        %2440 = vmatprep.subr.mxu0 0.0
        %2441 = vmatpush2.msra.mxu0 0.0
        %2442 = vmatprep.subr.mxu0 0.0
        %2443 = vmatpush2.msra.mxu0 0.0
        %2444 = vmatprep.subr.mxu0 0.0
        %2445 = vmatpush2.msra.mxu0 0.0
        %2446 = vmatprep.subr.mxu0 0.0
        %2447 = vmatpush2.msra.mxu0 0.0
        %2448 = vmatprep.subr.mxu0 0.0
        %2449 = vmatpush2.msra.mxu0 0.0
        %2450 = vmatprep.subr.mxu0 0.0
        %2451 = vmatpush2.msra.mxu0 0.0
        %2452 = vmatprep.subr.mxu0 0.0
        %2453 = vmatpush2.msra.mxu0 0.0
        %2454 = vmatprep.subr.mxu0 0.0
        %2455 = vmatpush2.msra.mxu0 0.0
        %2456 = vmatprep.subr.mxu0 0.0
        %2457 = vmatpush2.msra.mxu0 0.0
        %2458 = vmatprep.subr.mxu0 0.0
        %2459 = vmatpush2.msra.mxu0 0.0
        %2460 = vmatprep.subr.mxu0 0.0
        %2461 = vmatpush2.msra.mxu0 0.0
        %2462 = vmatprep.mubr.f32.mxu0 0.0
        %2463 = vmatmul.mubr.f32.gmra.mxu0 %v2393
        %v2464 = vpop.f32.mrf.mxu0
        %v2465 = vadd.f32 0.0, %v2464
        %v2466 = vpop.f32.mrf.mxu0
        %2467 = vmatprep.mubr.f32.mxu0 0.0
        %2468 = vmatmul.mubr.f32.gmra.mxu0 %v2396
        %v2469 = vpop.f32.mrf.mxu0
        %v2470 = vadd.f32 0.0, %v2469
        %v2471 = vpop.f32.mrf.mxu0
        %2472 = vdwg.mxu0
        %2475 = vrot.lane.b32.xlu0 %v1265, 16
        %v2476 = vpop.permute.xlu0 %2475
        %2477 = vrot.lane.b32.xlu0 %v1270, 16
        %v2478 = vpop.permute.xlu0 %2477
        %2483 = vrot.lane.b32.xlu0 %v1465, 32
        %v2484 = vpop.permute.xlu0 %2483
        %2485 = vrot.lane.b32.xlu0 %v1470, 32
        %v2486 = vpop.permute.xlu0 %2485
        %2491 = vrot.lane.b32.xlu0 %v1665, 48
        %v2492 = vpop.permute.xlu0 %2491
        %2493 = vrot.lane.b32.xlu0 %v1670, 48
        %v2494 = vpop.permute.xlu0 %2493
        %2499 = vrot.lane.b32.xlu0 %v1865, 64
        %v2500 = vpop.permute.xlu0 %2499
        %2501 = vrot.lane.b32.xlu0 %v1870, 64
        %v2502 = vpop.permute.xlu0 %2501
        %2507 = vrot.lane.b32.xlu0 %v2065, 80
        %v2508 = vpop.permute.xlu0 %2507
        %2509 = vrot.lane.b32.xlu0 %v2070, 80
        %v2510 = vpop.permute.xlu0 %2509
        %2515 = vrot.lane.b32.xlu0 %v2265, 96
        %v2516 = vpop.permute.xlu0 %2515
        %2517 = vrot.lane.b32.xlu0 %v2270, 96
        %v2518 = vpop.permute.xlu0 %2517
        %2523 = vrot.lane.b32.xlu0 %v2465, 112
        %v2524 = vpop.permute.xlu0 %2523
        %2525 = vrot.lane.b32.xlu0 %v2470, 112
        %v2526 = vpop.permute.xlu0 %2525
        %v2529 = vsel %vm880, %v1063, %v2476
        %v2530 = vsel %vm880, %v1068, %v2478
        %vm2531 = vcmask 261120
        %v2532 = vsel %vm2531, %v2529, %v2484
        %v2533 = vsel %vm2531, %v2530, %v2486
        %vm2534 = vcmask 392192
        %v2535 = vsel %vm2534, %v2532, %v2492
        %v2536 = vsel %vm2534, %v2533, %v2494
        %vm2537 = vcmask 523264
        %v2538 = vsel %vm2537, %v2535, %v2500
        %v2539 = vsel %vm2537, %v2536, %v2502
        %vm2540 = vcmask 654336
        %v2541 = vsel %vm2540, %v2538, %v2508
        %v2542 = vsel %vm2540, %v2539, %v2510
        %vm2543 = vcmask 785408
        %v2544 = vsel %vm2543, %v2541, %v2516
        %v2545 = vsel %vm2543, %v2542, %v2518
        %vm2546 = vcmask 916480
        %v2547 = vsel %vm2546, %v2544, %v2524
        %v2548 = vsel %vm2546, %v2545, %v2526
        %v2549 = vlaneseq
        %v2550 = vshrl.u32 %v2549, 7
        %v2551 = vsub.s32 3, %v2550
        %v2552 = vrot.slane %v706, %v2551
        %2553 = vmatprep.subr.mxu0 0.0
        %2554 = vmatpush1.msra.mxu0 %v673
        %2555 = vmatprep.subr.mxu0 0.0
        %2556 = vmatpush1.msra.mxu0 %v672
        %2557 = vmatprep.subr.mxu0 0.0
        %2558 = vmatpush1.msra.mxu0 %v671
        %2559 = vmatprep.subr.mxu0 0.0
        %2560 = vmatpush1.msra.mxu0 %v670
        %2561 = vmatprep.subr.mxu0 0.0
        %2562 = vmatpush1.msra.mxu0 %v669
        %2563 = vmatprep.subr.mxu0 0.0
        %2564 = vmatpush1.msra.mxu0 %v668
        %2565 = vmatprep.subr.mxu0 0.0
        %2566 = vmatpush1.msra.mxu0 %v667
        %2567 = vmatprep.subr.mxu0 0.0
        %2568 = vmatpush1.msra.mxu0 %v666
        %2569 = vmatprep.subr.mxu0 0.0
        %2570 = vmatpush1.msra.mxu0 %v665
        %2571 = vmatprep.subr.mxu0 0.0
        %2572 = vmatpush1.msra.mxu0 %v664
        %2573 = vmatprep.subr.mxu0 0.0
        %2574 = vmatpush1.msra.mxu0 %v663
        %2575 = vmatprep.subr.mxu0 0.0
        %2576 = vmatpush1.msra.mxu0 %v662
        %2577 = vmatprep.subr.mxu0 0.0
        %2578 = vmatpush1.msra.mxu0 %v661
        %2579 = vmatprep.subr.mxu0 0.0
        %2580 = vmatpush1.msra.mxu0 %v660
        %2581 = vmatprep.subr.mxu0 0.0
        %2582 = vmatpush1.msra.mxu0 %v659
        %2583 = vmatprep.subr.mxu0 0.0
        %2584 = vmatpush1.msra.mxu0 %v658
        %2585 = vmatprep.subr.mxu0 0.0
        %2586 = vmatpush2.msra.mxu0 0.0
        %2587 = vmatprep.subr.mxu0 0.0
        %2588 = vmatpush2.msra.mxu0 0.0
        %2589 = vmatprep.subr.mxu0 0.0
        %2590 = vmatpush2.msra.mxu0 0.0
        %2591 = vmatprep.subr.mxu0 0.0
        %2592 = vmatpush2.msra.mxu0 0.0
        %2593 = vmatprep.subr.mxu0 0.0
        %2594 = vmatpush2.msra.mxu0 0.0
        %2595 = vmatprep.subr.mxu0 0.0
        %2596 = vmatpush2.msra.mxu0 0.0
        %2597 = vmatprep.subr.mxu0 0.0
        %2598 = vmatpush2.msra.mxu0 0.0
        %2599 = vmatprep.subr.mxu0 0.0
        %2600 = vmatpush2.msra.mxu0 0.0
        %2601 = vmatprep.subr.mxu0 0.0
        %2602 = vmatpush2.msra.mxu0 0.0
        %2603 = vmatprep.subr.mxu0 0.0
        %2604 = vmatpush2.msra.mxu0 0.0
        %2605 = vmatprep.subr.mxu0 0.0
        %2606 = vmatpush2.msra.mxu0 0.0
        %2607 = vmatprep.subr.mxu0 0.0
        %2608 = vmatpush2.msra.mxu0 0.0
        %2609 = vmatprep.subr.mxu0 0.0
        %2610 = vmatpush2.msra.mxu0 0.0
        %2611 = vmatprep.subr.mxu0 0.0
        %2612 = vmatpush2.msra.mxu0 0.0
        %2613 = vmatprep.subr.mxu0 0.0
        %2614 = vmatpush2.msra.mxu0 0.0
        %2615 = vmatprep.subr.mxu0 0.0
        %2616 = vmatpush2.msra.mxu0 0.0
        %2617 = vmatprep.mubr.f32.mxu0 0.0
        %2618 = vmatmul.mubr.f32.gmra.mxu0 %v2547
        %v2619 = vpop.f32.mrf.mxu0
        %v2620 = vadd.f32 %v2552, %v2619
        %v2621 = vpop.f32.mrf.mxu0
        %2622 = vmatprep.mubr.f32.mxu0 0.0
        %2623 = vmatmul.mubr.f32.gmra.mxu0 %v2548
        %v2624 = vpop.f32.mrf.mxu0
        %v2625 = vadd.f32 %v2552, %v2624
        %v2626 = vpop.f32.mrf.mxu0
        %2627 = vdwg.mxu0
        %v2628 = vadd.f32 %v598, %v2620
        %v2629 = vadd.f32 %v603, %v2625
        %2630 = vadd.xlane.f32.xlu0 %v2628
        %v2631 = vpop.xlane.xlu0 %2630
        %2632 = vadd.xlane.f32.xlu0 %v2629
        %v2633 = vpop.xlane.xlu0 %2632
        %v2634 = vrcp.pop 128.0
        %v2635 = vmul.f32 %v2631, %v2634
        %v2636 = vmul.f32 %v2633, %v2634
        %v2637 = vsub.f32 %v2628, %v2635
        %v2638 = vsub.f32 %v2629, %v2636
        %v2639 = vmul.f32 %v2637, %v2637
        %v2640 = vmul.f32 %v2638, %v2638
        %2641 = vadd.xlane.f32.xlu0 %v2639
        %v2642 = vpop.xlane.xlu0 %2641
        %2643 = vadd.xlane.f32.xlu0 %v2640
        %v2644 = vpop.xlane.xlu0 %2643
        %v2645 = vmul.f32 %v2642, %v2634
        %v2646 = vmul.f32 %v2644, %v2634
        %v2647 = vadd.f32 %v2645, 1e-05
        %v2648 = vadd.f32 %v2646, 1e-05
        %v2649 = vrsqrt.pop %v2647
        %v2650 = vrsqrt.pop %v2648
        %v2651 = vmul.f32 %v2637, %v2649
        %v2652 = vmul.f32 %v2638, %v2650
        %v2653 = vlaneseq
        %v2654 = vshrl.u32 %v2653, 7
        %v2655 = vsub.s32 4, %v2654
        %v2656 = vrot.slane %v706, %v2655
        %v2657 = vmul.f32 %v2651, %v2656
        %v2658 = vmul.f32 %v2652, %v2656
        %v2659 = vlaneseq
        %v2660 = vshrl.u32 %v2659, 7
        %v2661 = vsub.s32 5, %v2660
        %v2662 = vrot.slane %v706, %v2661
        %v2663 = vadd.f32 %v2657, %v2662
        %v2664 = vadd.f32 %v2658, %v2662
        %v2665 = vlaneseq
        %v2666 = vshrl.u32 %v2665, 7
        %v2667 = vsub.s32 6, %v2666
        %v2668 = vrot.slane %v706, %v2667
        %2669 = vmatprep.subr.mxu0 0.0
        %2670 = vmatpush1.msra.mxu0 %v689
        %2671 = vmatprep.subr.mxu0 0.0
        %2672 = vmatpush1.msra.mxu0 %v688
        %2673 = vmatprep.subr.mxu0 0.0
        %2674 = vmatpush1.msra.mxu0 %v687
        %2675 = vmatprep.subr.mxu0 0.0
        %2676 = vmatpush1.msra.mxu0 %v686
        %2677 = vmatprep.subr.mxu0 0.0
        %2678 = vmatpush1.msra.mxu0 %v685
        %2679 = vmatprep.subr.mxu0 0.0
        %2680 = vmatpush1.msra.mxu0 %v684
        %2681 = vmatprep.subr.mxu0 0.0
        %2682 = vmatpush1.msra.mxu0 %v683
        %2683 = vmatprep.subr.mxu0 0.0
        %2684 = vmatpush1.msra.mxu0 %v682
        %2685 = vmatprep.subr.mxu0 0.0
        %2686 = vmatpush1.msra.mxu0 %v681
        %2687 = vmatprep.subr.mxu0 0.0
        %2688 = vmatpush1.msra.mxu0 %v680
        %2689 = vmatprep.subr.mxu0 0.0
        %2690 = vmatpush1.msra.mxu0 %v679
        %2691 = vmatprep.subr.mxu0 0.0
        %2692 = vmatpush1.msra.mxu0 %v678
        %2693 = vmatprep.subr.mxu0 0.0
        %2694 = vmatpush1.msra.mxu0 %v677
        %2695 = vmatprep.subr.mxu0 0.0
        %2696 = vmatpush1.msra.mxu0 %v676
        %2697 = vmatprep.subr.mxu0 0.0
        %2698 = vmatpush1.msra.mxu0 %v675
        %2699 = vmatprep.subr.mxu0 0.0
        %2700 = vmatpush1.msra.mxu0 %v674
        %2701 = vmatprep.subr.mxu0 0.0
        %2702 = vmatpush2.msra.mxu0 0.0
        %2703 = vmatprep.subr.mxu0 0.0
        %2704 = vmatpush2.msra.mxu0 0.0
        %2705 = vmatprep.subr.mxu0 0.0
        %2706 = vmatpush2.msra.mxu0 0.0
        %2707 = vmatprep.subr.mxu0 0.0
        %2708 = vmatpush2.msra.mxu0 0.0
        %2709 = vmatprep.subr.mxu0 0.0
        %2710 = vmatpush2.msra.mxu0 0.0
        %2711 = vmatprep.subr.mxu0 0.0
        %2712 = vmatpush2.msra.mxu0 0.0
        %2713 = vmatprep.subr.mxu0 0.0
        %2714 = vmatpush2.msra.mxu0 0.0
        %2715 = vmatprep.subr.mxu0 0.0
        %2716 = vmatpush2.msra.mxu0 0.0
        %2717 = vmatprep.subr.mxu0 0.0
        %2718 = vmatpush2.msra.mxu0 0.0
        %2719 = vmatprep.subr.mxu0 0.0
        %2720 = vmatpush2.msra.mxu0 0.0
        %2721 = vmatprep.subr.mxu0 0.0
        %2722 = vmatpush2.msra.mxu0 0.0
        %2723 = vmatprep.subr.mxu0 0.0
        %2724 = vmatpush2.msra.mxu0 0.0
        %2725 = vmatprep.subr.mxu0 0.0
        %2726 = vmatpush2.msra.mxu0 0.0
        %2727 = vmatprep.subr.mxu0 0.0
        %2728 = vmatpush2.msra.mxu0 0.0
        %2729 = vmatprep.subr.mxu0 0.0
        %2730 = vmatpush2.msra.mxu0 0.0
        %2731 = vmatprep.subr.mxu0 0.0
        %2732 = vmatpush2.msra.mxu0 0.0
        %2733 = vmatprep.mubr.f32.mxu0 0.0
        %2734 = vmatmul.mubr.f32.gmra.mxu0 %v2663
        %v2735 = vpop.f32.mrf.mxu0
        %v2736 = vadd.f32 %v2668, %v2735
        %v2737 = vpop.f32.mrf.mxu0
        %2738 = vmatprep.mubr.f32.mxu0 0.0
        %2739 = vmatmul.mubr.f32.gmra.mxu0 %v2664
        %v2740 = vpop.f32.mrf.mxu0
        %v2741 = vadd.f32 %v2668, %v2740
        %v2742 = vpop.f32.mrf.mxu0
        %2743 = vdwg.mxu0
        %v2744 = vmax.f32 %v2736, 0.0
        %v2745 = vmax.f32 %v2741, 0.0
        %v2746 = vlaneseq
        %v2747 = vshrl.u32 %v2746, 7
        %v2748 = vsub.s32 7, %v2747
        %v2749 = vrot.slane %v706, %v2748
        %2750 = vmatprep.subr.mxu0 0.0
        %2751 = vmatpush1.msra.mxu0 %v705
        %2752 = vmatprep.subr.mxu0 0.0
        %2753 = vmatpush1.msra.mxu0 %v704
        %2754 = vmatprep.subr.mxu0 0.0
        %2755 = vmatpush1.msra.mxu0 %v703
        %2756 = vmatprep.subr.mxu0 0.0
        %2757 = vmatpush1.msra.mxu0 %v702
        %2758 = vmatprep.subr.mxu0 0.0
        %2759 = vmatpush1.msra.mxu0 %v701
        %2760 = vmatprep.subr.mxu0 0.0
        %2761 = vmatpush1.msra.mxu0 %v700
        %2762 = vmatprep.subr.mxu0 0.0
        %2763 = vmatpush1.msra.mxu0 %v699
        %2764 = vmatprep.subr.mxu0 0.0
        %2765 = vmatpush1.msra.mxu0 %v698
        %2766 = vmatprep.subr.mxu0 0.0
        %2767 = vmatpush1.msra.mxu0 %v697
        %2768 = vmatprep.subr.mxu0 0.0
        %2769 = vmatpush1.msra.mxu0 %v696
        %2770 = vmatprep.subr.mxu0 0.0
        %2771 = vmatpush1.msra.mxu0 %v695
        %2772 = vmatprep.subr.mxu0 0.0
        %2773 = vmatpush1.msra.mxu0 %v694
        %2774 = vmatprep.subr.mxu0 0.0
        %2775 = vmatpush1.msra.mxu0 %v693
        %2776 = vmatprep.subr.mxu0 0.0
        %2777 = vmatpush1.msra.mxu0 %v692
        %2778 = vmatprep.subr.mxu0 0.0
        %2779 = vmatpush1.msra.mxu0 %v691
        %2780 = vmatprep.subr.mxu0 0.0
        %2781 = vmatpush1.msra.mxu0 %v690
        %2782 = vmatprep.subr.mxu0 0.0
        %2783 = vmatpush2.msra.mxu0 0.0
        %2784 = vmatprep.subr.mxu0 0.0
        %2785 = vmatpush2.msra.mxu0 0.0
        %2786 = vmatprep.subr.mxu0 0.0
        %2787 = vmatpush2.msra.mxu0 0.0
        %2788 = vmatprep.subr.mxu0 0.0
        %2789 = vmatpush2.msra.mxu0 0.0
        %2790 = vmatprep.subr.mxu0 0.0
        %2791 = vmatpush2.msra.mxu0 0.0
        %2792 = vmatprep.subr.mxu0 0.0
        %2793 = vmatpush2.msra.mxu0 0.0
        %2794 = vmatprep.subr.mxu0 0.0
        %2795 = vmatpush2.msra.mxu0 0.0
        %2796 = vmatprep.subr.mxu0 0.0
        %2797 = vmatpush2.msra.mxu0 0.0
        %2798 = vmatprep.subr.mxu0 0.0
        %2799 = vmatpush2.msra.mxu0 0.0
        %2800 = vmatprep.subr.mxu0 0.0
        %2801 = vmatpush2.msra.mxu0 0.0
        %2802 = vmatprep.subr.mxu0 0.0
        %2803 = vmatpush2.msra.mxu0 0.0
        %2804 = vmatprep.subr.mxu0 0.0
        %2805 = vmatpush2.msra.mxu0 0.0
        %2806 = vmatprep.subr.mxu0 0.0
        %2807 = vmatpush2.msra.mxu0 0.0
        %2808 = vmatprep.subr.mxu0 0.0
        %2809 = vmatpush2.msra.mxu0 0.0
        %2810 = vmatprep.subr.mxu0 0.0
        %2811 = vmatpush2.msra.mxu0 0.0
        %2812 = vmatprep.subr.mxu0 0.0
        %2813 = vmatpush2.msra.mxu0 0.0
        %2814 = vmatprep.mubr.f32.mxu0 0.0
        %2815 = vmatmul.mubr.f32.gmra.mxu0 %v2744
        %v2816 = vpop.f32.mrf.mxu0
        %v2817 = vadd.f32 %v2749, %v2816
        %v2818 = vpop.f32.mrf.mxu0
        %2819 = vmatprep.mubr.f32.mxu0 0.0
        %2820 = vmatmul.mubr.f32.gmra.mxu0 %v2745
        %v2821 = vpop.f32.mrf.mxu0
        %v2822 = vadd.f32 %v2749, %v2821
        %v2823 = vpop.f32.mrf.mxu0
        %2824 = vdwg.mxu0
        %v2825 = vadd.f32 %v2663, %v2817
        %v2826 = vadd.f32 %v2664, %v2822
        %2827 = vadd.xlane.f32.xlu0 %v2825
        %v2828 = vpop.xlane.xlu0 %2827
        %2829 = vadd.xlane.f32.xlu0 %v2826
        %v2830 = vpop.xlane.xlu0 %2829
        %v2831 = vmul.f32 %v2828, %v2634
        %v2832 = vmul.f32 %v2830, %v2634
        %v2833 = vsub.f32 %v2825, %v2831
        %v2834 = vsub.f32 %v2826, %v2832
        %v2835 = vmul.f32 %v2833, %v2833
        %v2836 = vmul.f32 %v2834, %v2834
        %2837 = vadd.xlane.f32.xlu0 %v2835
        %v2838 = vpop.xlane.xlu0 %2837
        %2839 = vadd.xlane.f32.xlu0 %v2836
        %v2840 = vpop.xlane.xlu0 %2839
        %v2841 = vmul.f32 %v2838, %v2634
        %v2842 = vmul.f32 %v2840, %v2634
        %v2843 = vadd.f32 %v2841, 1e-05
        %v2844 = vadd.f32 %v2842, 1e-05
        %v2845 = vrsqrt.pop %v2843
        %v2846 = vrsqrt.pop %v2844
        %v2847 = vmul.f32 %v2833, %v2845
        %v2848 = vmul.f32 %v2834, %v2846
        %v2849 = vlaneseq
        %v2850 = vshrl.u32 %v2849, 7
        %v2851 = vsub.s32 0, %v2850
        %v2852 = vrot.slane %v707, %v2851
        %v2853 = vmul.f32 %v2847, %v2852
        %v2854 = vmul.f32 %v2848, %v2852
        %v2855 = vlaneseq
        %v2856 = vshrl.u32 %v2855, 7
        %v2857 = vsub.s32 1, %v2856
        %v2858 = vrot.slane %v707, %v2857
        %v2859 = vadd.f32 %v2853, %v2858
        %v2860 = vadd.f32 %v2854, %v2858
        %s2861 = scalar_lea.vmem [#allocation8], 384
        %v2862 = vld [vmem:[%s2861] sm:$0xff]
        %v2863 = vld [vmem:[%s2861 + $0x8] sm:$0xff]
        %v2864 = vld [vmem:[%s2861 + $0x10] sm:$0xff]
        %v2865 = vld [vmem:[%s2861 + $0x18] sm:$0xff]
        %v2866 = vld [vmem:[%s2861 + $0x20] sm:$0xff]
        %v2867 = vld [vmem:[%s2861 + $0x28] sm:$0xff]
        %v2868 = vld [vmem:[%s2861 + $0x30] sm:$0xff]
        %v2869 = vld [vmem:[%s2861 + $0x38] sm:$0xff]
        %v2870 = vld [vmem:[%s2861 + $0x40] sm:$0xff]
        %v2871 = vld [vmem:[%s2861 + $0x48] sm:$0xff]
        %v2872 = vld [vmem:[%s2861 + $0x50] sm:$0xff]
        %v2873 = vld [vmem:[%s2861 + $0x58] sm:$0xff]
        %v2874 = vld [vmem:[%s2861 + $0x60] sm:$0xff]
        %v2875 = vld [vmem:[%s2861 + $0x68] sm:$0xff]
        %v2876 = vld [vmem:[%s2861 + $0x70] sm:$0xff]
        %v2877 = vld [vmem:[%s2861 + $0x78] sm:$0xff]
        %v2878 = vld [vmem:[%s2861 + $0x80] sm:$0xff]
        %v2879 = vld [vmem:[%s2861 + $0x88] sm:$0xff]
        %v2880 = vld [vmem:[%s2861 + $0x90] sm:$0xff]
        %v2881 = vld [vmem:[%s2861 + $0x98] sm:$0xff]
        %v2882 = vld [vmem:[%s2861 + $0xa0] sm:$0xff]
        %v2883 = vld [vmem:[%s2861 + $0xa8] sm:$0xff]
        %v2884 = vld [vmem:[%s2861 + $0xb0] sm:$0xff]
        %v2885 = vld [vmem:[%s2861 + $0xb8] sm:$0xff]
        %v2886 = vld [vmem:[%s2861 + $0xc0] sm:$0xff]
        %v2887 = vld [vmem:[%s2861 + $0xc8] sm:$0xff]
        %v2888 = vld [vmem:[%s2861 + $0xd0] sm:$0xff]
        %v2889 = vld [vmem:[%s2861 + $0xd8] sm:$0xff]
        %v2890 = vld [vmem:[%s2861 + $0xe0] sm:$0xff]
        %v2891 = vld [vmem:[%s2861 + $0xe8] sm:$0xff]
        %v2892 = vld [vmem:[%s2861 + $0xf0] sm:$0xff]
        %v2893 = vld [vmem:[%s2861 + $0xf8] sm:$0xff]
        %v2894 = vld [vmem:[%s2861 + $0x100] sm:$0xff]
        %v2895 = vld [vmem:[%s2861 + $0x108] sm:$0xff]
        %v2896 = vld [vmem:[%s2861 + $0x110] sm:$0xff]
        %v2897 = vld [vmem:[%s2861 + $0x118] sm:$0xff]
        %v2898 = vld [vmem:[%s2861 + $0x120] sm:$0xff]
        %v2899 = vld [vmem:[%s2861 + $0x128] sm:$0xff]
        %v2900 = vld [vmem:[%s2861 + $0x130] sm:$0xff]
        %v2901 = vld [vmem:[%s2861 + $0x138] sm:$0xff]
        %v2902 = vld [vmem:[%s2861 + $0x140] sm:$0xff]
        %v2903 = vld [vmem:[%s2861 + $0x148] sm:$0xff]
        %v2904 = vld [vmem:[%s2861 + $0x150] sm:$0xff]
        %v2905 = vld [vmem:[%s2861 + $0x158] sm:$0xff]
        %v2906 = vld [vmem:[%s2861 + $0x160] sm:$0xff]
        %v2907 = vld [vmem:[%s2861 + $0x168] sm:$0xff]
        %v2908 = vld [vmem:[%s2861 + $0x170] sm:$0xff]
        %v2909 = vld [vmem:[%s2861 + $0x178] sm:$0xff]
        %s2910 = scalar_lea.vmem [#allocation10], 128
        %v2911 = vld [vmem:[%s2910] sm:$0xff]
        %v2912 = vld [vmem:[%s2910 + $0x8] sm:$0xff]
        %v2913 = vld [vmem:[%s2910 + $0x10] sm:$0xff]
        %v2914 = vld [vmem:[%s2910 + $0x18] sm:$0xff]
        %v2915 = vld [vmem:[%s2910 + $0x20] sm:$0xff]
        %v2916 = vld [vmem:[%s2910 + $0x28] sm:$0xff]
        %v2917 = vld [vmem:[%s2910 + $0x30] sm:$0xff]
        %v2918 = vld [vmem:[%s2910 + $0x38] sm:$0xff]
        %v2919 = vld [vmem:[%s2910 + $0x40] sm:$0xff]
        %v2920 = vld [vmem:[%s2910 + $0x48] sm:$0xff]
        %v2921 = vld [vmem:[%s2910 + $0x50] sm:$0xff]
        %v2922 = vld [vmem:[%s2910 + $0x58] sm:$0xff]
        %v2923 = vld [vmem:[%s2910 + $0x60] sm:$0xff]
        %v2924 = vld [vmem:[%s2910 + $0x68] sm:$0xff]
        %v2925 = vld [vmem:[%s2910 + $0x70] sm:$0xff]
        %v2926 = vld [vmem:[%s2910 + $0x78] sm:$0xff]
        %s2927 = scalar_lea.vmem [#allocation11], 128
        %v2928 = vld [vmem:[%s2927] sm:$0xff]
        %v2929 = vld [vmem:[%s2927 + $0x8] sm:$0xff]
        %v2930 = vld [vmem:[%s2927 + $0x10] sm:$0xff]
        %v2931 = vld [vmem:[%s2927 + $0x18] sm:$0xff]
        %v2932 = vld [vmem:[%s2927 + $0x20] sm:$0xff]
        %v2933 = vld [vmem:[%s2927 + $0x28] sm:$0xff]
        %v2934 = vld [vmem:[%s2927 + $0x30] sm:$0xff]
        %v2935 = vld [vmem:[%s2927 + $0x38] sm:$0xff]
        %v2936 = vld [vmem:[%s2927 + $0x40] sm:$0xff]
        %v2937 = vld [vmem:[%s2927 + $0x48] sm:$0xff]
        %v2938 = vld [vmem:[%s2927 + $0x50] sm:$0xff]
        %v2939 = vld [vmem:[%s2927 + $0x58] sm:$0xff]
        %v2940 = vld [vmem:[%s2927 + $0x60] sm:$0xff]
        %v2941 = vld [vmem:[%s2927 + $0x68] sm:$0xff]
        %v2942 = vld [vmem:[%s2927 + $0x70] sm:$0xff]
        %v2943 = vld [vmem:[%s2927 + $0x78] sm:$0xff]
        %s2944 = scalar_lea.vmem [#allocation13], 128
        %v2945 = vld [vmem:[%s2944] sm:$0xff]
        %v2946 = vld [vmem:[%s2944 + $0x8] sm:$0xff]
        %v2947 = vld [vmem:[%s2944 + $0x10] sm:$0xff]
        %v2948 = vld [vmem:[%s2944 + $0x18] sm:$0xff]
        %v2949 = vld [vmem:[%s2944 + $0x20] sm:$0xff]
        %v2950 = vld [vmem:[%s2944 + $0x28] sm:$0xff]
        %v2951 = vld [vmem:[%s2944 + $0x30] sm:$0xff]
        %v2952 = vld [vmem:[%s2944 + $0x38] sm:$0xff]
        %v2953 = vld [vmem:[%s2944 + $0x40] sm:$0xff]
        %v2954 = vld [vmem:[%s2944 + $0x48] sm:$0xff]
        %v2955 = vld [vmem:[%s2944 + $0x50] sm:$0xff]
        %v2956 = vld [vmem:[%s2944 + $0x58] sm:$0xff]
        %v2957 = vld [vmem:[%s2944 + $0x60] sm:$0xff]
        %v2958 = vld [vmem:[%s2944 + $0x68] sm:$0xff]
        %v2959 = vld [vmem:[%s2944 + $0x70] sm:$0xff]
        %v2960 = vld [vmem:[%s2944 + $0x78] sm:$0xff]
        %s2961 = scalar_lea.vmem [#allocation14], 16
        %v2962 = vld [vmem:[%s2961] sm:$0xff]
        %v2963 = vld [vmem:[%s2961 + $0x8] sm:$0xff]
        %2964 = vmatprep.subr.mxu0 %v2908
        %2965 = vmatpush1.msra.mxu0 %v2907
        %2966 = vmatprep.subr.mxu0 %v2905
        %2967 = vmatpush1.msra.mxu0 %v2904
        %2968 = vmatprep.subr.mxu0 %v2902
        %2969 = vmatpush1.msra.mxu0 %v2901
        %2970 = vmatprep.subr.mxu0 %v2899
        %2971 = vmatpush1.msra.mxu0 %v2898
        %2972 = vmatprep.subr.mxu0 %v2896
        %2973 = vmatpush1.msra.mxu0 %v2895
        %2974 = vmatprep.subr.mxu0 %v2893
        %2975 = vmatpush1.msra.mxu0 %v2892
        %2976 = vmatprep.subr.mxu0 %v2890
        %2977 = vmatpush1.msra.mxu0 %v2889
        %2978 = vmatprep.subr.mxu0 %v2887
        %2979 = vmatpush1.msra.mxu0 %v2886
        %2980 = vmatprep.subr.mxu0 %v2884
        %2981 = vmatpush1.msra.mxu0 %v2883
        %2982 = vmatprep.subr.mxu0 %v2881
        %2983 = vmatpush1.msra.mxu0 %v2880
        %2984 = vmatprep.subr.mxu0 %v2878
        %2985 = vmatpush1.msra.mxu0 %v2877
        %2986 = vmatprep.subr.mxu0 %v2875
        %2987 = vmatpush1.msra.mxu0 %v2874
        %2988 = vmatprep.subr.mxu0 %v2872
        %2989 = vmatpush1.msra.mxu0 %v2871
        %2990 = vmatprep.subr.mxu0 %v2869
        %2991 = vmatpush1.msra.mxu0 %v2868
        %2992 = vmatprep.subr.mxu0 %v2866
        %2993 = vmatpush1.msra.mxu0 %v2865
        %2994 = vmatprep.subr.mxu0 %v2863
        %2995 = vmatpush1.msra.mxu0 %v2862
        %2996 = vmatprep.subr.mxu0 0.0
        %2997 = vmatpush2.msra.mxu0 0.0
        %2998 = vmatprep.subr.mxu0 0.0
        %2999 = vmatpush2.msra.mxu0 0.0
        %3000 = vmatprep.subr.mxu0 0.0
        %3001 = vmatpush2.msra.mxu0 0.0
        %3002 = vmatprep.subr.mxu0 0.0
        %3003 = vmatpush2.msra.mxu0 0.0
        %3004 = vmatprep.subr.mxu0 0.0
        %3005 = vmatpush2.msra.mxu0 0.0
        %3006 = vmatprep.subr.mxu0 0.0
        %3007 = vmatpush2.msra.mxu0 0.0
        %3008 = vmatprep.subr.mxu0 0.0
        %3009 = vmatpush2.msra.mxu0 0.0
        %3010 = vmatprep.subr.mxu0 0.0
        %3011 = vmatpush2.msra.mxu0 0.0
        %3012 = vmatprep.subr.mxu0 0.0
        %3013 = vmatpush2.msra.mxu0 0.0
        %3014 = vmatprep.subr.mxu0 0.0
        %3015 = vmatpush2.msra.mxu0 0.0
        %3016 = vmatprep.subr.mxu0 0.0
        %3017 = vmatpush2.msra.mxu0 0.0
        %3018 = vmatprep.subr.mxu0 0.0
        %3019 = vmatpush2.msra.mxu0 0.0
        %3020 = vmatprep.subr.mxu0 0.0
        %3021 = vmatpush2.msra.mxu0 0.0
        %3022 = vmatprep.subr.mxu0 0.0
        %3023 = vmatpush2.msra.mxu0 0.0
        %3024 = vmatprep.subr.mxu0 0.0
        %3025 = vmatpush2.msra.mxu0 0.0
        %3026 = vmatprep.subr.mxu0 0.0
        %3027 = vmatpush2.msra.mxu0 0.0
        %3028 = vmatprep.mubr.f32.mxu0 0.0
        %3029 = vmatmul.mubr.f32.gmra.mxu0 %v2859
        %v3030 = vpop.f32.mrf.mxu0
        %v3031 = vadd.f32 0.0, %v3030
        %v3032 = vpop.f32.mrf.mxu0
        %v3033 = vadd.f32 0.0, %v3032
        %3034 = vmatprep.mubr.f32.mxu0 0.0
        %3035 = vmatmul.mubr.f32.gmra.mxu0 %v2860
        %v3036 = vpop.f32.mrf.mxu0
        %v3037 = vadd.f32 0.0, %v3036
        %v3038 = vpop.f32.mrf.mxu0
        %v3039 = vadd.f32 0.0, %v3038
        %3040 = vdwg.mxu0
        %3041 = vmatprep.subr.mxu0 0.0
        %3042 = vmatpush1.msra.mxu0 %v2909
        %3043 = vmatprep.subr.mxu0 0.0
        %3044 = vmatpush1.msra.mxu0 %v2906
        %3045 = vmatprep.subr.mxu0 0.0
        %3046 = vmatpush1.msra.mxu0 %v2903
        %3047 = vmatprep.subr.mxu0 0.0
        %3048 = vmatpush1.msra.mxu0 %v2900
        %3049 = vmatprep.subr.mxu0 0.0
        %3050 = vmatpush1.msra.mxu0 %v2897
        %3051 = vmatprep.subr.mxu0 0.0
        %3052 = vmatpush1.msra.mxu0 %v2894
        %3053 = vmatprep.subr.mxu0 0.0
        %3054 = vmatpush1.msra.mxu0 %v2891
        %3055 = vmatprep.subr.mxu0 0.0
        %3056 = vmatpush1.msra.mxu0 %v2888
        %3057 = vmatprep.subr.mxu0 0.0
        %3058 = vmatpush1.msra.mxu0 %v2885
        %3059 = vmatprep.subr.mxu0 0.0
        %3060 = vmatpush1.msra.mxu0 %v2882
        %3061 = vmatprep.subr.mxu0 0.0
        %3062 = vmatpush1.msra.mxu0 %v2879
        %3063 = vmatprep.subr.mxu0 0.0
        %3064 = vmatpush1.msra.mxu0 %v2876
        %3065 = vmatprep.subr.mxu0 0.0
        %3066 = vmatpush1.msra.mxu0 %v2873
        %3067 = vmatprep.subr.mxu0 0.0
        %3068 = vmatpush1.msra.mxu0 %v2870
        %3069 = vmatprep.subr.mxu0 0.0
        %3070 = vmatpush1.msra.mxu0 %v2867
        %3071 = vmatprep.subr.mxu0 0.0
        %3072 = vmatpush1.msra.mxu0 %v2864
        %3073 = vmatprep.subr.mxu0 0.0
        %3074 = vmatpush2.msra.mxu0 0.0
        %3075 = vmatprep.subr.mxu0 0.0
        %3076 = vmatpush2.msra.mxu0 0.0
        %3077 = vmatprep.subr.mxu0 0.0
        %3078 = vmatpush2.msra.mxu0 0.0
        %3079 = vmatprep.subr.mxu0 0.0
        %3080 = vmatpush2.msra.mxu0 0.0
        %3081 = vmatprep.subr.mxu0 0.0
        %3082 = vmatpush2.msra.mxu0 0.0
        %3083 = vmatprep.subr.mxu0 0.0
        %3084 = vmatpush2.msra.mxu0 0.0
        %3085 = vmatprep.subr.mxu0 0.0
        %3086 = vmatpush2.msra.mxu0 0.0
        %3087 = vmatprep.subr.mxu0 0.0
        %3088 = vmatpush2.msra.mxu0 0.0
        %3089 = vmatprep.subr.mxu0 0.0
        %3090 = vmatpush2.msra.mxu0 0.0
        %3091 = vmatprep.subr.mxu0 0.0
        %3092 = vmatpush2.msra.mxu0 0.0
        %3093 = vmatprep.subr.mxu0 0.0
        %3094 = vmatpush2.msra.mxu0 0.0
        %3095 = vmatprep.subr.mxu0 0.0
        %3096 = vmatpush2.msra.mxu0 0.0
        %3097 = vmatprep.subr.mxu0 0.0
        %3098 = vmatpush2.msra.mxu0 0.0
        %3099 = vmatprep.subr.mxu0 0.0
        %3100 = vmatpush2.msra.mxu0 0.0
        %3101 = vmatprep.subr.mxu0 0.0
        %3102 = vmatpush2.msra.mxu0 0.0
        %3103 = vmatprep.subr.mxu0 0.0
        %3104 = vmatpush2.msra.mxu0 0.0
        %3105 = vmatprep.mubr.f32.mxu0 0.0
        %3106 = vmatmul.mubr.f32.gmra.mxu0 %v2859
        %v3107 = vpop.f32.mrf.mxu0
        %v3108 = vadd.f32 0.0, %v3107
        %v3109 = vpop.f32.mrf.mxu0
        %3110 = vmatprep.mubr.f32.mxu0 0.0
        %3111 = vmatmul.mubr.f32.gmra.mxu0 %v2860
        %v3112 = vpop.f32.mrf.mxu0
        %v3113 = vadd.f32 0.0, %v3112
        %v3114 = vpop.f32.mrf.mxu0
        %3115 = vdwg.mxu0
        %v3116 = vlaneseq
        %v3117 = vshrl.u32 %v3116, 7
        %v3118 = vsub.s32 0, %v3117
        %v3119 = vrot.slane %v2962, %v3118
        %v3120 = vadd.f32 %v3031, %v3119
        %v3121 = vadd.f32 %v3037, %v3119
        %v3122 = vmul.f32 %v3120, 0.25
        %v3123 = vmul.f32 %v3121, 0.25
        %v3124 = vlaneseq
        %v3125 = vshrl.u32 %v3124, 7
        %v3126 = vsub.s32 1, %v3125
        %v3127 = vrot.slane %v2962, %v3126
        %v3128 = vadd.f32 %v3033, %v3127
        %v3129 = vadd.f32 %v3039, %v3127
        %v3130 = vlaneseq
        %v3131 = vshrl.u32 %v3130, 7
        %v3132 = vsub.s32 2, %v3131
        %v3133 = vrot.slane %v2962, %v3132
        %v3134 = vadd.f32 %v3108, %v3133
        %v3135 = vadd.f32 %v3113, %v3133
        %v3137 = vsel %vm880, %v3122, 0
        %v3140 = vsel %vm880, %v3123, 0
        %v3143 = vsel %vm880, %v3128, 0
        %v3146 = vsel %vm880, %v3129, 0
        %3148 = vmatprep.subr.mxu0 0.0
        %3149 = vmatpush1.xpose.msra.mxu0 0.0
        %3150 = vmatprep.subr.mxu0 0.0
        %3151 = vmatpush1.xpose.msra.mxu0 0.0
        %3152 = vmatprep.subr.mxu0 0.0
        %3153 = vmatpush1.xpose.msra.mxu0 0.0
        %3154 = vmatprep.subr.mxu0 0.0
        %3155 = vmatpush1.xpose.msra.mxu0 0.0
        %3156 = vmatprep.subr.mxu0 0.0
        %3157 = vmatpush1.xpose.msra.mxu0 0.0
        %3158 = vmatprep.subr.mxu0 0.0
        %3159 = vmatpush1.xpose.msra.mxu0 0.0
        %3160 = vmatprep.subr.mxu0 0.0
        %3161 = vmatpush1.xpose.msra.mxu0 0.0
        %3162 = vmatprep.subr.mxu0 0.0
        %3163 = vmatpush1.xpose.msra.mxu0 0.0
        %3164 = vmatprep.subr.mxu0 0.0
        %3165 = vmatpush1.xpose.msra.mxu0 0.0
        %3166 = vmatprep.subr.mxu0 0.0
        %3167 = vmatpush1.xpose.msra.mxu0 0.0
        %3168 = vmatprep.subr.mxu0 0.0
        %3169 = vmatpush1.xpose.msra.mxu0 0.0
        %3170 = vmatprep.subr.mxu0 0.0
        %3171 = vmatpush1.xpose.msra.mxu0 0.0
        %3172 = vmatprep.subr.mxu0 0.0
        %3173 = vmatpush1.xpose.msra.mxu0 0.0
        %3174 = vmatprep.subr.mxu0 0.0
        %3175 = vmatpush1.xpose.msra.mxu0 0.0
        %3176 = vmatprep.subr.mxu0 0.0
        %3177 = vmatpush1.xpose.msra.mxu0 %v3146
        %3178 = vmatprep.subr.mxu0 0.0
        %3179 = vmatpush1.xpose.msra.mxu0 %v3143
        %3180 = vmatprep.subr.mxu0 0.0
        %3181 = vmatpush2.xpose.msra.mxu0 0.0
        %3182 = vmatprep.subr.mxu0 0.0
        %3183 = vmatpush2.xpose.msra.mxu0 0.0
        %3184 = vmatprep.subr.mxu0 0.0
        %3185 = vmatpush2.xpose.msra.mxu0 0.0
        %3186 = vmatprep.subr.mxu0 0.0
        %3187 = vmatpush2.xpose.msra.mxu0 0.0
        %3188 = vmatprep.subr.mxu0 0.0
        %3189 = vmatpush2.xpose.msra.mxu0 0.0
        %3190 = vmatprep.subr.mxu0 0.0
        %3191 = vmatpush2.xpose.msra.mxu0 0.0
        %3192 = vmatprep.subr.mxu0 0.0
        %3193 = vmatpush2.xpose.msra.mxu0 0.0
        %3194 = vmatprep.subr.mxu0 0.0
        %3195 = vmatpush2.xpose.msra.mxu0 0.0
        %3196 = vmatprep.subr.mxu0 0.0
        %3197 = vmatpush2.xpose.msra.mxu0 0.0
        %3198 = vmatprep.subr.mxu0 0.0
        %3199 = vmatpush2.xpose.msra.mxu0 0.0
        %3200 = vmatprep.subr.mxu0 0.0
        %3201 = vmatpush2.xpose.msra.mxu0 0.0
        %3202 = vmatprep.subr.mxu0 0.0
        %3203 = vmatpush2.xpose.msra.mxu0 0.0
        %3204 = vmatprep.subr.mxu0 0.0
        %3205 = vmatpush2.xpose.msra.mxu0 0.0
        %3206 = vmatprep.subr.mxu0 0.0
        %3207 = vmatpush2.xpose.msra.mxu0 0.0
        %3208 = vmatprep.subr.mxu0 0.0
        %3209 = vmatpush2.xpose.msra.mxu0 0.0
        %3210 = vmatprep.subr.mxu0 0.0
        %3211 = vmatpush2.xpose.msra.mxu0 0.0
        %3212 = vmatprep.mubr.f32.mxu0 0.0
        %3213 = vmatmul.mubr.f32.gmra.mxu0 %v3137
        %v3214 = vpop.f32.mrf.mxu0
        %v3215 = vadd.f32 %v609, %v3214
        %v3216 = vpop.f32.mrf.mxu0
        %3217 = vmatprep.mubr.f32.mxu0 0.0
        %3218 = vmatmul.mubr.f32.gmra.mxu0 %v3140
        %v3219 = vpop.f32.mrf.mxu0
        %v3220 = vadd.f32 %v609, %v3219
        %v3221 = vpop.f32.mrf.mxu0
        %3222 = vdwg.mxu0
        %v3223 = vsel %vm880, %v3215, -inf
        %3224 = vmax.xlane.f32.xlu0 %v3223
        %v3225 = vpop.xlane.xlu0 %3224
        %v3226 = vsel %vm880, %v3220, -inf
        %3227 = vmax.xlane.f32.xlu0 %v3226
        %v3228 = vpop.xlane.xlu0 %3227
        %v3229 = vsub.f32 %v3215, %v3225
        %v3230 = vsub.f32 %v3220, %v3228
        %v3231 = vmul.f32 %v3229, 1.442695
        %v3232 = vpow.pop %v3231
        %v3233 = vmul.f32 %v3230, 1.442695
        %v3234 = vpow.pop %v3233
        %v3235 = vsel %vm880, %v3232, 0.0
        %3236 = vadd.xlane.f32.xlu0 %v3235
        %v3237 = vpop.xlane.xlu0 %3236
        %v3238 = vsel %vm880, %v3234, 0.0
        %3239 = vadd.xlane.f32.xlu0 %v3238
        %v3240 = vpop.xlane.xlu0 %3239
        %v3241 = vrcp.pop %v3237
        %v3242 = vmul.f32 %v3232, %v3241
        %v3243 = vrcp.pop %v3240
        %v3244 = vmul.f32 %v3234, %v3243
        %v3246 = vsel %vm880, %v3242, 0
        %v3249 = vsel %vm880, %v3244, 0
        %3251 = vmatprep.subr.mxu0 0.0
        %3252 = vmatpush1.msra.mxu0 0.0
        %3253 = vmatprep.subr.mxu0 0.0
        %3254 = vmatpush1.msra.mxu0 0.0
        %3255 = vmatprep.subr.mxu0 0.0
        %3256 = vmatpush1.msra.mxu0 0.0
        %3257 = vmatprep.subr.mxu0 0.0
        %3258 = vmatpush1.msra.mxu0 0.0
        %3259 = vmatprep.subr.mxu0 0.0
        %3260 = vmatpush1.msra.mxu0 0.0
        %3261 = vmatprep.subr.mxu0 0.0
        %3262 = vmatpush1.msra.mxu0 0.0
        %3263 = vmatprep.subr.mxu0 0.0
        %3264 = vmatpush1.msra.mxu0 0.0
        %3265 = vmatprep.subr.mxu0 0.0
        %3266 = vmatpush1.msra.mxu0 0.0
        %3267 = vmatprep.subr.mxu0 0.0
        %3268 = vmatpush1.msra.mxu0 0.0
        %3269 = vmatprep.subr.mxu0 0.0
        %3270 = vmatpush1.msra.mxu0 0.0
        %3271 = vmatprep.subr.mxu0 0.0
        %3272 = vmatpush1.msra.mxu0 0.0
        %3273 = vmatprep.subr.mxu0 0.0
        %3274 = vmatpush1.msra.mxu0 0.0
        %3275 = vmatprep.subr.mxu0 0.0
        %3276 = vmatpush1.msra.mxu0 0.0
        %3277 = vmatprep.subr.mxu0 0.0
        %3278 = vmatpush1.msra.mxu0 0.0
        %3279 = vmatprep.subr.mxu0 0.0
        %3280 = vmatpush1.msra.mxu0 %v3135
        %3281 = vmatprep.subr.mxu0 0.0
        %3282 = vmatpush1.msra.mxu0 %v3134
        %3283 = vmatprep.subr.mxu0 0.0
        %3284 = vmatpush2.msra.mxu0 0.0
        %3285 = vmatprep.subr.mxu0 0.0
        %3286 = vmatpush2.msra.mxu0 0.0
        %3287 = vmatprep.subr.mxu0 0.0
        %3288 = vmatpush2.msra.mxu0 0.0
        %3289 = vmatprep.subr.mxu0 0.0
        %3290 = vmatpush2.msra.mxu0 0.0
        %3291 = vmatprep.subr.mxu0 0.0
        %3292 = vmatpush2.msra.mxu0 0.0
        %3293 = vmatprep.subr.mxu0 0.0
        %3294 = vmatpush2.msra.mxu0 0.0
        %3295 = vmatprep.subr.mxu0 0.0
        %3296 = vmatpush2.msra.mxu0 0.0
        %3297 = vmatprep.subr.mxu0 0.0
        %3298 = vmatpush2.msra.mxu0 0.0
        %3299 = vmatprep.subr.mxu0 0.0
        %3300 = vmatpush2.msra.mxu0 0.0
        %3301 = vmatprep.subr.mxu0 0.0
        %3302 = vmatpush2.msra.mxu0 0.0
        %3303 = vmatprep.subr.mxu0 0.0
        %3304 = vmatpush2.msra.mxu0 0.0
        %3305 = vmatprep.subr.mxu0 0.0
        %3306 = vmatpush2.msra.mxu0 0.0
        %3307 = vmatprep.subr.mxu0 0.0
        %3308 = vmatpush2.msra.mxu0 0.0
        %3309 = vmatprep.subr.mxu0 0.0
        %3310 = vmatpush2.msra.mxu0 0.0
        %3311 = vmatprep.subr.mxu0 0.0
        %3312 = vmatpush2.msra.mxu0 0.0
        %3313 = vmatprep.subr.mxu0 0.0
        %3314 = vmatpush2.msra.mxu0 0.0
        %3315 = vmatprep.mubr.f32.mxu0 0.0
        %3316 = vmatmul.mubr.f32.gmra.mxu0 %v3246
        %v3317 = vpop.f32.mrf.mxu0
        %v3318 = vadd.f32 0.0, %v3317
        %v3319 = vpop.f32.mrf.mxu0
        %3320 = vmatprep.mubr.f32.mxu0 0.0
        %3321 = vmatmul.mubr.f32.gmra.mxu0 %v3249
        %v3322 = vpop.f32.mrf.mxu0
        %v3323 = vadd.f32 0.0, %v3322
        %v3324 = vpop.f32.mrf.mxu0
        %3325 = vdwg.mxu0
        %3326 = vrot.lane.b32.xlu0 %v3122, 112
        %v3327 = vpop.permute.xlu0 %3326
        %3328 = vrot.lane.b32.xlu0 %v3123, 112
        %v3329 = vpop.permute.xlu0 %3328
        %3330 = vrot.lane.b32.xlu0 %v3128, 112
        %v3331 = vpop.permute.xlu0 %3330
        %3332 = vrot.lane.b32.xlu0 %v3129, 112
        %v3333 = vpop.permute.xlu0 %3332
        %v3334 = vsel %vm880, %v3327, 0
        %v3336 = vsel %vm880, %v3329, 0
        %v3338 = vsel %vm880, %v3331, 0
        %v3340 = vsel %vm880, %v3333, 0
        %3342 = vmatprep.subr.mxu0 0.0
        %3343 = vmatpush1.xpose.msra.mxu0 0.0
        %3344 = vmatprep.subr.mxu0 0.0
        %3345 = vmatpush1.xpose.msra.mxu0 0.0
        %3346 = vmatprep.subr.mxu0 0.0
        %3347 = vmatpush1.xpose.msra.mxu0 0.0
        %3348 = vmatprep.subr.mxu0 0.0
        %3349 = vmatpush1.xpose.msra.mxu0 0.0
        %3350 = vmatprep.subr.mxu0 0.0
        %3351 = vmatpush1.xpose.msra.mxu0 0.0
        %3352 = vmatprep.subr.mxu0 0.0
        %3353 = vmatpush1.xpose.msra.mxu0 0.0
        %3354 = vmatprep.subr.mxu0 0.0
        %3355 = vmatpush1.xpose.msra.mxu0 0.0
        %3356 = vmatprep.subr.mxu0 0.0
        %3357 = vmatpush1.xpose.msra.mxu0 0.0
        %3358 = vmatprep.subr.mxu0 0.0
        %3359 = vmatpush1.xpose.msra.mxu0 0.0
        %3360 = vmatprep.subr.mxu0 0.0
        %3361 = vmatpush1.xpose.msra.mxu0 0.0
        %3362 = vmatprep.subr.mxu0 0.0
        %3363 = vmatpush1.xpose.msra.mxu0 0.0
        %3364 = vmatprep.subr.mxu0 0.0
        %3365 = vmatpush1.xpose.msra.mxu0 0.0
        %3366 = vmatprep.subr.mxu0 0.0
        %3367 = vmatpush1.xpose.msra.mxu0 0.0
        %3368 = vmatprep.subr.mxu0 0.0
        %3369 = vmatpush1.xpose.msra.mxu0 0.0
        %3370 = vmatprep.subr.mxu0 0.0
        %3371 = vmatpush1.xpose.msra.mxu0 %v3340
        %3372 = vmatprep.subr.mxu0 0.0
        %3373 = vmatpush1.xpose.msra.mxu0 %v3338
        %3374 = vmatprep.subr.mxu0 0.0
        %3375 = vmatpush2.xpose.msra.mxu0 0.0
        %3376 = vmatprep.subr.mxu0 0.0
        %3377 = vmatpush2.xpose.msra.mxu0 0.0
        %3378 = vmatprep.subr.mxu0 0.0
        %3379 = vmatpush2.xpose.msra.mxu0 0.0
        %3380 = vmatprep.subr.mxu0 0.0
        %3381 = vmatpush2.xpose.msra.mxu0 0.0
        %3382 = vmatprep.subr.mxu0 0.0
        %3383 = vmatpush2.xpose.msra.mxu0 0.0
        %3384 = vmatprep.subr.mxu0 0.0
        %3385 = vmatpush2.xpose.msra.mxu0 0.0
        %3386 = vmatprep.subr.mxu0 0.0
        %3387 = vmatpush2.xpose.msra.mxu0 0.0
        %3388 = vmatprep.subr.mxu0 0.0
        %3389 = vmatpush2.xpose.msra.mxu0 0.0
        %3390 = vmatprep.subr.mxu0 0.0
        %3391 = vmatpush2.xpose.msra.mxu0 0.0
        %3392 = vmatprep.subr.mxu0 0.0
        %3393 = vmatpush2.xpose.msra.mxu0 0.0
        %3394 = vmatprep.subr.mxu0 0.0
        %3395 = vmatpush2.xpose.msra.mxu0 0.0
        %3396 = vmatprep.subr.mxu0 0.0
        %3397 = vmatpush2.xpose.msra.mxu0 0.0
        %3398 = vmatprep.subr.mxu0 0.0
        %3399 = vmatpush2.xpose.msra.mxu0 0.0
        %3400 = vmatprep.subr.mxu0 0.0
        %3401 = vmatpush2.xpose.msra.mxu0 0.0
        %3402 = vmatprep.subr.mxu0 0.0
        %3403 = vmatpush2.xpose.msra.mxu0 0.0
        %3404 = vmatprep.subr.mxu0 0.0
        %3405 = vmatpush2.xpose.msra.mxu0 0.0
        %3406 = vmatprep.mubr.f32.mxu0 0.0
        %3407 = vmatmul.mubr.f32.gmra.mxu0 %v3334
        %v3408 = vpop.f32.mrf.mxu0
        %v3409 = vadd.f32 %v609, %v3408
        %v3410 = vpop.f32.mrf.mxu0
        %3411 = vmatprep.mubr.f32.mxu0 0.0
        %3412 = vmatmul.mubr.f32.gmra.mxu0 %v3336
        %v3413 = vpop.f32.mrf.mxu0
        %v3414 = vadd.f32 %v609, %v3413
        %v3415 = vpop.f32.mrf.mxu0
        %3416 = vdwg.mxu0
        %v3417 = vsel %vm880, %v3409, -inf
        %3418 = vmax.xlane.f32.xlu0 %v3417
        %v3419 = vpop.xlane.xlu0 %3418
        %v3420 = vsel %vm880, %v3414, -inf
        %3421 = vmax.xlane.f32.xlu0 %v3420
        %v3422 = vpop.xlane.xlu0 %3421
        %v3423 = vsub.f32 %v3409, %v3419
        %v3424 = vsub.f32 %v3414, %v3422
        %v3425 = vmul.f32 %v3423, 1.442695
        %v3426 = vpow.pop %v3425
        %v3427 = vmul.f32 %v3424, 1.442695
        %v3428 = vpow.pop %v3427
        %v3429 = vsel %vm880, %v3426, 0.0
        %3430 = vadd.xlane.f32.xlu0 %v3429
        %v3431 = vpop.xlane.xlu0 %3430
        %v3432 = vsel %vm880, %v3428, 0.0
        %3433 = vadd.xlane.f32.xlu0 %v3432
        %v3434 = vpop.xlane.xlu0 %3433
        %v3435 = vrcp.pop %v3431
        %v3436 = vmul.f32 %v3426, %v3435
        %v3437 = vrcp.pop %v3434
        %v3438 = vmul.f32 %v3428, %v3437
        %3441 = vrot.lane.b32.xlu0 %v3134, 112
        %v3442 = vpop.permute.xlu0 %3441
        %3443 = vrot.lane.b32.xlu0 %v3135, 112
        %v3444 = vpop.permute.xlu0 %3443
        %v3448 = vsel %vm880, %v3436, 0
        %v3451 = vsel %vm880, %v3438, 0
        %3453 = vmatprep.subr.mxu0 0.0
        %3454 = vmatpush1.msra.mxu0 0.0
        %3455 = vmatprep.subr.mxu0 0.0
        %3456 = vmatpush1.msra.mxu0 0.0
        %3457 = vmatprep.subr.mxu0 0.0
        %3458 = vmatpush1.msra.mxu0 0.0
        %3459 = vmatprep.subr.mxu0 0.0
        %3460 = vmatpush1.msra.mxu0 0.0
        %3461 = vmatprep.subr.mxu0 0.0
        %3462 = vmatpush1.msra.mxu0 0.0
        %3463 = vmatprep.subr.mxu0 0.0
        %3464 = vmatpush1.msra.mxu0 0.0
        %3465 = vmatprep.subr.mxu0 0.0
        %3466 = vmatpush1.msra.mxu0 0.0
        %3467 = vmatprep.subr.mxu0 0.0
        %3468 = vmatpush1.msra.mxu0 0.0
        %3469 = vmatprep.subr.mxu0 0.0
        %3470 = vmatpush1.msra.mxu0 0.0
        %3471 = vmatprep.subr.mxu0 0.0
        %3472 = vmatpush1.msra.mxu0 0.0
        %3473 = vmatprep.subr.mxu0 0.0
        %3474 = vmatpush1.msra.mxu0 0.0
        %3475 = vmatprep.subr.mxu0 0.0
        %3476 = vmatpush1.msra.mxu0 0.0
        %3477 = vmatprep.subr.mxu0 0.0
        %3478 = vmatpush1.msra.mxu0 0.0
        %3479 = vmatprep.subr.mxu0 0.0
        %3480 = vmatpush1.msra.mxu0 0.0
        %3481 = vmatprep.subr.mxu0 0.0
        %3482 = vmatpush1.msra.mxu0 %v3444
        %3483 = vmatprep.subr.mxu0 0.0
        %3484 = vmatpush1.msra.mxu0 %v3442
        %3485 = vmatprep.subr.mxu0 0.0
        %3486 = vmatpush2.msra.mxu0 0.0
        %3487 = vmatprep.subr.mxu0 0.0
        %3488 = vmatpush2.msra.mxu0 0.0
        %3489 = vmatprep.subr.mxu0 0.0
        %3490 = vmatpush2.msra.mxu0 0.0
        %3491 = vmatprep.subr.mxu0 0.0
        %3492 = vmatpush2.msra.mxu0 0.0
        %3493 = vmatprep.subr.mxu0 0.0
        %3494 = vmatpush2.msra.mxu0 0.0
        %3495 = vmatprep.subr.mxu0 0.0
        %3496 = vmatpush2.msra.mxu0 0.0
        %3497 = vmatprep.subr.mxu0 0.0
        %3498 = vmatpush2.msra.mxu0 0.0
        %3499 = vmatprep.subr.mxu0 0.0
        %3500 = vmatpush2.msra.mxu0 0.0
        %3501 = vmatprep.subr.mxu0 0.0
        %3502 = vmatpush2.msra.mxu0 0.0
        %3503 = vmatprep.subr.mxu0 0.0
        %3504 = vmatpush2.msra.mxu0 0.0
        %3505 = vmatprep.subr.mxu0 0.0
        %3506 = vmatpush2.msra.mxu0 0.0
        %3507 = vmatprep.subr.mxu0 0.0
        %3508 = vmatpush2.msra.mxu0 0.0
        %3509 = vmatprep.subr.mxu0 0.0
        %3510 = vmatpush2.msra.mxu0 0.0
        %3511 = vmatprep.subr.mxu0 0.0
        %3512 = vmatpush2.msra.mxu0 0.0
        %3513 = vmatprep.subr.mxu0 0.0
        %3514 = vmatpush2.msra.mxu0 0.0
        %3515 = vmatprep.subr.mxu0 0.0
        %3516 = vmatpush2.msra.mxu0 0.0
        %3517 = vmatprep.mubr.f32.mxu0 0.0
        %3518 = vmatmul.mubr.f32.gmra.mxu0 %v3448
        %v3519 = vpop.f32.mrf.mxu0
        %v3520 = vadd.f32 0.0, %v3519
        %v3521 = vpop.f32.mrf.mxu0
        %3522 = vmatprep.mubr.f32.mxu0 0.0
        %3523 = vmatmul.mubr.f32.gmra.mxu0 %v3451
        %v3524 = vpop.f32.mrf.mxu0
        %v3525 = vadd.f32 0.0, %v3524
        %v3526 = vpop.f32.mrf.mxu0
        %3527 = vdwg.mxu0
        %3528 = vrot.lane.b32.xlu0 %v3122, 96
        %v3529 = vpop.permute.xlu0 %3528
        %3530 = vrot.lane.b32.xlu0 %v3123, 96
        %v3531 = vpop.permute.xlu0 %3530
        %3532 = vrot.lane.b32.xlu0 %v3128, 96
        %v3533 = vpop.permute.xlu0 %3532
        %3534 = vrot.lane.b32.xlu0 %v3129, 96
        %v3535 = vpop.permute.xlu0 %3534
        %v3536 = vsel %vm880, %v3529, 0
        %v3538 = vsel %vm880, %v3531, 0
        %v3540 = vsel %vm880, %v3533, 0
        %v3542 = vsel %vm880, %v3535, 0
        %3544 = vmatprep.subr.mxu0 0.0
        %3545 = vmatpush1.xpose.msra.mxu0 0.0
        %3546 = vmatprep.subr.mxu0 0.0
        %3547 = vmatpush1.xpose.msra.mxu0 0.0
        %3548 = vmatprep.subr.mxu0 0.0
        %3549 = vmatpush1.xpose.msra.mxu0 0.0
        %3550 = vmatprep.subr.mxu0 0.0
        %3551 = vmatpush1.xpose.msra.mxu0 0.0
        %3552 = vmatprep.subr.mxu0 0.0
        %3553 = vmatpush1.xpose.msra.mxu0 0.0
        %3554 = vmatprep.subr.mxu0 0.0
        %3555 = vmatpush1.xpose.msra.mxu0 0.0
        %3556 = vmatprep.subr.mxu0 0.0
        %3557 = vmatpush1.xpose.msra.mxu0 0.0
        %3558 = vmatprep.subr.mxu0 0.0
        %3559 = vmatpush1.xpose.msra.mxu0 0.0
        %3560 = vmatprep.subr.mxu0 0.0
        %3561 = vmatpush1.xpose.msra.mxu0 0.0
        %3562 = vmatprep.subr.mxu0 0.0
        %3563 = vmatpush1.xpose.msra.mxu0 0.0
        %3564 = vmatprep.subr.mxu0 0.0
        %3565 = vmatpush1.xpose.msra.mxu0 0.0
        %3566 = vmatprep.subr.mxu0 0.0
        %3567 = vmatpush1.xpose.msra.mxu0 0.0
        %3568 = vmatprep.subr.mxu0 0.0
        %3569 = vmatpush1.xpose.msra.mxu0 0.0
        %3570 = vmatprep.subr.mxu0 0.0
        %3571 = vmatpush1.xpose.msra.mxu0 0.0
        %3572 = vmatprep.subr.mxu0 0.0
        %3573 = vmatpush1.xpose.msra.mxu0 %v3542
        %3574 = vmatprep.subr.mxu0 0.0
        %3575 = vmatpush1.xpose.msra.mxu0 %v3540
        %3576 = vmatprep.subr.mxu0 0.0
        %3577 = vmatpush2.xpose.msra.mxu0 0.0
        %3578 = vmatprep.subr.mxu0 0.0
        %3579 = vmatpush2.xpose.msra.mxu0 0.0
        %3580 = vmatprep.subr.mxu0 0.0
        %3581 = vmatpush2.xpose.msra.mxu0 0.0
        %3582 = vmatprep.subr.mxu0 0.0
        %3583 = vmatpush2.xpose.msra.mxu0 0.0
        %3584 = vmatprep.subr.mxu0 0.0
        %3585 = vmatpush2.xpose.msra.mxu0 0.0
        %3586 = vmatprep.subr.mxu0 0.0
        %3587 = vmatpush2.xpose.msra.mxu0 0.0
        %3588 = vmatprep.subr.mxu0 0.0
        %3589 = vmatpush2.xpose.msra.mxu0 0.0
        %3590 = vmatprep.subr.mxu0 0.0
        %3591 = vmatpush2.xpose.msra.mxu0 0.0
        %3592 = vmatprep.subr.mxu0 0.0
        %3593 = vmatpush2.xpose.msra.mxu0 0.0
        %3594 = vmatprep.subr.mxu0 0.0
        %3595 = vmatpush2.xpose.msra.mxu0 0.0
        %3596 = vmatprep.subr.mxu0 0.0
        %3597 = vmatpush2.xpose.msra.mxu0 0.0
        %3598 = vmatprep.subr.mxu0 0.0
        %3599 = vmatpush2.xpose.msra.mxu0 0.0
        %3600 = vmatprep.subr.mxu0 0.0
        %3601 = vmatpush2.xpose.msra.mxu0 0.0
        %3602 = vmatprep.subr.mxu0 0.0
        %3603 = vmatpush2.xpose.msra.mxu0 0.0
        %3604 = vmatprep.subr.mxu0 0.0
        %3605 = vmatpush2.xpose.msra.mxu0 0.0
        %3606 = vmatprep.subr.mxu0 0.0
        %3607 = vmatpush2.xpose.msra.mxu0 0.0
        %3608 = vmatprep.mubr.f32.mxu0 0.0
        %3609 = vmatmul.mubr.f32.gmra.mxu0 %v3536
        %v3610 = vpop.f32.mrf.mxu0
        %v3611 = vadd.f32 %v609, %v3610
        %v3612 = vpop.f32.mrf.mxu0
        %3613 = vmatprep.mubr.f32.mxu0 0.0
        %3614 = vmatmul.mubr.f32.gmra.mxu0 %v3538
        %v3615 = vpop.f32.mrf.mxu0
        %v3616 = vadd.f32 %v609, %v3615
        %v3617 = vpop.f32.mrf.mxu0
        %3618 = vdwg.mxu0
        %v3619 = vsel %vm880, %v3611, -inf
        %3620 = vmax.xlane.f32.xlu0 %v3619
        %v3621 = vpop.xlane.xlu0 %3620
        %v3622 = vsel %vm880, %v3616, -inf
        %3623 = vmax.xlane.f32.xlu0 %v3622
        %v3624 = vpop.xlane.xlu0 %3623
        %v3625 = vsub.f32 %v3611, %v3621
        %v3626 = vsub.f32 %v3616, %v3624
        %v3627 = vmul.f32 %v3625, 1.442695
        %v3628 = vpow.pop %v3627
        %v3629 = vmul.f32 %v3626, 1.442695
        %v3630 = vpow.pop %v3629
        %v3631 = vsel %vm880, %v3628, 0.0
        %3632 = vadd.xlane.f32.xlu0 %v3631
        %v3633 = vpop.xlane.xlu0 %3632
        %v3634 = vsel %vm880, %v3630, 0.0
        %3635 = vadd.xlane.f32.xlu0 %v3634
        %v3636 = vpop.xlane.xlu0 %3635
        %v3637 = vrcp.pop %v3633
        %v3638 = vmul.f32 %v3628, %v3637
        %v3639 = vrcp.pop %v3636
        %v3640 = vmul.f32 %v3630, %v3639
        %3641 = vrot.lane.b32.xlu0 %v3134, 96
        %v3642 = vpop.permute.xlu0 %3641
        %3643 = vrot.lane.b32.xlu0 %v3135, 96
        %v3644 = vpop.permute.xlu0 %3643
        %v3648 = vsel %vm880, %v3638, 0
        %v3651 = vsel %vm880, %v3640, 0
        %3653 = vmatprep.subr.mxu0 0.0
        %3654 = vmatpush1.msra.mxu0 0.0
        %3655 = vmatprep.subr.mxu0 0.0
        %3656 = vmatpush1.msra.mxu0 0.0
        %3657 = vmatprep.subr.mxu0 0.0
        %3658 = vmatpush1.msra.mxu0 0.0
        %3659 = vmatprep.subr.mxu0 0.0
        %3660 = vmatpush1.msra.mxu0 0.0
        %3661 = vmatprep.subr.mxu0 0.0
        %3662 = vmatpush1.msra.mxu0 0.0
        %3663 = vmatprep.subr.mxu0 0.0
        %3664 = vmatpush1.msra.mxu0 0.0
        %3665 = vmatprep.subr.mxu0 0.0
        %3666 = vmatpush1.msra.mxu0 0.0
        %3667 = vmatprep.subr.mxu0 0.0
        %3668 = vmatpush1.msra.mxu0 0.0
        %3669 = vmatprep.subr.mxu0 0.0
        %3670 = vmatpush1.msra.mxu0 0.0
        %3671 = vmatprep.subr.mxu0 0.0
        %3672 = vmatpush1.msra.mxu0 0.0
        %3673 = vmatprep.subr.mxu0 0.0
        %3674 = vmatpush1.msra.mxu0 0.0
        %3675 = vmatprep.subr.mxu0 0.0
        %3676 = vmatpush1.msra.mxu0 0.0
        %3677 = vmatprep.subr.mxu0 0.0
        %3678 = vmatpush1.msra.mxu0 0.0
        %3679 = vmatprep.subr.mxu0 0.0
        %3680 = vmatpush1.msra.mxu0 0.0
        %3681 = vmatprep.subr.mxu0 0.0
        %3682 = vmatpush1.msra.mxu0 %v3644
        %3683 = vmatprep.subr.mxu0 0.0
        %3684 = vmatpush1.msra.mxu0 %v3642
        %3685 = vmatprep.subr.mxu0 0.0
        %3686 = vmatpush2.msra.mxu0 0.0
        %3687 = vmatprep.subr.mxu0 0.0
        %3688 = vmatpush2.msra.mxu0 0.0
        %3689 = vmatprep.subr.mxu0 0.0
        %3690 = vmatpush2.msra.mxu0 0.0
        %3691 = vmatprep.subr.mxu0 0.0
        %3692 = vmatpush2.msra.mxu0 0.0
        %3693 = vmatprep.subr.mxu0 0.0
        %3694 = vmatpush2.msra.mxu0 0.0
        %3695 = vmatprep.subr.mxu0 0.0
        %3696 = vmatpush2.msra.mxu0 0.0
        %3697 = vmatprep.subr.mxu0 0.0
        %3698 = vmatpush2.msra.mxu0 0.0
        %3699 = vmatprep.subr.mxu0 0.0
        %3700 = vmatpush2.msra.mxu0 0.0
        %3701 = vmatprep.subr.mxu0 0.0
        %3702 = vmatpush2.msra.mxu0 0.0
        %3703 = vmatprep.subr.mxu0 0.0
        %3704 = vmatpush2.msra.mxu0 0.0
        %3705 = vmatprep.subr.mxu0 0.0
        %3706 = vmatpush2.msra.mxu0 0.0
        %3707 = vmatprep.subr.mxu0 0.0
        %3708 = vmatpush2.msra.mxu0 0.0
        %3709 = vmatprep.subr.mxu0 0.0
        %3710 = vmatpush2.msra.mxu0 0.0
        %3711 = vmatprep.subr.mxu0 0.0
        %3712 = vmatpush2.msra.mxu0 0.0
        %3713 = vmatprep.subr.mxu0 0.0
        %3714 = vmatpush2.msra.mxu0 0.0
        %3715 = vmatprep.subr.mxu0 0.0
        %3716 = vmatpush2.msra.mxu0 0.0
        %3717 = vmatprep.mubr.f32.mxu0 0.0
        %3718 = vmatmul.mubr.f32.gmra.mxu0 %v3648
        %v3719 = vpop.f32.mrf.mxu0
        %v3720 = vadd.f32 0.0, %v3719
        %v3721 = vpop.f32.mrf.mxu0
        %3722 = vmatprep.mubr.f32.mxu0 0.0
        %3723 = vmatmul.mubr.f32.gmra.mxu0 %v3651
        %v3724 = vpop.f32.mrf.mxu0
        %v3725 = vadd.f32 0.0, %v3724
        %v3726 = vpop.f32.mrf.mxu0
        %3727 = vdwg.mxu0
        %3728 = vrot.lane.b32.xlu0 %v3122, 80
        %v3729 = vpop.permute.xlu0 %3728
        %3730 = vrot.lane.b32.xlu0 %v3123, 80
        %v3731 = vpop.permute.xlu0 %3730
        %3732 = vrot.lane.b32.xlu0 %v3128, 80
        %v3733 = vpop.permute.xlu0 %3732
        %3734 = vrot.lane.b32.xlu0 %v3129, 80
        %v3735 = vpop.permute.xlu0 %3734
        %v3736 = vsel %vm880, %v3729, 0
        %v3738 = vsel %vm880, %v3731, 0
        %v3740 = vsel %vm880, %v3733, 0
        %v3742 = vsel %vm880, %v3735, 0
        %3744 = vmatprep.subr.mxu0 0.0
        %3745 = vmatpush1.xpose.msra.mxu0 0.0
        %3746 = vmatprep.subr.mxu0 0.0
        %3747 = vmatpush1.xpose.msra.mxu0 0.0
        %3748 = vmatprep.subr.mxu0 0.0
        %3749 = vmatpush1.xpose.msra.mxu0 0.0
        %3750 = vmatprep.subr.mxu0 0.0
        %3751 = vmatpush1.xpose.msra.mxu0 0.0
        %3752 = vmatprep.subr.mxu0 0.0
        %3753 = vmatpush1.xpose.msra.mxu0 0.0
        %3754 = vmatprep.subr.mxu0 0.0
        %3755 = vmatpush1.xpose.msra.mxu0 0.0
        %3756 = vmatprep.subr.mxu0 0.0
        %3757 = vmatpush1.xpose.msra.mxu0 0.0
        %3758 = vmatprep.subr.mxu0 0.0
        %3759 = vmatpush1.xpose.msra.mxu0 0.0
        %3760 = vmatprep.subr.mxu0 0.0
        %3761 = vmatpush1.xpose.msra.mxu0 0.0
        %3762 = vmatprep.subr.mxu0 0.0
        %3763 = vmatpush1.xpose.msra.mxu0 0.0
        %3764 = vmatprep.subr.mxu0 0.0
        %3765 = vmatpush1.xpose.msra.mxu0 0.0
        %3766 = vmatprep.subr.mxu0 0.0
        %3767 = vmatpush1.xpose.msra.mxu0 0.0
        %3768 = vmatprep.subr.mxu0 0.0
        %3769 = vmatpush1.xpose.msra.mxu0 0.0
        %3770 = vmatprep.subr.mxu0 0.0
        %3771 = vmatpush1.xpose.msra.mxu0 0.0
        %3772 = vmatprep.subr.mxu0 0.0
        %3773 = vmatpush1.xpose.msra.mxu0 %v3742
        %3774 = vmatprep.subr.mxu0 0.0
        %3775 = vmatpush1.xpose.msra.mxu0 %v3740
        %3776 = vmatprep.subr.mxu0 0.0
        %3777 = vmatpush2.xpose.msra.mxu0 0.0
        %3778 = vmatprep.subr.mxu0 0.0
        %3779 = vmatpush2.xpose.msra.mxu0 0.0
        %3780 = vmatprep.subr.mxu0 0.0
        %3781 = vmatpush2.xpose.msra.mxu0 0.0
        %3782 = vmatprep.subr.mxu0 0.0
        %3783 = vmatpush2.xpose.msra.mxu0 0.0
        %3784 = vmatprep.subr.mxu0 0.0
        %3785 = vmatpush2.xpose.msra.mxu0 0.0
        %3786 = vmatprep.subr.mxu0 0.0
        %3787 = vmatpush2.xpose.msra.mxu0 0.0
        %3788 = vmatprep.subr.mxu0 0.0
        %3789 = vmatpush2.xpose.msra.mxu0 0.0
        %3790 = vmatprep.subr.mxu0 0.0
        %3791 = vmatpush2.xpose.msra.mxu0 0.0
        %3792 = vmatprep.subr.mxu0 0.0
        %3793 = vmatpush2.xpose.msra.mxu0 0.0
        %3794 = vmatprep.subr.mxu0 0.0
        %3795 = vmatpush2.xpose.msra.mxu0 0.0
        %3796 = vmatprep.subr.mxu0 0.0
        %3797 = vmatpush2.xpose.msra.mxu0 0.0
        %3798 = vmatprep.subr.mxu0 0.0
        %3799 = vmatpush2.xpose.msra.mxu0 0.0
        %3800 = vmatprep.subr.mxu0 0.0
        %3801 = vmatpush2.xpose.msra.mxu0 0.0
        %3802 = vmatprep.subr.mxu0 0.0
        %3803 = vmatpush2.xpose.msra.mxu0 0.0
        %3804 = vmatprep.subr.mxu0 0.0
        %3805 = vmatpush2.xpose.msra.mxu0 0.0
        %3806 = vmatprep.subr.mxu0 0.0
        %3807 = vmatpush2.xpose.msra.mxu0 0.0
        %3808 = vmatprep.mubr.f32.mxu0 0.0
        %3809 = vmatmul.mubr.f32.gmra.mxu0 %v3736
        %v3810 = vpop.f32.mrf.mxu0
        %v3811 = vadd.f32 %v609, %v3810
        %v3812 = vpop.f32.mrf.mxu0
        %3813 = vmatprep.mubr.f32.mxu0 0.0
        %3814 = vmatmul.mubr.f32.gmra.mxu0 %v3738
        %v3815 = vpop.f32.mrf.mxu0
        %v3816 = vadd.f32 %v609, %v3815
        %v3817 = vpop.f32.mrf.mxu0
        %3818 = vdwg.mxu0
        %v3819 = vsel %vm880, %v3811, -inf
        %3820 = vmax.xlane.f32.xlu0 %v3819
        %v3821 = vpop.xlane.xlu0 %3820
        %v3822 = vsel %vm880, %v3816, -inf
        %3823 = vmax.xlane.f32.xlu0 %v3822
        %v3824 = vpop.xlane.xlu0 %3823
        %v3825 = vsub.f32 %v3811, %v3821
        %v3826 = vsub.f32 %v3816, %v3824
        %v3827 = vmul.f32 %v3825, 1.442695
        %v3828 = vpow.pop %v3827
        %v3829 = vmul.f32 %v3826, 1.442695
        %v3830 = vpow.pop %v3829
        %v3831 = vsel %vm880, %v3828, 0.0
        %3832 = vadd.xlane.f32.xlu0 %v3831
        %v3833 = vpop.xlane.xlu0 %3832
        %v3834 = vsel %vm880, %v3830, 0.0
        %3835 = vadd.xlane.f32.xlu0 %v3834
        %v3836 = vpop.xlane.xlu0 %3835
        %v3837 = vrcp.pop %v3833
        %v3838 = vmul.f32 %v3828, %v3837
        %v3839 = vrcp.pop %v3836
        %v3840 = vmul.f32 %v3830, %v3839
        %3841 = vrot.lane.b32.xlu0 %v3134, 80
        %v3842 = vpop.permute.xlu0 %3841
        %3843 = vrot.lane.b32.xlu0 %v3135, 80
        %v3844 = vpop.permute.xlu0 %3843
        %v3848 = vsel %vm880, %v3838, 0
        %v3851 = vsel %vm880, %v3840, 0
        %3853 = vmatprep.subr.mxu0 0.0
        %3854 = vmatpush1.msra.mxu0 0.0
        %3855 = vmatprep.subr.mxu0 0.0
        %3856 = vmatpush1.msra.mxu0 0.0
        %3857 = vmatprep.subr.mxu0 0.0
        %3858 = vmatpush1.msra.mxu0 0.0
        %3859 = vmatprep.subr.mxu0 0.0
        %3860 = vmatpush1.msra.mxu0 0.0
        %3861 = vmatprep.subr.mxu0 0.0
        %3862 = vmatpush1.msra.mxu0 0.0
        %3863 = vmatprep.subr.mxu0 0.0
        %3864 = vmatpush1.msra.mxu0 0.0
        %3865 = vmatprep.subr.mxu0 0.0
        %3866 = vmatpush1.msra.mxu0 0.0
        %3867 = vmatprep.subr.mxu0 0.0
        %3868 = vmatpush1.msra.mxu0 0.0
        %3869 = vmatprep.subr.mxu0 0.0
        %3870 = vmatpush1.msra.mxu0 0.0
        %3871 = vmatprep.subr.mxu0 0.0
        %3872 = vmatpush1.msra.mxu0 0.0
        %3873 = vmatprep.subr.mxu0 0.0
        %3874 = vmatpush1.msra.mxu0 0.0
        %3875 = vmatprep.subr.mxu0 0.0
        %3876 = vmatpush1.msra.mxu0 0.0
        %3877 = vmatprep.subr.mxu0 0.0
        %3878 = vmatpush1.msra.mxu0 0.0
        %3879 = vmatprep.subr.mxu0 0.0
        %3880 = vmatpush1.msra.mxu0 0.0
        %3881 = vmatprep.subr.mxu0 0.0
        %3882 = vmatpush1.msra.mxu0 %v3844
        %3883 = vmatprep.subr.mxu0 0.0
        %3884 = vmatpush1.msra.mxu0 %v3842
        %3885 = vmatprep.subr.mxu0 0.0
        %3886 = vmatpush2.msra.mxu0 0.0
        %3887 = vmatprep.subr.mxu0 0.0
        %3888 = vmatpush2.msra.mxu0 0.0
        %3889 = vmatprep.subr.mxu0 0.0
        %3890 = vmatpush2.msra.mxu0 0.0
        %3891 = vmatprep.subr.mxu0 0.0
        %3892 = vmatpush2.msra.mxu0 0.0
        %3893 = vmatprep.subr.mxu0 0.0
        %3894 = vmatpush2.msra.mxu0 0.0
        %3895 = vmatprep.subr.mxu0 0.0
        %3896 = vmatpush2.msra.mxu0 0.0
        %3897 = vmatprep.subr.mxu0 0.0
        %3898 = vmatpush2.msra.mxu0 0.0
        %3899 = vmatprep.subr.mxu0 0.0
        %3900 = vmatpush2.msra.mxu0 0.0
        %3901 = vmatprep.subr.mxu0 0.0
        %3902 = vmatpush2.msra.mxu0 0.0
        %3903 = vmatprep.subr.mxu0 0.0
        %3904 = vmatpush2.msra.mxu0 0.0
        %3905 = vmatprep.subr.mxu0 0.0
        %3906 = vmatpush2.msra.mxu0 0.0
        %3907 = vmatprep.subr.mxu0 0.0
        %3908 = vmatpush2.msra.mxu0 0.0
        %3909 = vmatprep.subr.mxu0 0.0
        %3910 = vmatpush2.msra.mxu0 0.0
        %3911 = vmatprep.subr.mxu0 0.0
        %3912 = vmatpush2.msra.mxu0 0.0
        %3913 = vmatprep.subr.mxu0 0.0
        %3914 = vmatpush2.msra.mxu0 0.0
        %3915 = vmatprep.subr.mxu0 0.0
        %3916 = vmatpush2.msra.mxu0 0.0
        %3917 = vmatprep.mubr.f32.mxu0 0.0
        %3918 = vmatmul.mubr.f32.gmra.mxu0 %v3848
        %v3919 = vpop.f32.mrf.mxu0
        %v3920 = vadd.f32 0.0, %v3919
        %v3921 = vpop.f32.mrf.mxu0
        %3922 = vmatprep.mubr.f32.mxu0 0.0
        %3923 = vmatmul.mubr.f32.gmra.mxu0 %v3851
        %v3924 = vpop.f32.mrf.mxu0
        %v3925 = vadd.f32 0.0, %v3924
        %v3926 = vpop.f32.mrf.mxu0
        %3927 = vdwg.mxu0
        %3928 = vrot.lane.b32.xlu0 %v3122, 64
        %v3929 = vpop.permute.xlu0 %3928
        %3930 = vrot.lane.b32.xlu0 %v3123, 64
        %v3931 = vpop.permute.xlu0 %3930
        %3932 = vrot.lane.b32.xlu0 %v3128, 64
        %v3933 = vpop.permute.xlu0 %3932
        %3934 = vrot.lane.b32.xlu0 %v3129, 64
        %v3935 = vpop.permute.xlu0 %3934
        %v3936 = vsel %vm880, %v3929, 0
        %v3938 = vsel %vm880, %v3931, 0
        %v3940 = vsel %vm880, %v3933, 0
        %v3942 = vsel %vm880, %v3935, 0
        %3944 = vmatprep.subr.mxu0 0.0
        %3945 = vmatpush1.xpose.msra.mxu0 0.0
        %3946 = vmatprep.subr.mxu0 0.0
        %3947 = vmatpush1.xpose.msra.mxu0 0.0
        %3948 = vmatprep.subr.mxu0 0.0
        %3949 = vmatpush1.xpose.msra.mxu0 0.0
        %3950 = vmatprep.subr.mxu0 0.0
        %3951 = vmatpush1.xpose.msra.mxu0 0.0
        %3952 = vmatprep.subr.mxu0 0.0
        %3953 = vmatpush1.xpose.msra.mxu0 0.0
        %3954 = vmatprep.subr.mxu0 0.0
        %3955 = vmatpush1.xpose.msra.mxu0 0.0
        %3956 = vmatprep.subr.mxu0 0.0
        %3957 = vmatpush1.xpose.msra.mxu0 0.0
        %3958 = vmatprep.subr.mxu0 0.0
        %3959 = vmatpush1.xpose.msra.mxu0 0.0
        %3960 = vmatprep.subr.mxu0 0.0
        %3961 = vmatpush1.xpose.msra.mxu0 0.0
        %3962 = vmatprep.subr.mxu0 0.0
        %3963 = vmatpush1.xpose.msra.mxu0 0.0
        %3964 = vmatprep.subr.mxu0 0.0
        %3965 = vmatpush1.xpose.msra.mxu0 0.0
        %3966 = vmatprep.subr.mxu0 0.0
        %3967 = vmatpush1.xpose.msra.mxu0 0.0
        %3968 = vmatprep.subr.mxu0 0.0
        %3969 = vmatpush1.xpose.msra.mxu0 0.0
        %3970 = vmatprep.subr.mxu0 0.0
        %3971 = vmatpush1.xpose.msra.mxu0 0.0
        %3972 = vmatprep.subr.mxu0 0.0
        %3973 = vmatpush1.xpose.msra.mxu0 %v3942
        %3974 = vmatprep.subr.mxu0 0.0
        %3975 = vmatpush1.xpose.msra.mxu0 %v3940
        %3976 = vmatprep.subr.mxu0 0.0
        %3977 = vmatpush2.xpose.msra.mxu0 0.0
        %3978 = vmatprep.subr.mxu0 0.0
        %3979 = vmatpush2.xpose.msra.mxu0 0.0
        %3980 = vmatprep.subr.mxu0 0.0
        %3981 = vmatpush2.xpose.msra.mxu0 0.0
        %3982 = vmatprep.subr.mxu0 0.0
        %3983 = vmatpush2.xpose.msra.mxu0 0.0
        %3984 = vmatprep.subr.mxu0 0.0
        %3985 = vmatpush2.xpose.msra.mxu0 0.0
        %3986 = vmatprep.subr.mxu0 0.0
        %3987 = vmatpush2.xpose.msra.mxu0 0.0
        %3988 = vmatprep.subr.mxu0 0.0
        %3989 = vmatpush2.xpose.msra.mxu0 0.0
        %3990 = vmatprep.subr.mxu0 0.0
        %3991 = vmatpush2.xpose.msra.mxu0 0.0
        %3992 = vmatprep.subr.mxu0 0.0
        %3993 = vmatpush2.xpose.msra.mxu0 0.0
        %3994 = vmatprep.subr.mxu0 0.0
        %3995 = vmatpush2.xpose.msra.mxu0 0.0
        %3996 = vmatprep.subr.mxu0 0.0
        %3997 = vmatpush2.xpose.msra.mxu0 0.0
        %3998 = vmatprep.subr.mxu0 0.0
        %3999 = vmatpush2.xpose.msra.mxu0 0.0
        %4000 = vmatprep.subr.mxu0 0.0
        %4001 = vmatpush2.xpose.msra.mxu0 0.0
        %4002 = vmatprep.subr.mxu0 0.0
        %4003 = vmatpush2.xpose.msra.mxu0 0.0
        %4004 = vmatprep.subr.mxu0 0.0
        %4005 = vmatpush2.xpose.msra.mxu0 0.0
        %4006 = vmatprep.subr.mxu0 0.0
        %4007 = vmatpush2.xpose.msra.mxu0 0.0
        %4008 = vmatprep.mubr.f32.mxu0 0.0
        %4009 = vmatmul.mubr.f32.gmra.mxu0 %v3936
        %v4010 = vpop.f32.mrf.mxu0
        %v4011 = vadd.f32 %v609, %v4010
        %v4012 = vpop.f32.mrf.mxu0
        %4013 = vmatprep.mubr.f32.mxu0 0.0
        %4014 = vmatmul.mubr.f32.gmra.mxu0 %v3938
        %v4015 = vpop.f32.mrf.mxu0
        %v4016 = vadd.f32 %v609, %v4015
        %v4017 = vpop.f32.mrf.mxu0
        %4018 = vdwg.mxu0
        %v4019 = vsel %vm880, %v4011, -inf
        %4020 = vmax.xlane.f32.xlu0 %v4019
        %v4021 = vpop.xlane.xlu0 %4020
        %v4022 = vsel %vm880, %v4016, -inf
        %4023 = vmax.xlane.f32.xlu0 %v4022
        %v4024 = vpop.xlane.xlu0 %4023
        %v4025 = vsub.f32 %v4011, %v4021
        %v4026 = vsub.f32 %v4016, %v4024
        %v4027 = vmul.f32 %v4025, 1.442695
        %v4028 = vpow.pop %v4027
        %v4029 = vmul.f32 %v4026, 1.442695
        %v4030 = vpow.pop %v4029
        %v4031 = vsel %vm880, %v4028, 0.0
        %4032 = vadd.xlane.f32.xlu0 %v4031
        %v4033 = vpop.xlane.xlu0 %4032
        %v4034 = vsel %vm880, %v4030, 0.0
        %4035 = vadd.xlane.f32.xlu0 %v4034
        %v4036 = vpop.xlane.xlu0 %4035
        %v4037 = vrcp.pop %v4033
        %v4038 = vmul.f32 %v4028, %v4037
        %v4039 = vrcp.pop %v4036
        %v4040 = vmul.f32 %v4030, %v4039
        %4041 = vrot.lane.b32.xlu0 %v3134, 64
        %v4042 = vpop.permute.xlu0 %4041
        %4043 = vrot.lane.b32.xlu0 %v3135, 64
        %v4044 = vpop.permute.xlu0 %4043
        %v4048 = vsel %vm880, %v4038, 0
        %v4051 = vsel %vm880, %v4040, 0
        %4053 = vmatprep.subr.mxu0 0.0
        %4054 = vmatpush1.msra.mxu0 0.0
        %4055 = vmatprep.subr.mxu0 0.0
        %4056 = vmatpush1.msra.mxu0 0.0
        %4057 = vmatprep.subr.mxu0 0.0
        %4058 = vmatpush1.msra.mxu0 0.0
        %4059 = vmatprep.subr.mxu0 0.0
        %4060 = vmatpush1.msra.mxu0 0.0
        %4061 = vmatprep.subr.mxu0 0.0
        %4062 = vmatpush1.msra.mxu0 0.0
        %4063 = vmatprep.subr.mxu0 0.0
        %4064 = vmatpush1.msra.mxu0 0.0
        %4065 = vmatprep.subr.mxu0 0.0
        %4066 = vmatpush1.msra.mxu0 0.0
        %4067 = vmatprep.subr.mxu0 0.0
        %4068 = vmatpush1.msra.mxu0 0.0
        %4069 = vmatprep.subr.mxu0 0.0
        %4070 = vmatpush1.msra.mxu0 0.0
        %4071 = vmatprep.subr.mxu0 0.0
        %4072 = vmatpush1.msra.mxu0 0.0
        %4073 = vmatprep.subr.mxu0 0.0
        %4074 = vmatpush1.msra.mxu0 0.0
        %4075 = vmatprep.subr.mxu0 0.0
        %4076 = vmatpush1.msra.mxu0 0.0
        %4077 = vmatprep.subr.mxu0 0.0
        %4078 = vmatpush1.msra.mxu0 0.0
        %4079 = vmatprep.subr.mxu0 0.0
        %4080 = vmatpush1.msra.mxu0 0.0
        %4081 = vmatprep.subr.mxu0 0.0
        %4082 = vmatpush1.msra.mxu0 %v4044
        %4083 = vmatprep.subr.mxu0 0.0
        %4084 = vmatpush1.msra.mxu0 %v4042
        %4085 = vmatprep.subr.mxu0 0.0
        %4086 = vmatpush2.msra.mxu0 0.0
        %4087 = vmatprep.subr.mxu0 0.0
        %4088 = vmatpush2.msra.mxu0 0.0
        %4089 = vmatprep.subr.mxu0 0.0
        %4090 = vmatpush2.msra.mxu0 0.0
        %4091 = vmatprep.subr.mxu0 0.0
        %4092 = vmatpush2.msra.mxu0 0.0
        %4093 = vmatprep.subr.mxu0 0.0
        %4094 = vmatpush2.msra.mxu0 0.0
        %4095 = vmatprep.subr.mxu0 0.0
        %4096 = vmatpush2.msra.mxu0 0.0
        %4097 = vmatprep.subr.mxu0 0.0
        %4098 = vmatpush2.msra.mxu0 0.0
        %4099 = vmatprep.subr.mxu0 0.0
        %4100 = vmatpush2.msra.mxu0 0.0
        %4101 = vmatprep.subr.mxu0 0.0
        %4102 = vmatpush2.msra.mxu0 0.0
        %4103 = vmatprep.subr.mxu0 0.0
        %4104 = vmatpush2.msra.mxu0 0.0
        %4105 = vmatprep.subr.mxu0 0.0
        %4106 = vmatpush2.msra.mxu0 0.0
        %4107 = vmatprep.subr.mxu0 0.0
        %4108 = vmatpush2.msra.mxu0 0.0
        %4109 = vmatprep.subr.mxu0 0.0
        %4110 = vmatpush2.msra.mxu0 0.0
        %4111 = vmatprep.subr.mxu0 0.0
        %4112 = vmatpush2.msra.mxu0 0.0
        %4113 = vmatprep.subr.mxu0 0.0
        %4114 = vmatpush2.msra.mxu0 0.0
        %4115 = vmatprep.subr.mxu0 0.0
        %4116 = vmatpush2.msra.mxu0 0.0
        %4117 = vmatprep.mubr.f32.mxu0 0.0
        %4118 = vmatmul.mubr.f32.gmra.mxu0 %v4048
        %v4119 = vpop.f32.mrf.mxu0
        %v4120 = vadd.f32 0.0, %v4119
        %v4121 = vpop.f32.mrf.mxu0
        %4122 = vmatprep.mubr.f32.mxu0 0.0
        %4123 = vmatmul.mubr.f32.gmra.mxu0 %v4051
        %v4124 = vpop.f32.mrf.mxu0
        %v4125 = vadd.f32 0.0, %v4124
        %v4126 = vpop.f32.mrf.mxu0
        %4127 = vdwg.mxu0
        %4128 = vrot.lane.b32.xlu0 %v3122, 48
        %v4129 = vpop.permute.xlu0 %4128
        %4130 = vrot.lane.b32.xlu0 %v3123, 48
        %v4131 = vpop.permute.xlu0 %4130
        %4132 = vrot.lane.b32.xlu0 %v3128, 48
        %v4133 = vpop.permute.xlu0 %4132
        %4134 = vrot.lane.b32.xlu0 %v3129, 48
        %v4135 = vpop.permute.xlu0 %4134
        %v4136 = vsel %vm880, %v4129, 0
        %v4138 = vsel %vm880, %v4131, 0
        %v4140 = vsel %vm880, %v4133, 0
        %v4142 = vsel %vm880, %v4135, 0
        %4144 = vmatprep.subr.mxu0 0.0
        %4145 = vmatpush1.xpose.msra.mxu0 0.0
        %4146 = vmatprep.subr.mxu0 0.0
        %4147 = vmatpush1.xpose.msra.mxu0 0.0
        %4148 = vmatprep.subr.mxu0 0.0
        %4149 = vmatpush1.xpose.msra.mxu0 0.0
        %4150 = vmatprep.subr.mxu0 0.0
        %4151 = vmatpush1.xpose.msra.mxu0 0.0
        %4152 = vmatprep.subr.mxu0 0.0
        %4153 = vmatpush1.xpose.msra.mxu0 0.0
        %4154 = vmatprep.subr.mxu0 0.0
        %4155 = vmatpush1.xpose.msra.mxu0 0.0
        %4156 = vmatprep.subr.mxu0 0.0
        %4157 = vmatpush1.xpose.msra.mxu0 0.0
        %4158 = vmatprep.subr.mxu0 0.0
        %4159 = vmatpush1.xpose.msra.mxu0 0.0
        %4160 = vmatprep.subr.mxu0 0.0
        %4161 = vmatpush1.xpose.msra.mxu0 0.0
        %4162 = vmatprep.subr.mxu0 0.0
        %4163 = vmatpush1.xpose.msra.mxu0 0.0
        %4164 = vmatprep.subr.mxu0 0.0
        %4165 = vmatpush1.xpose.msra.mxu0 0.0
        %4166 = vmatprep.subr.mxu0 0.0
        %4167 = vmatpush1.xpose.msra.mxu0 0.0
        %4168 = vmatprep.subr.mxu0 0.0
        %4169 = vmatpush1.xpose.msra.mxu0 0.0
        %4170 = vmatprep.subr.mxu0 0.0
        %4171 = vmatpush1.xpose.msra.mxu0 0.0
        %4172 = vmatprep.subr.mxu0 0.0
        %4173 = vmatpush1.xpose.msra.mxu0 %v4142
        %4174 = vmatprep.subr.mxu0 0.0
        %4175 = vmatpush1.xpose.msra.mxu0 %v4140
        %4176 = vmatprep.subr.mxu0 0.0
        %4177 = vmatpush2.xpose.msra.mxu0 0.0
        %4178 = vmatprep.subr.mxu0 0.0
        %4179 = vmatpush2.xpose.msra.mxu0 0.0
        %4180 = vmatprep.subr.mxu0 0.0
        %4181 = vmatpush2.xpose.msra.mxu0 0.0
        %4182 = vmatprep.subr.mxu0 0.0
        %4183 = vmatpush2.xpose.msra.mxu0 0.0
        %4184 = vmatprep.subr.mxu0 0.0
        %4185 = vmatpush2.xpose.msra.mxu0 0.0
        %4186 = vmatprep.subr.mxu0 0.0
        %4187 = vmatpush2.xpose.msra.mxu0 0.0
        %4188 = vmatprep.subr.mxu0 0.0
        %4189 = vmatpush2.xpose.msra.mxu0 0.0
        %4190 = vmatprep.subr.mxu0 0.0
        %4191 = vmatpush2.xpose.msra.mxu0 0.0
        %4192 = vmatprep.subr.mxu0 0.0
        %4193 = vmatpush2.xpose.msra.mxu0 0.0
        %4194 = vmatprep.subr.mxu0 0.0
        %4195 = vmatpush2.xpose.msra.mxu0 0.0
        %4196 = vmatprep.subr.mxu0 0.0
        %4197 = vmatpush2.xpose.msra.mxu0 0.0
        %4198 = vmatprep.subr.mxu0 0.0
        %4199 = vmatpush2.xpose.msra.mxu0 0.0
        %4200 = vmatprep.subr.mxu0 0.0
        %4201 = vmatpush2.xpose.msra.mxu0 0.0
        %4202 = vmatprep.subr.mxu0 0.0
        %4203 = vmatpush2.xpose.msra.mxu0 0.0
        %4204 = vmatprep.subr.mxu0 0.0
        %4205 = vmatpush2.xpose.msra.mxu0 0.0
        %4206 = vmatprep.subr.mxu0 0.0
        %4207 = vmatpush2.xpose.msra.mxu0 0.0
        %4208 = vmatprep.mubr.f32.mxu0 0.0
        %4209 = vmatmul.mubr.f32.gmra.mxu0 %v4136
        %v4210 = vpop.f32.mrf.mxu0
        %v4211 = vadd.f32 %v609, %v4210
        %v4212 = vpop.f32.mrf.mxu0
        %4213 = vmatprep.mubr.f32.mxu0 0.0
        %4214 = vmatmul.mubr.f32.gmra.mxu0 %v4138
        %v4215 = vpop.f32.mrf.mxu0
        %v4216 = vadd.f32 %v609, %v4215
        %v4217 = vpop.f32.mrf.mxu0
        %4218 = vdwg.mxu0
        %v4219 = vsel %vm880, %v4211, -inf
        %4220 = vmax.xlane.f32.xlu0 %v4219
        %v4221 = vpop.xlane.xlu0 %4220
        %v4222 = vsel %vm880, %v4216, -inf
        %4223 = vmax.xlane.f32.xlu0 %v4222
        %v4224 = vpop.xlane.xlu0 %4223
        %v4225 = vsub.f32 %v4211, %v4221
        %v4226 = vsub.f32 %v4216, %v4224
        %v4227 = vmul.f32 %v4225, 1.442695
        %v4228 = vpow.pop %v4227
        %v4229 = vmul.f32 %v4226, 1.442695
        %v4230 = vpow.pop %v4229
        %v4231 = vsel %vm880, %v4228, 0.0
        %4232 = vadd.xlane.f32.xlu0 %v4231
        %v4233 = vpop.xlane.xlu0 %4232
        %v4234 = vsel %vm880, %v4230, 0.0
        %4235 = vadd.xlane.f32.xlu0 %v4234
        %v4236 = vpop.xlane.xlu0 %4235
        %v4237 = vrcp.pop %v4233
        %v4238 = vmul.f32 %v4228, %v4237
        %v4239 = vrcp.pop %v4236
        %v4240 = vmul.f32 %v4230, %v4239
        %4241 = vrot.lane.b32.xlu0 %v3134, 48
        %v4242 = vpop.permute.xlu0 %4241
        %4243 = vrot.lane.b32.xlu0 %v3135, 48
        %v4244 = vpop.permute.xlu0 %4243
        %v4248 = vsel %vm880, %v4238, 0
        %v4251 = vsel %vm880, %v4240, 0
        %4253 = vmatprep.subr.mxu0 0.0
        %4254 = vmatpush1.msra.mxu0 0.0
        %4255 = vmatprep.subr.mxu0 0.0
        %4256 = vmatpush1.msra.mxu0 0.0
        %4257 = vmatprep.subr.mxu0 0.0
        %4258 = vmatpush1.msra.mxu0 0.0
        %4259 = vmatprep.subr.mxu0 0.0
        %4260 = vmatpush1.msra.mxu0 0.0
        %4261 = vmatprep.subr.mxu0 0.0
        %4262 = vmatpush1.msra.mxu0 0.0
        %4263 = vmatprep.subr.mxu0 0.0
        %4264 = vmatpush1.msra.mxu0 0.0
        %4265 = vmatprep.subr.mxu0 0.0
        %4266 = vmatpush1.msra.mxu0 0.0
        %4267 = vmatprep.subr.mxu0 0.0
        %4268 = vmatpush1.msra.mxu0 0.0
        %4269 = vmatprep.subr.mxu0 0.0
        %4270 = vmatpush1.msra.mxu0 0.0
        %4271 = vmatprep.subr.mxu0 0.0
        %4272 = vmatpush1.msra.mxu0 0.0
        %4273 = vmatprep.subr.mxu0 0.0
        %4274 = vmatpush1.msra.mxu0 0.0
        %4275 = vmatprep.subr.mxu0 0.0
        %4276 = vmatpush1.msra.mxu0 0.0
        %4277 = vmatprep.subr.mxu0 0.0
        %4278 = vmatpush1.msra.mxu0 0.0
        %4279 = vmatprep.subr.mxu0 0.0
        %4280 = vmatpush1.msra.mxu0 0.0
        %4281 = vmatprep.subr.mxu0 0.0
        %4282 = vmatpush1.msra.mxu0 %v4244
        %4283 = vmatprep.subr.mxu0 0.0
        %4284 = vmatpush1.msra.mxu0 %v4242
        %4285 = vmatprep.subr.mxu0 0.0
        %4286 = vmatpush2.msra.mxu0 0.0
        %4287 = vmatprep.subr.mxu0 0.0
        %4288 = vmatpush2.msra.mxu0 0.0
        %4289 = vmatprep.subr.mxu0 0.0
        %4290 = vmatpush2.msra.mxu0 0.0
        %4291 = vmatprep.subr.mxu0 0.0
        %4292 = vmatpush2.msra.mxu0 0.0
        %4293 = vmatprep.subr.mxu0 0.0
        %4294 = vmatpush2.msra.mxu0 0.0
        %4295 = vmatprep.subr.mxu0 0.0
        %4296 = vmatpush2.msra.mxu0 0.0
        %4297 = vmatprep.subr.mxu0 0.0
        %4298 = vmatpush2.msra.mxu0 0.0
        %4299 = vmatprep.subr.mxu0 0.0
        %4300 = vmatpush2.msra.mxu0 0.0
        %4301 = vmatprep.subr.mxu0 0.0
        %4302 = vmatpush2.msra.mxu0 0.0
        %4303 = vmatprep.subr.mxu0 0.0
        %4304 = vmatpush2.msra.mxu0 0.0
        %4305 = vmatprep.subr.mxu0 0.0
        %4306 = vmatpush2.msra.mxu0 0.0
        %4307 = vmatprep.subr.mxu0 0.0
        %4308 = vmatpush2.msra.mxu0 0.0
        %4309 = vmatprep.subr.mxu0 0.0
        %4310 = vmatpush2.msra.mxu0 0.0
        %4311 = vmatprep.subr.mxu0 0.0
        %4312 = vmatpush2.msra.mxu0 0.0
        %4313 = vmatprep.subr.mxu0 0.0
        %4314 = vmatpush2.msra.mxu0 0.0
        %4315 = vmatprep.subr.mxu0 0.0
        %4316 = vmatpush2.msra.mxu0 0.0
        %4317 = vmatprep.mubr.f32.mxu0 0.0
        %4318 = vmatmul.mubr.f32.gmra.mxu0 %v4248
        %v4319 = vpop.f32.mrf.mxu0
        %v4320 = vadd.f32 0.0, %v4319
        %v4321 = vpop.f32.mrf.mxu0
        %4322 = vmatprep.mubr.f32.mxu0 0.0
        %4323 = vmatmul.mubr.f32.gmra.mxu0 %v4251
        %v4324 = vpop.f32.mrf.mxu0
        %v4325 = vadd.f32 0.0, %v4324
        %v4326 = vpop.f32.mrf.mxu0
        %4327 = vdwg.mxu0
        %4328 = vrot.lane.b32.xlu0 %v3122, 32
        %v4329 = vpop.permute.xlu0 %4328
        %4330 = vrot.lane.b32.xlu0 %v3123, 32
        %v4331 = vpop.permute.xlu0 %4330
        %4332 = vrot.lane.b32.xlu0 %v3128, 32
        %v4333 = vpop.permute.xlu0 %4332
        %4334 = vrot.lane.b32.xlu0 %v3129, 32
        %v4335 = vpop.permute.xlu0 %4334
        %v4336 = vsel %vm880, %v4329, 0
        %v4338 = vsel %vm880, %v4331, 0
        %v4340 = vsel %vm880, %v4333, 0
        %v4342 = vsel %vm880, %v4335, 0
        %4344 = vmatprep.subr.mxu0 0.0
        %4345 = vmatpush1.xpose.msra.mxu0 0.0
        %4346 = vmatprep.subr.mxu0 0.0
        %4347 = vmatpush1.xpose.msra.mxu0 0.0
        %4348 = vmatprep.subr.mxu0 0.0
        %4349 = vmatpush1.xpose.msra.mxu0 0.0
        %4350 = vmatprep.subr.mxu0 0.0
        %4351 = vmatpush1.xpose.msra.mxu0 0.0
        %4352 = vmatprep.subr.mxu0 0.0
        %4353 = vmatpush1.xpose.msra.mxu0 0.0
        %4354 = vmatprep.subr.mxu0 0.0
        %4355 = vmatpush1.xpose.msra.mxu0 0.0
        %4356 = vmatprep.subr.mxu0 0.0
        %4357 = vmatpush1.xpose.msra.mxu0 0.0
        %4358 = vmatprep.subr.mxu0 0.0
        %4359 = vmatpush1.xpose.msra.mxu0 0.0
        %4360 = vmatprep.subr.mxu0 0.0
        %4361 = vmatpush1.xpose.msra.mxu0 0.0
        %4362 = vmatprep.subr.mxu0 0.0
        %4363 = vmatpush1.xpose.msra.mxu0 0.0
        %4364 = vmatprep.subr.mxu0 0.0
        %4365 = vmatpush1.xpose.msra.mxu0 0.0
        %4366 = vmatprep.subr.mxu0 0.0
        %4367 = vmatpush1.xpose.msra.mxu0 0.0
        %4368 = vmatprep.subr.mxu0 0.0
        %4369 = vmatpush1.xpose.msra.mxu0 0.0
        %4370 = vmatprep.subr.mxu0 0.0
        %4371 = vmatpush1.xpose.msra.mxu0 0.0
        %4372 = vmatprep.subr.mxu0 0.0
        %4373 = vmatpush1.xpose.msra.mxu0 %v4342
        %4374 = vmatprep.subr.mxu0 0.0
        %4375 = vmatpush1.xpose.msra.mxu0 %v4340
        %4376 = vmatprep.subr.mxu0 0.0
        %4377 = vmatpush2.xpose.msra.mxu0 0.0
        %4378 = vmatprep.subr.mxu0 0.0
        %4379 = vmatpush2.xpose.msra.mxu0 0.0
        %4380 = vmatprep.subr.mxu0 0.0
        %4381 = vmatpush2.xpose.msra.mxu0 0.0
        %4382 = vmatprep.subr.mxu0 0.0
        %4383 = vmatpush2.xpose.msra.mxu0 0.0
        %4384 = vmatprep.subr.mxu0 0.0
        %4385 = vmatpush2.xpose.msra.mxu0 0.0
        %4386 = vmatprep.subr.mxu0 0.0
        %4387 = vmatpush2.xpose.msra.mxu0 0.0
        %4388 = vmatprep.subr.mxu0 0.0
        %4389 = vmatpush2.xpose.msra.mxu0 0.0
        %4390 = vmatprep.subr.mxu0 0.0
        %4391 = vmatpush2.xpose.msra.mxu0 0.0
        %4392 = vmatprep.subr.mxu0 0.0
        %4393 = vmatpush2.xpose.msra.mxu0 0.0
        %4394 = vmatprep.subr.mxu0 0.0
        %4395 = vmatpush2.xpose.msra.mxu0 0.0
        %4396 = vmatprep.subr.mxu0 0.0
        %4397 = vmatpush2.xpose.msra.mxu0 0.0
        %4398 = vmatprep.subr.mxu0 0.0
        %4399 = vmatpush2.xpose.msra.mxu0 0.0
        %4400 = vmatprep.subr.mxu0 0.0
        %4401 = vmatpush2.xpose.msra.mxu0 0.0
        %4402 = vmatprep.subr.mxu0 0.0
        %4403 = vmatpush2.xpose.msra.mxu0 0.0
        %4404 = vmatprep.subr.mxu0 0.0
        %4405 = vmatpush2.xpose.msra.mxu0 0.0
        %4406 = vmatprep.subr.mxu0 0.0
        %4407 = vmatpush2.xpose.msra.mxu0 0.0
        %4408 = vmatprep.mubr.f32.mxu0 0.0
        %4409 = vmatmul.mubr.f32.gmra.mxu0 %v4336
        %v4410 = vpop.f32.mrf.mxu0
        %v4411 = vadd.f32 %v609, %v4410
        %v4412 = vpop.f32.mrf.mxu0
        %4413 = vmatprep.mubr.f32.mxu0 0.0
        %4414 = vmatmul.mubr.f32.gmra.mxu0 %v4338
        %v4415 = vpop.f32.mrf.mxu0
        %v4416 = vadd.f32 %v609, %v4415
        %v4417 = vpop.f32.mrf.mxu0
        %4418 = vdwg.mxu0
        %v4419 = vsel %vm880, %v4411, -inf
        %4420 = vmax.xlane.f32.xlu0 %v4419
        %v4421 = vpop.xlane.xlu0 %4420
        %v4422 = vsel %vm880, %v4416, -inf
        %4423 = vmax.xlane.f32.xlu0 %v4422
        %v4424 = vpop.xlane.xlu0 %4423
        %v4425 = vsub.f32 %v4411, %v4421
        %v4426 = vsub.f32 %v4416, %v4424
        %v4427 = vmul.f32 %v4425, 1.442695
        %v4428 = vpow.pop %v4427
        %v4429 = vmul.f32 %v4426, 1.442695
        %v4430 = vpow.pop %v4429
        %v4431 = vsel %vm880, %v4428, 0.0
        %4432 = vadd.xlane.f32.xlu0 %v4431
        %v4433 = vpop.xlane.xlu0 %4432
        %v4434 = vsel %vm880, %v4430, 0.0
        %4435 = vadd.xlane.f32.xlu0 %v4434
        %v4436 = vpop.xlane.xlu0 %4435
        %v4437 = vrcp.pop %v4433
        %v4438 = vmul.f32 %v4428, %v4437
        %v4439 = vrcp.pop %v4436
        %v4440 = vmul.f32 %v4430, %v4439
        %4441 = vrot.lane.b32.xlu0 %v3134, 32
        %v4442 = vpop.permute.xlu0 %4441
        %4443 = vrot.lane.b32.xlu0 %v3135, 32
        %v4444 = vpop.permute.xlu0 %4443
        %v4448 = vsel %vm880, %v4438, 0
        %v4451 = vsel %vm880, %v4440, 0
        %4453 = vmatprep.subr.mxu0 0.0
        %4454 = vmatpush1.msra.mxu0 0.0
        %4455 = vmatprep.subr.mxu0 0.0
        %4456 = vmatpush1.msra.mxu0 0.0
        %4457 = vmatprep.subr.mxu0 0.0
        %4458 = vmatpush1.msra.mxu0 0.0
        %4459 = vmatprep.subr.mxu0 0.0
        %4460 = vmatpush1.msra.mxu0 0.0
        %4461 = vmatprep.subr.mxu0 0.0
        %4462 = vmatpush1.msra.mxu0 0.0
        %4463 = vmatprep.subr.mxu0 0.0
        %4464 = vmatpush1.msra.mxu0 0.0
        %4465 = vmatprep.subr.mxu0 0.0
        %4466 = vmatpush1.msra.mxu0 0.0
        %4467 = vmatprep.subr.mxu0 0.0
        %4468 = vmatpush1.msra.mxu0 0.0
        %4469 = vmatprep.subr.mxu0 0.0
        %4470 = vmatpush1.msra.mxu0 0.0
        %4471 = vmatprep.subr.mxu0 0.0
        %4472 = vmatpush1.msra.mxu0 0.0
        %4473 = vmatprep.subr.mxu0 0.0
        %4474 = vmatpush1.msra.mxu0 0.0
        %4475 = vmatprep.subr.mxu0 0.0
        %4476 = vmatpush1.msra.mxu0 0.0
        %4477 = vmatprep.subr.mxu0 0.0
        %4478 = vmatpush1.msra.mxu0 0.0
        %4479 = vmatprep.subr.mxu0 0.0
        %4480 = vmatpush1.msra.mxu0 0.0
        %4481 = vmatprep.subr.mxu0 0.0
        %4482 = vmatpush1.msra.mxu0 %v4444
        %4483 = vmatprep.subr.mxu0 0.0
        %4484 = vmatpush1.msra.mxu0 %v4442
        %4485 = vmatprep.subr.mxu0 0.0
        %4486 = vmatpush2.msra.mxu0 0.0
        %4487 = vmatprep.subr.mxu0 0.0
        %4488 = vmatpush2.msra.mxu0 0.0
        %4489 = vmatprep.subr.mxu0 0.0
        %4490 = vmatpush2.msra.mxu0 0.0
        %4491 = vmatprep.subr.mxu0 0.0
        %4492 = vmatpush2.msra.mxu0 0.0
        %4493 = vmatprep.subr.mxu0 0.0
        %4494 = vmatpush2.msra.mxu0 0.0
        %4495 = vmatprep.subr.mxu0 0.0
        %4496 = vmatpush2.msra.mxu0 0.0
        %4497 = vmatprep.subr.mxu0 0.0
        %4498 = vmatpush2.msra.mxu0 0.0
        %4499 = vmatprep.subr.mxu0 0.0
        %4500 = vmatpush2.msra.mxu0 0.0
        %4501 = vmatprep.subr.mxu0 0.0
        %4502 = vmatpush2.msra.mxu0 0.0
        %4503 = vmatprep.subr.mxu0 0.0
        %4504 = vmatpush2.msra.mxu0 0.0
        %4505 = vmatprep.subr.mxu0 0.0
        %4506 = vmatpush2.msra.mxu0 0.0
        %4507 = vmatprep.subr.mxu0 0.0
        %4508 = vmatpush2.msra.mxu0 0.0
        %4509 = vmatprep.subr.mxu0 0.0
        %4510 = vmatpush2.msra.mxu0 0.0
        %4511 = vmatprep.subr.mxu0 0.0
        %4512 = vmatpush2.msra.mxu0 0.0
        %4513 = vmatprep.subr.mxu0 0.0
        %4514 = vmatpush2.msra.mxu0 0.0
        %4515 = vmatprep.subr.mxu0 0.0
        %4516 = vmatpush2.msra.mxu0 0.0
        %4517 = vmatprep.mubr.f32.mxu0 0.0
        %4518 = vmatmul.mubr.f32.gmra.mxu0 %v4448
        %v4519 = vpop.f32.mrf.mxu0
        %v4520 = vadd.f32 0.0, %v4519
        %v4521 = vpop.f32.mrf.mxu0
        %4522 = vmatprep.mubr.f32.mxu0 0.0
        %4523 = vmatmul.mubr.f32.gmra.mxu0 %v4451
        %v4524 = vpop.f32.mrf.mxu0
        %v4525 = vadd.f32 0.0, %v4524
        %v4526 = vpop.f32.mrf.mxu0
        %4527 = vdwg.mxu0
        %4528 = vrot.lane.b32.xlu0 %v3122, 16
        %v4529 = vpop.permute.xlu0 %4528
        %4530 = vrot.lane.b32.xlu0 %v3123, 16
        %v4531 = vpop.permute.xlu0 %4530
        %4532 = vrot.lane.b32.xlu0 %v3128, 16
        %v4533 = vpop.permute.xlu0 %4532
        %4534 = vrot.lane.b32.xlu0 %v3129, 16
        %v4535 = vpop.permute.xlu0 %4534
        %v4536 = vsel %vm880, %v4529, 0
        %v4538 = vsel %vm880, %v4531, 0
        %v4540 = vsel %vm880, %v4533, 0
        %v4542 = vsel %vm880, %v4535, 0
        %4544 = vmatprep.subr.mxu0 0.0
        %4545 = vmatpush1.xpose.msra.mxu0 0.0
        %4546 = vmatprep.subr.mxu0 0.0
        %4547 = vmatpush1.xpose.msra.mxu0 0.0
        %4548 = vmatprep.subr.mxu0 0.0
        %4549 = vmatpush1.xpose.msra.mxu0 0.0
        %4550 = vmatprep.subr.mxu0 0.0
        %4551 = vmatpush1.xpose.msra.mxu0 0.0
        %4552 = vmatprep.subr.mxu0 0.0
        %4553 = vmatpush1.xpose.msra.mxu0 0.0
        %4554 = vmatprep.subr.mxu0 0.0
        %4555 = vmatpush1.xpose.msra.mxu0 0.0
        %4556 = vmatprep.subr.mxu0 0.0
        %4557 = vmatpush1.xpose.msra.mxu0 0.0
        %4558 = vmatprep.subr.mxu0 0.0
        %4559 = vmatpush1.xpose.msra.mxu0 0.0
        %4560 = vmatprep.subr.mxu0 0.0
        %4561 = vmatpush1.xpose.msra.mxu0 0.0
        %4562 = vmatprep.subr.mxu0 0.0
        %4563 = vmatpush1.xpose.msra.mxu0 0.0
        %4564 = vmatprep.subr.mxu0 0.0
        %4565 = vmatpush1.xpose.msra.mxu0 0.0
        %4566 = vmatprep.subr.mxu0 0.0
        %4567 = vmatpush1.xpose.msra.mxu0 0.0
        %4568 = vmatprep.subr.mxu0 0.0
        %4569 = vmatpush1.xpose.msra.mxu0 0.0
        %4570 = vmatprep.subr.mxu0 0.0
        %4571 = vmatpush1.xpose.msra.mxu0 0.0
        %4572 = vmatprep.subr.mxu0 0.0
        %4573 = vmatpush1.xpose.msra.mxu0 %v4542
        %4574 = vmatprep.subr.mxu0 0.0
        %4575 = vmatpush1.xpose.msra.mxu0 %v4540
        %4576 = vmatprep.subr.mxu0 0.0
        %4577 = vmatpush2.xpose.msra.mxu0 0.0
        %4578 = vmatprep.subr.mxu0 0.0
        %4579 = vmatpush2.xpose.msra.mxu0 0.0
        %4580 = vmatprep.subr.mxu0 0.0
        %4581 = vmatpush2.xpose.msra.mxu0 0.0
        %4582 = vmatprep.subr.mxu0 0.0
        %4583 = vmatpush2.xpose.msra.mxu0 0.0
        %4584 = vmatprep.subr.mxu0 0.0
        %4585 = vmatpush2.xpose.msra.mxu0 0.0
        %4586 = vmatprep.subr.mxu0 0.0
        %4587 = vmatpush2.xpose.msra.mxu0 0.0
        %4588 = vmatprep.subr.mxu0 0.0
        %4589 = vmatpush2.xpose.msra.mxu0 0.0
        %4590 = vmatprep.subr.mxu0 0.0
        %4591 = vmatpush2.xpose.msra.mxu0 0.0
        %4592 = vmatprep.subr.mxu0 0.0
        %4593 = vmatpush2.xpose.msra.mxu0 0.0
        %4594 = vmatprep.subr.mxu0 0.0
        %4595 = vmatpush2.xpose.msra.mxu0 0.0
        %4596 = vmatprep.subr.mxu0 0.0
        %4597 = vmatpush2.xpose.msra.mxu0 0.0
        %4598 = vmatprep.subr.mxu0 0.0
        %4599 = vmatpush2.xpose.msra.mxu0 0.0
        %4600 = vmatprep.subr.mxu0 0.0
        %4601 = vmatpush2.xpose.msra.mxu0 0.0
        %4602 = vmatprep.subr.mxu0 0.0
        %4603 = vmatpush2.xpose.msra.mxu0 0.0
        %4604 = vmatprep.subr.mxu0 0.0
        %4605 = vmatpush2.xpose.msra.mxu0 0.0
        %4606 = vmatprep.subr.mxu0 0.0
        %4607 = vmatpush2.xpose.msra.mxu0 0.0
        %4608 = vmatprep.mubr.f32.mxu0 0.0
        %4609 = vmatmul.mubr.f32.gmra.mxu0 %v4536
        %v4610 = vpop.f32.mrf.mxu0
        %v4611 = vadd.f32 %v609, %v4610
        %v4612 = vpop.f32.mrf.mxu0
        %4613 = vmatprep.mubr.f32.mxu0 0.0
        %4614 = vmatmul.mubr.f32.gmra.mxu0 %v4538
        %v4615 = vpop.f32.mrf.mxu0
        %v4616 = vadd.f32 %v609, %v4615
        %v4617 = vpop.f32.mrf.mxu0
        %4618 = vdwg.mxu0
        %v4619 = vsel %vm880, %v4611, -inf
        %4620 = vmax.xlane.f32.xlu0 %v4619
        %v4621 = vpop.xlane.xlu0 %4620
        %v4622 = vsel %vm880, %v4616, -inf
        %4623 = vmax.xlane.f32.xlu0 %v4622
        %v4624 = vpop.xlane.xlu0 %4623
        %v4625 = vsub.f32 %v4611, %v4621
        %v4626 = vsub.f32 %v4616, %v4624
        %v4627 = vmul.f32 %v4625, 1.442695
        %v4628 = vpow.pop %v4627
        %v4629 = vmul.f32 %v4626, 1.442695
        %v4630 = vpow.pop %v4629
        %v4631 = vsel %vm880, %v4628, 0.0
        %4632 = vadd.xlane.f32.xlu0 %v4631
        %v4633 = vpop.xlane.xlu0 %4632
        %v4634 = vsel %vm880, %v4630, 0.0
        %4635 = vadd.xlane.f32.xlu0 %v4634
        %v4636 = vpop.xlane.xlu0 %4635
        %v4637 = vrcp.pop %v4633
        %v4638 = vmul.f32 %v4628, %v4637
        %v4639 = vrcp.pop %v4636
        %v4640 = vmul.f32 %v4630, %v4639
        %4641 = vrot.lane.b32.xlu0 %v3134, 16
        %v4642 = vpop.permute.xlu0 %4641
        %4643 = vrot.lane.b32.xlu0 %v3135, 16
        %v4644 = vpop.permute.xlu0 %4643
        %v4648 = vsel %vm880, %v4638, 0
        %v4651 = vsel %vm880, %v4640, 0
        %4653 = vmatprep.subr.mxu0 0.0
        %4654 = vmatpush1.msra.mxu0 0.0
        %4655 = vmatprep.subr.mxu0 0.0
        %4656 = vmatpush1.msra.mxu0 0.0
        %4657 = vmatprep.subr.mxu0 0.0
        %4658 = vmatpush1.msra.mxu0 0.0
        %4659 = vmatprep.subr.mxu0 0.0
        %4660 = vmatpush1.msra.mxu0 0.0
        %4661 = vmatprep.subr.mxu0 0.0
        %4662 = vmatpush1.msra.mxu0 0.0
        %4663 = vmatprep.subr.mxu0 0.0
        %4664 = vmatpush1.msra.mxu0 0.0
        %4665 = vmatprep.subr.mxu0 0.0
        %4666 = vmatpush1.msra.mxu0 0.0
        %4667 = vmatprep.subr.mxu0 0.0
        %4668 = vmatpush1.msra.mxu0 0.0
        %4669 = vmatprep.subr.mxu0 0.0
        %4670 = vmatpush1.msra.mxu0 0.0
        %4671 = vmatprep.subr.mxu0 0.0
        %4672 = vmatpush1.msra.mxu0 0.0
        %4673 = vmatprep.subr.mxu0 0.0
        %4674 = vmatpush1.msra.mxu0 0.0
        %4675 = vmatprep.subr.mxu0 0.0
        %4676 = vmatpush1.msra.mxu0 0.0
        %4677 = vmatprep.subr.mxu0 0.0
        %4678 = vmatpush1.msra.mxu0 0.0
        %4679 = vmatprep.subr.mxu0 0.0
        %4680 = vmatpush1.msra.mxu0 0.0
        %4681 = vmatprep.subr.mxu0 0.0
        %4682 = vmatpush1.msra.mxu0 %v4644
        %4683 = vmatprep.subr.mxu0 0.0
        %4684 = vmatpush1.msra.mxu0 %v4642
        %4685 = vmatprep.subr.mxu0 0.0
        %4686 = vmatpush2.msra.mxu0 0.0
        %4687 = vmatprep.subr.mxu0 0.0
        %4688 = vmatpush2.msra.mxu0 0.0
        %4689 = vmatprep.subr.mxu0 0.0
        %4690 = vmatpush2.msra.mxu0 0.0
        %4691 = vmatprep.subr.mxu0 0.0
        %4692 = vmatpush2.msra.mxu0 0.0
        %4693 = vmatprep.subr.mxu0 0.0
        %4694 = vmatpush2.msra.mxu0 0.0
        %4695 = vmatprep.subr.mxu0 0.0
        %4696 = vmatpush2.msra.mxu0 0.0
        %4697 = vmatprep.subr.mxu0 0.0
        %4698 = vmatpush2.msra.mxu0 0.0
        %4699 = vmatprep.subr.mxu0 0.0
        %4700 = vmatpush2.msra.mxu0 0.0
        %4701 = vmatprep.subr.mxu0 0.0
        %4702 = vmatpush2.msra.mxu0 0.0
        %4703 = vmatprep.subr.mxu0 0.0
        %4704 = vmatpush2.msra.mxu0 0.0
        %4705 = vmatprep.subr.mxu0 0.0
        %4706 = vmatpush2.msra.mxu0 0.0
        %4707 = vmatprep.subr.mxu0 0.0
        %4708 = vmatpush2.msra.mxu0 0.0
        %4709 = vmatprep.subr.mxu0 0.0
        %4710 = vmatpush2.msra.mxu0 0.0
        %4711 = vmatprep.subr.mxu0 0.0
        %4712 = vmatpush2.msra.mxu0 0.0
        %4713 = vmatprep.subr.mxu0 0.0
        %4714 = vmatpush2.msra.mxu0 0.0
        %4715 = vmatprep.subr.mxu0 0.0
        %4716 = vmatpush2.msra.mxu0 0.0
        %4717 = vmatprep.mubr.f32.mxu0 0.0
        %4718 = vmatmul.mubr.f32.gmra.mxu0 %v4648
        %v4719 = vpop.f32.mrf.mxu0
        %v4720 = vadd.f32 0.0, %v4719
        %v4721 = vpop.f32.mrf.mxu0
        %4722 = vmatprep.mubr.f32.mxu0 0.0
        %4723 = vmatmul.mubr.f32.gmra.mxu0 %v4651
        %v4724 = vpop.f32.mrf.mxu0
        %v4725 = vadd.f32 0.0, %v4724
        %v4726 = vpop.f32.mrf.mxu0
        %4727 = vdwg.mxu0
        %4730 = vrot.lane.b32.xlu0 %v3520, 16
        %v4731 = vpop.permute.xlu0 %4730
        %4732 = vrot.lane.b32.xlu0 %v3525, 16
        %v4733 = vpop.permute.xlu0 %4732
        %4738 = vrot.lane.b32.xlu0 %v3720, 32
        %v4739 = vpop.permute.xlu0 %4738
        %4740 = vrot.lane.b32.xlu0 %v3725, 32
        %v4741 = vpop.permute.xlu0 %4740
        %4746 = vrot.lane.b32.xlu0 %v3920, 48
        %v4747 = vpop.permute.xlu0 %4746
        %4748 = vrot.lane.b32.xlu0 %v3925, 48
        %v4749 = vpop.permute.xlu0 %4748
        %4754 = vrot.lane.b32.xlu0 %v4120, 64
        %v4755 = vpop.permute.xlu0 %4754
        %4756 = vrot.lane.b32.xlu0 %v4125, 64
        %v4757 = vpop.permute.xlu0 %4756
        %4762 = vrot.lane.b32.xlu0 %v4320, 80
        %v4763 = vpop.permute.xlu0 %4762
        %4764 = vrot.lane.b32.xlu0 %v4325, 80
        %v4765 = vpop.permute.xlu0 %4764
        %4770 = vrot.lane.b32.xlu0 %v4520, 96
        %v4771 = vpop.permute.xlu0 %4770
        %4772 = vrot.lane.b32.xlu0 %v4525, 96
        %v4773 = vpop.permute.xlu0 %4772
        %4778 = vrot.lane.b32.xlu0 %v4720, 112
        %v4779 = vpop.permute.xlu0 %4778
        %4780 = vrot.lane.b32.xlu0 %v4725, 112
        %v4781 = vpop.permute.xlu0 %4780
        %v4784 = vsel %vm880, %v3318, %v4731
        %v4785 = vsel %vm880, %v3323, %v4733
        %v4786 = vsel %vm2531, %v4784, %v4739
        %v4787 = vsel %vm2531, %v4785, %v4741
        %v4788 = vsel %vm2534, %v4786, %v4747
        %v4789 = vsel %vm2534, %v4787, %v4749
        %v4790 = vsel %vm2537, %v4788, %v4755
        %v4791 = vsel %vm2537, %v4789, %v4757
        %v4792 = vsel %vm2540, %v4790, %v4763
        %v4793 = vsel %vm2540, %v4791, %v4765
        %v4794 = vsel %vm2543, %v4792, %v4771
        %v4795 = vsel %vm2543, %v4793, %v4773
        %v4796 = vsel %vm2546, %v4794, %v4779
        %v4797 = vsel %vm2546, %v4795, %v4781
        %v4798 = vlaneseq
        %v4799 = vshrl.u32 %v4798, 7
        %v4800 = vsub.s32 3, %v4799
        %v4801 = vrot.slane %v2962, %v4800
        %4802 = vmatprep.subr.mxu0 0.0
        %4803 = vmatpush1.msra.mxu0 %v2926
        %4804 = vmatprep.subr.mxu0 0.0
        %4805 = vmatpush1.msra.mxu0 %v2925
        %4806 = vmatprep.subr.mxu0 0.0
        %4807 = vmatpush1.msra.mxu0 %v2924
        %4808 = vmatprep.subr.mxu0 0.0
        %4809 = vmatpush1.msra.mxu0 %v2923
        %4810 = vmatprep.subr.mxu0 0.0
        %4811 = vmatpush1.msra.mxu0 %v2922
        %4812 = vmatprep.subr.mxu0 0.0
        %4813 = vmatpush1.msra.mxu0 %v2921
        %4814 = vmatprep.subr.mxu0 0.0
        %4815 = vmatpush1.msra.mxu0 %v2920
        %4816 = vmatprep.subr.mxu0 0.0
        %4817 = vmatpush1.msra.mxu0 %v2919
        %4818 = vmatprep.subr.mxu0 0.0
        %4819 = vmatpush1.msra.mxu0 %v2918
        %4820 = vmatprep.subr.mxu0 0.0
        %4821 = vmatpush1.msra.mxu0 %v2917
        %4822 = vmatprep.subr.mxu0 0.0
        %4823 = vmatpush1.msra.mxu0 %v2916
        %4824 = vmatprep.subr.mxu0 0.0
        %4825 = vmatpush1.msra.mxu0 %v2915
        %4826 = vmatprep.subr.mxu0 0.0
        %4827 = vmatpush1.msra.mxu0 %v2914
        %4828 = vmatprep.subr.mxu0 0.0
        %4829 = vmatpush1.msra.mxu0 %v2913
        %4830 = vmatprep.subr.mxu0 0.0
        %4831 = vmatpush1.msra.mxu0 %v2912
        %4832 = vmatprep.subr.mxu0 0.0
        %4833 = vmatpush1.msra.mxu0 %v2911
        %4834 = vmatprep.subr.mxu0 0.0
        %4835 = vmatpush2.msra.mxu0 0.0
        %4836 = vmatprep.subr.mxu0 0.0
        %4837 = vmatpush2.msra.mxu0 0.0
        %4838 = vmatprep.subr.mxu0 0.0
        %4839 = vmatpush2.msra.mxu0 0.0
        %4840 = vmatprep.subr.mxu0 0.0
        %4841 = vmatpush2.msra.mxu0 0.0
        %4842 = vmatprep.subr.mxu0 0.0
        %4843 = vmatpush2.msra.mxu0 0.0
        %4844 = vmatprep.subr.mxu0 0.0
        %4845 = vmatpush2.msra.mxu0 0.0
        %4846 = vmatprep.subr.mxu0 0.0
        %4847 = vmatpush2.msra.mxu0 0.0
        %4848 = vmatprep.subr.mxu0 0.0
        %4849 = vmatpush2.msra.mxu0 0.0
        %4850 = vmatprep.subr.mxu0 0.0
        %4851 = vmatpush2.msra.mxu0 0.0
        %4852 = vmatprep.subr.mxu0 0.0
        %4853 = vmatpush2.msra.mxu0 0.0
        %4854 = vmatprep.subr.mxu0 0.0
        %4855 = vmatpush2.msra.mxu0 0.0
        %4856 = vmatprep.subr.mxu0 0.0
        %4857 = vmatpush2.msra.mxu0 0.0
        %4858 = vmatprep.subr.mxu0 0.0
        %4859 = vmatpush2.msra.mxu0 0.0
        %4860 = vmatprep.subr.mxu0 0.0
        %4861 = vmatpush2.msra.mxu0 0.0
        %4862 = vmatprep.subr.mxu0 0.0
        %4863 = vmatpush2.msra.mxu0 0.0
        %4864 = vmatprep.subr.mxu0 0.0
        %4865 = vmatpush2.msra.mxu0 0.0
        %4866 = vmatprep.mubr.f32.mxu0 0.0
        %4867 = vmatmul.mubr.f32.gmra.mxu0 %v4796
        %v4868 = vpop.f32.mrf.mxu0
        %v4869 = vadd.f32 %v4801, %v4868
        %v4870 = vpop.f32.mrf.mxu0
        %4871 = vmatprep.mubr.f32.mxu0 0.0
        %4872 = vmatmul.mubr.f32.gmra.mxu0 %v4797
        %v4873 = vpop.f32.mrf.mxu0
        %v4874 = vadd.f32 %v4801, %v4873
        %v4875 = vpop.f32.mrf.mxu0
        %4876 = vdwg.mxu0
        %v4877 = vadd.f32 %v2859, %v4869
        %v4878 = vadd.f32 %v2860, %v4874
        %4879 = vadd.xlane.f32.xlu0 %v4877
        %v4880 = vpop.xlane.xlu0 %4879
        %4881 = vadd.xlane.f32.xlu0 %v4878
        %v4882 = vpop.xlane.xlu0 %4881
        %v4883 = vmul.f32 %v4880, %v2634
        %v4884 = vmul.f32 %v4882, %v2634
        %v4885 = vsub.f32 %v4877, %v4883
        %v4886 = vsub.f32 %v4878, %v4884
        %v4887 = vmul.f32 %v4885, %v4885
        %v4888 = vmul.f32 %v4886, %v4886
        %4889 = vadd.xlane.f32.xlu0 %v4887
        %v4890 = vpop.xlane.xlu0 %4889
        %4891 = vadd.xlane.f32.xlu0 %v4888
        %v4892 = vpop.xlane.xlu0 %4891
        %v4893 = vmul.f32 %v4890, %v2634
        %v4894 = vmul.f32 %v4892, %v2634
        %v4895 = vadd.f32 %v4893, 1e-05
        %v4896 = vadd.f32 %v4894, 1e-05
        %v4897 = vrsqrt.pop %v4895
        %v4898 = vrsqrt.pop %v4896
        %v4899 = vmul.f32 %v4885, %v4897
        %v4900 = vmul.f32 %v4886, %v4898
        %v4901 = vlaneseq
        %v4902 = vshrl.u32 %v4901, 7
        %v4903 = vsub.s32 4, %v4902
        %v4904 = vrot.slane %v2962, %v4903
        %v4905 = vmul.f32 %v4899, %v4904
        %v4906 = vmul.f32 %v4900, %v4904
        %v4907 = vlaneseq
        %v4908 = vshrl.u32 %v4907, 7
        %v4909 = vsub.s32 5, %v4908
        %v4910 = vrot.slane %v2962, %v4909
        %v4911 = vadd.f32 %v4905, %v4910
        %v4912 = vadd.f32 %v4906, %v4910
        %v4913 = vlaneseq
        %v4914 = vshrl.u32 %v4913, 7
        %v4915 = vsub.s32 6, %v4914
        %v4916 = vrot.slane %v2962, %v4915
        %4917 = vmatprep.subr.mxu0 0.0
        %4918 = vmatpush1.msra.mxu0 %v2943
        %4919 = vmatprep.subr.mxu0 0.0
        %4920 = vmatpush1.msra.mxu0 %v2942
        %4921 = vmatprep.subr.mxu0 0.0
        %4922 = vmatpush1.msra.mxu0 %v2941
        %4923 = vmatprep.subr.mxu0 0.0
        %4924 = vmatpush1.msra.mxu0 %v2940
        %4925 = vmatprep.subr.mxu0 0.0
        %4926 = vmatpush1.msra.mxu0 %v2939
        %4927 = vmatprep.subr.mxu0 0.0
        %4928 = vmatpush1.msra.mxu0 %v2938
        %4929 = vmatprep.subr.mxu0 0.0
        %4930 = vmatpush1.msra.mxu0 %v2937
        %4931 = vmatprep.subr.mxu0 0.0
        %4932 = vmatpush1.msra.mxu0 %v2936
        %4933 = vmatprep.subr.mxu0 0.0
        %4934 = vmatpush1.msra.mxu0 %v2935
        %4935 = vmatprep.subr.mxu0 0.0
        %4936 = vmatpush1.msra.mxu0 %v2934
        %4937 = vmatprep.subr.mxu0 0.0
        %4938 = vmatpush1.msra.mxu0 %v2933
        %4939 = vmatprep.subr.mxu0 0.0
        %4940 = vmatpush1.msra.mxu0 %v2932
        %4941 = vmatprep.subr.mxu0 0.0
        %4942 = vmatpush1.msra.mxu0 %v2931
        %4943 = vmatprep.subr.mxu0 0.0
        %4944 = vmatpush1.msra.mxu0 %v2930
        %4945 = vmatprep.subr.mxu0 0.0
        %4946 = vmatpush1.msra.mxu0 %v2929
        %4947 = vmatprep.subr.mxu0 0.0
        %4948 = vmatpush1.msra.mxu0 %v2928
        %4949 = vmatprep.subr.mxu0 0.0
        %4950 = vmatpush2.msra.mxu0 0.0
        %4951 = vmatprep.subr.mxu0 0.0
        %4952 = vmatpush2.msra.mxu0 0.0
        %4953 = vmatprep.subr.mxu0 0.0
        %4954 = vmatpush2.msra.mxu0 0.0
        %4955 = vmatprep.subr.mxu0 0.0
        %4956 = vmatpush2.msra.mxu0 0.0
        %4957 = vmatprep.subr.mxu0 0.0
        %4958 = vmatpush2.msra.mxu0 0.0
        %4959 = vmatprep.subr.mxu0 0.0
        %4960 = vmatpush2.msra.mxu0 0.0
        %4961 = vmatprep.subr.mxu0 0.0
        %4962 = vmatpush2.msra.mxu0 0.0
        %4963 = vmatprep.subr.mxu0 0.0
        %4964 = vmatpush2.msra.mxu0 0.0
        %4965 = vmatprep.subr.mxu0 0.0
        %4966 = vmatpush2.msra.mxu0 0.0
        %4967 = vmatprep.subr.mxu0 0.0
        %4968 = vmatpush2.msra.mxu0 0.0
        %4969 = vmatprep.subr.mxu0 0.0
        %4970 = vmatpush2.msra.mxu0 0.0
        %4971 = vmatprep.subr.mxu0 0.0
        %4972 = vmatpush2.msra.mxu0 0.0
        %4973 = vmatprep.subr.mxu0 0.0
        %4974 = vmatpush2.msra.mxu0 0.0
        %4975 = vmatprep.subr.mxu0 0.0
        %4976 = vmatpush2.msra.mxu0 0.0
        %4977 = vmatprep.subr.mxu0 0.0
        %4978 = vmatpush2.msra.mxu0 0.0
        %4979 = vmatprep.subr.mxu0 0.0
        %4980 = vmatpush2.msra.mxu0 0.0
        %4981 = vmatprep.mubr.f32.mxu0 0.0
        %4982 = vmatmul.mubr.f32.gmra.mxu0 %v4911
        %v4983 = vpop.f32.mrf.mxu0
        %v4984 = vadd.f32 %v4916, %v4983
        %v4985 = vpop.f32.mrf.mxu0
        %4986 = vmatprep.mubr.f32.mxu0 0.0
        %4987 = vmatmul.mubr.f32.gmra.mxu0 %v4912
        %v4988 = vpop.f32.mrf.mxu0
        %v4989 = vadd.f32 %v4916, %v4988
        %v4990 = vpop.f32.mrf.mxu0
        %4991 = vdwg.mxu0
        %v4992 = vmax.f32 %v4984, 0.0
        %v4993 = vmax.f32 %v4989, 0.0
        %v4994 = vlaneseq
        %v4995 = vshrl.u32 %v4994, 7
        %v4996 = vsub.s32 7, %v4995
        %v4997 = vrot.slane %v2962, %v4996
        %4998 = vmatprep.subr.mxu0 0.0
        %4999 = vmatpush1.msra.mxu0 %v2960
        %5000 = vmatprep.subr.mxu0 0.0
        %5001 = vmatpush1.msra.mxu0 %v2959
        %5002 = vmatprep.subr.mxu0 0.0
        %5003 = vmatpush1.msra.mxu0 %v2958
        %5004 = vmatprep.subr.mxu0 0.0
        %5005 = vmatpush1.msra.mxu0 %v2957
        %5006 = vmatprep.subr.mxu0 0.0
        %5007 = vmatpush1.msra.mxu0 %v2956
        %5008 = vmatprep.subr.mxu0 0.0
        %5009 = vmatpush1.msra.mxu0 %v2955
        %5010 = vmatprep.subr.mxu0 0.0
        %5011 = vmatpush1.msra.mxu0 %v2954
        %5012 = vmatprep.subr.mxu0 0.0
        %5013 = vmatpush1.msra.mxu0 %v2953
        %5014 = vmatprep.subr.mxu0 0.0
        %5015 = vmatpush1.msra.mxu0 %v2952
        %5016 = vmatprep.subr.mxu0 0.0
        %5017 = vmatpush1.msra.mxu0 %v2951
        %5018 = vmatprep.subr.mxu0 0.0
        %5019 = vmatpush1.msra.mxu0 %v2950
        %5020 = vmatprep.subr.mxu0 0.0
        %5021 = vmatpush1.msra.mxu0 %v2949
        %5022 = vmatprep.subr.mxu0 0.0
        %5023 = vmatpush1.msra.mxu0 %v2948
        %5024 = vmatprep.subr.mxu0 0.0
        %5025 = vmatpush1.msra.mxu0 %v2947
        %5026 = vmatprep.subr.mxu0 0.0
        %5027 = vmatpush1.msra.mxu0 %v2946
        %5028 = vmatprep.subr.mxu0 0.0
        %5029 = vmatpush1.msra.mxu0 %v2945
        %5030 = vmatprep.subr.mxu0 0.0
        %5031 = vmatpush2.msra.mxu0 0.0
        %5032 = vmatprep.subr.mxu0 0.0
        %5033 = vmatpush2.msra.mxu0 0.0
        %5034 = vmatprep.subr.mxu0 0.0
        %5035 = vmatpush2.msra.mxu0 0.0
        %5036 = vmatprep.subr.mxu0 0.0
        %5037 = vmatpush2.msra.mxu0 0.0
        %5038 = vmatprep.subr.mxu0 0.0
        %5039 = vmatpush2.msra.mxu0 0.0
        %5040 = vmatprep.subr.mxu0 0.0
        %5041 = vmatpush2.msra.mxu0 0.0
        %5042 = vmatprep.subr.mxu0 0.0
        %5043 = vmatpush2.msra.mxu0 0.0
        %5044 = vmatprep.subr.mxu0 0.0
        %5045 = vmatpush2.msra.mxu0 0.0
        %5046 = vmatprep.subr.mxu0 0.0
        %5047 = vmatpush2.msra.mxu0 0.0
        %5048 = vmatprep.subr.mxu0 0.0
        %5049 = vmatpush2.msra.mxu0 0.0
        %5050 = vmatprep.subr.mxu0 0.0
        %5051 = vmatpush2.msra.mxu0 0.0
        %5052 = vmatprep.subr.mxu0 0.0
        %5053 = vmatpush2.msra.mxu0 0.0
        %5054 = vmatprep.subr.mxu0 0.0
        %5055 = vmatpush2.msra.mxu0 0.0
        %5056 = vmatprep.subr.mxu0 0.0
        %5057 = vmatpush2.msra.mxu0 0.0
        %5058 = vmatprep.subr.mxu0 0.0
        %5059 = vmatpush2.msra.mxu0 0.0
        %5060 = vmatprep.subr.mxu0 0.0
        %5061 = vmatpush2.msra.mxu0 0.0
        %5062 = vmatprep.mubr.f32.mxu0 0.0
        %5063 = vmatmul.mubr.f32.gmra.mxu0 %v4992
        %v5064 = vpop.f32.mrf.mxu0
        %v5065 = vadd.f32 %v4997, %v5064
        %v5066 = vpop.f32.mrf.mxu0
        %5067 = vmatprep.mubr.f32.mxu0 0.0
        %5068 = vmatmul.mubr.f32.gmra.mxu0 %v4993
        %v5069 = vpop.f32.mrf.mxu0
        %v5070 = vpop.f32.mrf.mxu0
        %5071 = vdwg.mxu0
        %v5072 = vadd.f32 %v4911, %v5065
        %5073 = vadd.xlane.f32.xlu0 %v5072
        %v5074 = vpop.xlane.xlu0 %5073
        %v5075 = vmul.f32 %v5074, %v2634
        %v5076 = vsub.f32 %v5072, %v5075
        %v5077 = vmul.f32 %v5076, %v5076
        %5078 = vadd.xlane.f32.xlu0 %v5077
        %v5079 = vpop.xlane.xlu0 %5078
        %v5080 = vmul.f32 %v5079, %v2634
        %v5081 = vadd.f32 %v5080, 1e-05
        %v5082 = vrsqrt.pop %v5081
        %v5083 = vmul.f32 %v5076, %v5082
        %v5084 = vlaneseq
        %v5085 = vshrl.u32 %v5084, 7
        %v5086 = vsub.s32 0, %v5085
        %v5087 = vrot.slane %v2963, %v5086
        %v5088 = vmul.f32 %v5083, %v5087
        %v5089 = vlaneseq
        %v5090 = vshrl.u32 %v5089, 7
        %v5091 = vsub.s32 1, %v5090
        %v5092 = vrot.slane %v2963, %v5091
        %v5093 = vadd.f32 %v5088, %v5092
        %v5094 = vld [vmem:[%s9] sm:$0x1]
        %v5095 = vld [vmem:[%s9 + $0x1] sm:$0x1]
        %vm5096 = vcmask 1040384
        %v5097 = vsel %vm5096, %v5093, 0.0
        %5098 = vadd.xlane.f32.xlu0 %v5097
        %v5099 = vpop.xlane.xlu0 %5098
        %v5100 = vmul.f32 %v5099, %v2634
        %v5101 = vsub.f32 %v5093, %v5100
        %v5102 = vmul.f32 %v5101, %v5101
        %v5103 = vsel %vm5096, %v5102, 0.0
        %5104 = vadd.xlane.f32.xlu0 %v5103
        %v5105 = vpop.xlane.xlu0 %5104
        %v5106 = vmul.f32 %v5105, %v2634
        %v5107 = vadd.f32 %v5106, 1e-05
        %v5108 = vrsqrt.pop %v5107
        %v5109 = vmul.f32 %v5101, %v5108
        %v5110 = vmul.f32 %v5109, %v5094
        %v5111 = vadd.f32 %v5110, %v5095
        %v5112 = vld [vmem:[#allocation16] sm:$0xff]
        %v5113 = vld [vmem:[#allocation16 + $0x8] sm:$0xff]
        %v5114 = vld [vmem:[#allocation16 + $0x10] sm:$0xff]
        %v5115 = vld [vmem:[#allocation16 + $0x18] sm:$0xff]
        %v5116 = vld [vmem:[#allocation16 + $0x20] sm:$0xff]
        %v5117 = vld [vmem:[#allocation16 + $0x28] sm:$0xff]
        %v5118 = vld [vmem:[#allocation16 + $0x30] sm:$0xff]
        %v5119 = vld [vmem:[#allocation16 + $0x38] sm:$0xff]
        %v5120 = vld [vmem:[#allocation16 + $0x40] sm:$0xff]
        %v5121 = vld [vmem:[#allocation16 + $0x48] sm:$0xff]
        %v5122 = vld [vmem:[#allocation16 + $0x50] sm:$0xff]
        %v5123 = vld [vmem:[#allocation16 + $0x58] sm:$0xff]
        %v5124 = vld [vmem:[#allocation16 + $0x60] sm:$0xff]
        %v5125 = vld [vmem:[#allocation16 + $0x68] sm:$0xff]
        %v5126 = vld [vmem:[#allocation16 + $0x70] sm:$0xff]
        %v5127 = vld [vmem:[#allocation16 + $0x78] sm:$0xff]
        %v5128 = vld [vmem:[%s9 + $0x2] sm:$0x1]
        %5129 = vmatprep.subr.mxu0 0.0
        %5130 = vmatpush1.msra.mxu0 %v5127
        %5131 = vmatprep.subr.mxu0 0.0
        %5132 = vmatpush1.msra.mxu0 %v5126
        %5133 = vmatprep.subr.mxu0 0.0
        %5134 = vmatpush1.msra.mxu0 %v5125
        %5135 = vmatprep.subr.mxu0 0.0
        %5136 = vmatpush1.msra.mxu0 %v5124
        %5137 = vmatprep.subr.mxu0 0.0
        %5138 = vmatpush1.msra.mxu0 %v5123
        %5139 = vmatprep.subr.mxu0 0.0
        %5140 = vmatpush1.msra.mxu0 %v5122
        %5141 = vmatprep.subr.mxu0 0.0
        %5142 = vmatpush1.msra.mxu0 %v5121
        %5143 = vmatprep.subr.mxu0 0.0
        %5144 = vmatpush1.msra.mxu0 %v5120
        %5145 = vmatprep.subr.mxu0 0.0
        %5146 = vmatpush1.msra.mxu0 %v5119
        %5147 = vmatprep.subr.mxu0 0.0
        %5148 = vmatpush1.msra.mxu0 %v5118
        %5149 = vmatprep.subr.mxu0 0.0
        %5150 = vmatpush1.msra.mxu0 %v5117
        %5151 = vmatprep.subr.mxu0 0.0
        %5152 = vmatpush1.msra.mxu0 %v5116
        %5153 = vmatprep.subr.mxu0 0.0
        %5154 = vmatpush1.msra.mxu0 %v5115
        %5155 = vmatprep.subr.mxu0 0.0
        %5156 = vmatpush1.msra.mxu0 %v5114
        %5157 = vmatprep.subr.mxu0 0.0
        %5158 = vmatpush1.msra.mxu0 %v5113
        %5159 = vmatprep.subr.mxu0 0.0
        %5160 = vmatpush1.msra.mxu0 %v5112
        %5161 = vmatprep.subr.mxu0 0.0
        %5162 = vmatpush2.msra.mxu0 0.0
        %5163 = vmatprep.subr.mxu0 0.0
        %5164 = vmatpush2.msra.mxu0 0.0
        %5165 = vmatprep.subr.mxu0 0.0
        %5166 = vmatpush2.msra.mxu0 0.0
        %5167 = vmatprep.subr.mxu0 0.0
        %5168 = vmatpush2.msra.mxu0 0.0
        %5169 = vmatprep.subr.mxu0 0.0
        %5170 = vmatpush2.msra.mxu0 0.0
        %5171 = vmatprep.subr.mxu0 0.0
        %5172 = vmatpush2.msra.mxu0 0.0
        %5173 = vmatprep.subr.mxu0 0.0
        %5174 = vmatpush2.msra.mxu0 0.0
        %5175 = vmatprep.subr.mxu0 0.0
        %5176 = vmatpush2.msra.mxu0 0.0
        %5177 = vmatprep.subr.mxu0 0.0
        %5178 = vmatpush2.msra.mxu0 0.0
        %5179 = vmatprep.subr.mxu0 0.0
        %5180 = vmatpush2.msra.mxu0 0.0
        %5181 = vmatprep.subr.mxu0 0.0
        %5182 = vmatpush2.msra.mxu0 0.0
        %5183 = vmatprep.subr.mxu0 0.0
        %5184 = vmatpush2.msra.mxu0 0.0
        %5185 = vmatprep.subr.mxu0 0.0
        %5186 = vmatpush2.msra.mxu0 0.0
        %5187 = vmatprep.subr.mxu0 0.0
        %5188 = vmatpush2.msra.mxu0 0.0
        %5189 = vmatprep.subr.mxu0 0.0
        %5190 = vmatpush2.msra.mxu0 0.0
        %5191 = vmatprep.subr.mxu0 0.0
        %5192 = vmatpush2.msra.mxu0 0.0
        %5193 = vmatprep.mubr.f32.mxu0 0.0
        %5194 = vmatmul.mubr.f32.gmra.mxu0 %v5111
        %v5195 = vpop.f32.mrf.mxu0
        %v5196 = vadd.f32 %v5128, %v5195
        %v5197 = vpop.f32.mrf.mxu0
        %5198 = vdwg.mxu0
        %5199 = vst [vmem:[%s492] sm:$0x1] %v5196
        %s5200 = sand.u32 %s254, 1
        %s5201 = scalar_lea.sflag [#allocation4], %s5200
        %s5202 = sand.u32 %s254, 1
        %s5203 = scalar_lea.vmem [#allocation17], %s5202
        // Predicated region
        $region97: #{tpu_custom_call.1} parent=59 // pred_check
          %p5204 = pneg %p264
        $region98: #{tpu_custom_call.1} parent=59 // pred_check_branch
          %5206 = sbr.rel (%p5204) target = $region100
        $region99: #{tpu_custom_call.1} parent=59 // pred_region
          %s5208 = ssub.s32 16, 16
          %5209 = vsyncadd %s5201, %s5208
          %s5210 = smul.addr %s31, 16
          %s5211 = scalar_lea.hbm %s10, %s5210
          %s5213 = sshll.u32 %s5203, 4
          %s5214 = int_to_ptr.vmem [resolvable:$true] %s5213
          %5216 = dma.vmem_to_hbm [thread:$0]  %s5214, 16, %s5211, %s5201
        $region100: #{tpu_custom_call.1} parent=59 // pred_fallthru
          _
      $region60: #{tpu_custom_call.1} parent=5 // pred_fallthru
        _
      %p5217 = scmp.le.s32.totalorder 2, %s26
      // Predicated region
      $region101: #{tpu_custom_call.1} parent=5 // pred_check
        %p5218 = pneg %p5217
      $region102: #{tpu_custom_call.1} parent=5 // pred_check_branch
        %5220 = sbr.rel (%p5218) target = $region104
      $region103: #{tpu_custom_call.1} parent=5 // pred_region
        %s5221 = ssub.s32 %s26, 2
        // Predicated region
        $region105: #{tpu_custom_call.1} parent=103 // pred_check
          %p5222 = pneg %p270
        $region106: #{tpu_custom_call.1} parent=103 // pred_check_branch
          %5224 = sbr.rel (%p5222) target = $region108
        $region107: #{tpu_custom_call.1} parent=103 // pred_region
          %s5225 = sand.u32 %s255, 1
          %s5226 = scalar_lea.sflag [#allocation4], %s5225
          %s5227 = sand.u32 %s255, 1
          %s5228 = scalar_lea.vmem [#allocation17], %s5227
          %5229 = dma.done %s5226, 16
        $region108: #{tpu_custom_call.1} parent=103 // pred_fallthru
          _
      $region104: #{tpu_custom_call.1} parent=5 // pred_fallthru
        _
    $region6: #{tpu_custom_call.1} parent=1 // loop_footer
      %s30 = sadd.s32 1, %s26
    $region7: #{tpu_custom_call.1} parent=1 // loop_footer_branch
      %25 = sbr.rel target = $region3
    $region8: #{tpu_custom_call.1} parent=1 // loop_exit
      _
    %5230 = vsyncpa [#allocation3], 1
    %s5231 = scalar_lea.sflag [#allocation3], 1
    %5232 = vsyncpa %s5231, 1
    %5233 = vsyncpa [#allocation6], 1
    %5234 = vsyncpa [#allocation9], 1
    %5235 = vsyncpa [#allocation12], 1
    %5236 = vsyncpa [#allocation15], 1
    %5237 = vsyncpa [#allocation4], 1
    %s5238 = scalar_lea.sflag [#allocation4], 1
    %5239 = vsyncpa %s5238, 1

</llo_original>
